<compile_context>
chip_gen: v7x
topology: tpu7x:2x2x1
jax: 0.10.0
libtpu: 0.0.40
codegen_flags: <defaults>
</compile_context>

<pallas_src>
import functools

import jax
import jax.numpy as jnp
from jax.experimental import pallas as pl
from jax.experimental.pallas import tpu as pltpu


def _round_up(x, m):
    return ((x + m - 1) // m) * m


# ----------------------------- Pallas kernel ---------------------------------
def _gated_deconv_bn_kernel(p_ref, w_ref, o_ref, sum_ref, sq_ref,
                            *, inv_n, cout, tile_rows, eps=1e-5):
    """Fused conv+mask matmul -> gate -> BatchNorm over row tiles.

    p_ref : (TR, Kp)  bf16 im2col patches (ones column folds the biases in)
    w_ref : (Kp, 128) bf16 fused weight: conv -> lanes [0,Cout),
                                         mask -> lanes [64, 64+Cout)
    o_ref : (Rp, 128) f32 full result block, VMEM-resident across the grid
            (constant block index); holds g until the last step applies BN in
            place, then is flushed to HBM once.
    sum_ref / sq_ref : (1, 128) f32 per-channel partial stats (VMEM scratch).
    """
    i = pl.program_id(0)

    @pl.when(i == 0)
    def _init():
        sum_ref[...] = jnp.zeros_like(sum_ref)
        sq_ref[...] = jnp.zeros_like(sq_ref)

    # One lane-dense MXU matmul per tile (bf16 x bf16 -> f32 accumulate).
    y = jnp.dot(p_ref[...], w_ref[...], preferred_element_type=jnp.float32)

    # Bring the mask logits (lanes [64, 64+Cout)) onto the conv lanes (XLU).
    m = pltpu.roll(y, shift=64, axis=1)

    act = jnp.where(y >= 0.0, y, 0.2 * y)                 # LeakyReLU(0.2)  (VPU)
    gate = 0.5 * (jnp.tanh(0.5 * m) + 1.0)                # stable sigmoid (EUP)
    g = act * gate

    row0 = pl.multiple_of(i * tile_rows, tile_rows)
    o_ref[pl.ds(row0, tile_rows), :] = g                  # stays in VMEM

    # Per-channel partial statistics accumulated in scratch (never hit HBM).
    sum_ref[...] += jnp.sum(g, axis=0, keepdims=True)
    sq_ref[...] += jnp.sum(g * g, axis=0, keepdims=True)

    @pl.when(i == pl.num_programs(0) - 1)
    def _finalize():
        mean = sum_ref[...] * inv_n
        var = sq_ref[...] * inv_n - mean * mean
        rstd = jax.lax.rsqrt(var + eps)
        lane = jax.lax.broadcasted_iota(jnp.int32, (1, o_ref.shape[1]), 1)
        keep = lane < cout
        scale = jnp.where(keep, rstd, 0.0)                # zero the spare lanes
        shift = jnp.where(keep, -mean * rstd, 0.0)
        o_ref[...] = o_ref[...] * scale + shift           # BatchNorm in place


def _fused_gated_deconv_bn(patches, w_fused, n_rows, cout, tile_rows):
    """patches: (Rp, Kp) bf16, w_fused: (Kp, 128) bf16 -> (Rp, 128) f32."""
    Rp, Kp = patches.shape
    Cp = w_fused.shape[1]
    n_tiles = Rp // tile_rows

    kernel = functools.partial(_gated_deconv_bn_kernel,
                               inv_n=1.0 / n_rows, cout=cout,
                               tile_rows=tile_rows)
    return pl.pallas_call(
        kernel,
        out_shape=jax.ShapeDtypeStruct((Rp, Cp), jnp.float32),
        grid=(n_tiles,),
        in_specs=[
            pl.BlockSpec((tile_rows, Kp), lambda i: (i, 0)),   # streamed patches
            pl.BlockSpec((Kp, Cp), lambda i: (0, 0)),          # resident weight
        ],
        # Whole result stays resident in VMEM across the grid (constant block
        # index); flushed to HBM exactly once, after the in-place BN.
        out_specs=pl.BlockSpec((Rp, Cp), lambda i: (0, 0)),
        scratch_shapes=[pltpu.VMEM((1, Cp), jnp.float32),
                        pltpu.VMEM((1, Cp), jnp.float32)],
        compiler_params=pltpu.CompilerParams(
            # Stats accumulate across row tiles and the final in-place BN
            # depends on all of them -> reduction ("arbitrary") axis.
            # TODO(synk): on v7x (2 TCs, 64 MiB VMEM) this runs single-core;
            # for large Rp (> ~64K rows) switch to a 2-way parallel row split
            # with per-core partial stats and a streaming BN-apply pass.
            dimension_semantics=("arbitrary",)),
    )(patches, w_fused)


# ------------------------------ JAX glue -------------------------------------
def _upsample2x_im2col(x_nchw, k_padded):
    """im2col patches of a 3x3 / stride-1 / pad-1 conv applied to the
    nearest-2x upsample of x, built directly from x (the 4x-larger upsampled
    tensor is never materialized).  Feature layout of each row:
        [tap(i=0,j=0,c=0..C), ..., tap(2,2,...), 1.0 (bias column), 0 padding]
    padded to width `k_padded`.  Returns ((N*OH*OW, k_padded) bf16, (N,OH,OW))."""
    x = jnp.transpose(x_nchw, (0, 2, 3, 1)).astype(jnp.bfloat16)      # NHWC
    N, H, W, C = x.shape
    xp = jnp.pad(x, ((0, 0), (1, 1), (1, 1), (0, 0)))                 # 1-px pad
    K = 9 * C

    # Output pixel (2h+bh, 2w+bw), tap (i, j) reads xp[h+OFF[bh][i], w+OFF[bw][j]];
    # derived from nearest-2x upsample + 1-px conv padding: src = (out+tap-1)//2.
    OFF = ((0, 1, 1), (1, 1, 2))

    ones = jnp.ones((N, H, W, 1), jnp.bfloat16)
    kpad = jnp.zeros((N, H, W, k_padded - K - 1), jnp.bfloat16)

    def parity(bh, bw):                                               # (N,H,W,Kp)
        taps = [xp[:, OFF[bh][i]:OFF[bh][i] + H, OFF[bw][j]:OFF[bw][j] + W, :]
                for i in range(3) for j in range(3)]
        return jnp.concatenate(taps + [ones, kpad], axis=-1)

    full = jnp.stack([jnp.stack([parity(0, 0), parity(0, 1)], axis=3),
                      jnp.stack([parity(1, 0), parity(1, 1)], axis=3)],
                     axis=2)                                          # (N,H,2,W,2,Kp)
    return full.reshape(N * 2 * H * 2 * W, k_padded), (N, 2 * H, 2 * W)


def _spectral_normalize(w):
    """Deterministic power iteration on w viewed as (Cout, -1).
    (PyTorch SN keeps a persistent random `u` and does one step per forward;
    a fixed-start multi-step iteration is used here for determinism.)"""
    wm = w.reshape(w.shape[0], -1)
    u = jnp.ones((wm.shape[0],), jnp.float32) / jnp.sqrt(wm.shape[0])
    v = wm.T @ u
    for _ in range(15):
        v = wm.T @ u
        v = v / (jnp.linalg.norm(v) + 1e-12)
        u = wm @ v
        u = u / (jnp.linalg.norm(u) + 1e-12)
    sigma = u @ (wm @ v)
    return w / sigma


@functools.partial(jax.jit, static_argnames=("padding", "tile_rows"))
def sn_gated_deconv2d_forward(x_nchw, w_conv, b_conv, w_mask, b_mask,
                              padding=1, tile_rows=1024):
    """Full module forward.  Weights are PyTorch layout (Cout, Cin, kh, kw)."""
    Cout, Cin, kh, kw = w_conv.shape
    assert (kh, kw, padding) == (3, 3, 1), "im2col path assumes 3x3, stride 1, pad 1"
    assert Cout <= 64, "fused-lane packing assumes Cout <= 64"

    wc = _spectral_normalize(w_conv)
    wm = _spectral_normalize(w_mask)
    # (Cout,Cin,kh,kw) -> (kh,kw,Cin,Cout) -> (K,Cout): matches patch tap order.
    wc2 = jnp.transpose(wc, (2, 3, 1, 0)).reshape(kh * kw * Cin, Cout)
    wm2 = jnp.transpose(wm, (2, 3, 1, 0)).reshape(kh * kw * Cin, Cout)

    K = kh * kw * Cin
    Kp = _round_up(K + 1, 16)            # +1 ones column; 16 = bf16 sublane pack
    Cp = 128

    # Fused lane-dense weight: conv -> lanes [0,Cout), mask -> lanes [64,64+Cout),
    # biases folded in via the ones-column row.  Built with one concat + pad.
    conv_half = jnp.pad(jnp.concatenate([wc2, b_conv[None, :]], axis=0),
                        ((0, Kp - K - 1), (0, 64 - Cout)))
    mask_half = jnp.pad(jnp.concatenate([wm2, b_mask[None, :]], axis=0),
                        ((0, Kp - K - 1), (0, 64 - Cout)))
    w_fused = jnp.concatenate([conv_half, mask_half], axis=1).astype(jnp.bfloat16)

    patches, (N, OH, OW) = _upsample2x_im2col(x_nchw, Kp)
    R = N * OH * OW
    tr = min(tile_rows, _round_up(R, 256))
    Rp = _round_up(R, tr)
    # Padded rows are all-zero (including the ones column), so they contribute
    # exactly zero to the BN statistics; the mean/var divisor uses the true R.
    patches = jnp.pad(patches, ((0, Rp - R), (0, 0)))

    out_flat = _fused_gated_deconv_bn(patches, w_fused, R, Cout, tr)
    out = out_flat[:R, :Cout].reshape(N, OH, OW, Cout)
    return jnp.transpose(out, (0, 3, 1, 2))                # back to NCHW


# --------------------------- pure-JAX reference ------------------------------
def _reference(x_nchw, w_conv, b_conv, w_mask, b_mask, padding=1):
    wc = _spectral_normalize(w_conv)
    wm = _spectral_normalize(w_mask)
    up = jnp.repeat(jnp.repeat(x_nchw, 2, axis=2), 2, axis=3)
    pad = ((padding, padding), (padding, padding))
    hi = jax.lax.Precision.HIGHEST
    xc = jax.lax.conv_general_dilated(up, wc, (1, 1), pad, precision=hi) \
        + b_conv[None, :, None, None]
    xm = jax.lax.conv_general_dilated(up, wm, (1, 1), pad, precision=hi) \
        + b_mask[None, :, None, None]
    g = jnp.where(xc >= 0, xc, 0.2 * xc) * jax.nn.sigmoid(xm)
    mean = g.mean(axis=(0, 2, 3), keepdims=True)
    var = ((g - mean) ** 2).mean(axis=(0, 2, 3), keepdims=True)
    return (g - mean) / jnp.sqrt(var + 1e-5)


# --------------------------------- main ---------------------------------------
if __name__ == "__main__":
    key = jax.random.PRNGKey(0)
    k_x, k_wc, k_wm, k_bc, k_bm = jax.random.split(key, 5)

    # SNGatedDeConv2dWithActivationV0(scale_factor=2, in_channels=4,
    #   out_channels=8, kernel_size=3, stride=1, padding=1)
    N, Cin, H, W = 2, 4, 16, 16
    Cout, kh, kw = 8, 3, 3

    x = jax.random.normal(k_x, (N, Cin, H, W), jnp.float32)

    # kaiming_normal_ (fan_in, gain=sqrt(2)) deterministic init
    fan_in = Cin * kh * kw
    std = (2.0 / fan_in) ** 0.5
    w_conv = jax.random.normal(k_wc, (Cout, Cin, kh, kw), jnp.float32) * std
    w_mask = jax.random.normal(k_wm, (Cout, Cin, kh, kw), jnp.float32) * std
    # Conv2d default bias init: U(-1/sqrt(fan_in), 1/sqrt(fan_in))
    bound = 1.0 / (fan_in ** 0.5)
    b_conv = jax.random.uniform(k_bc, (Cout,), jnp.float32, -bound, bound)
    b_mask = jax.random.uniform(k_bm, (Cout,), jnp.float32, -bound, bound)

    out = jax.block_until_ready(
        sn_gated_deconv2d_forward(x, w_conv, b_conv, w_mask, b_mask))
    ref = jax.block_until_ready(_reference(x, w_conv, b_conv, w_mask, b_mask))

    assert out.shape == (N, Cout, 2 * H, 2 * W), out.shape
    # bf16 matmul operands (f32 MXU accumulate) give ~1e-2-level worst-element
    # error on the BN-normalized (unit-variance) output; structural errors
    # would be O(1), so this tolerance still catches them.
    assert jnp.allclose(out, ref, atol=3e-2, rtol=2e-2), \
        float(jnp.max(jnp.abs(out - ref)))

    print("KERNEL_OK")
</pallas_src>

<mosaic_0001>
module attributes {stable_mosaic.version = 11 : i64} {
  func.func @_gated_deconv_bn_kernel(%arg0: i32, %arg1: memref<1024x48xbf16, #tpu.memory_space<vmem>>, %arg2: memref<48x128xbf16, #tpu.memory_space<vmem>>, %arg3: memref<2048x128xf32, #tpu.memory_space<vmem>>, %arg4: memref<1x128xf32, #tpu.memory_space<vmem>>, %arg5: memref<1x128xf32, #tpu.memory_space<vmem>>) attributes {dimension_semantics = [#tpu.dimension_semantics<arbitrary>], iteration_bounds = array<i64: 2>, scalar_prefetch = 0 : i64, scratch_operands = 2 : i64, tpu.core_type = #tpu.core_type<tc>, window_params = [{transform_indices = @transform_0, window_bounds = array<i64: 1024, 48>}, {pipeline_mode = #tpu.pipeline_mode<synchronous>, transform_indices = @transform_1, window_bounds = array<i64: 48, 128>}, {pipeline_mode = #tpu.pipeline_mode<synchronous>, transform_indices = @transform_2, window_bounds = array<i64: 2048, 128>}]} {
    %c0_i32 = arith.constant 0 : i32
    %0 = arith.cmpi eq, %arg0, %c0_i32 : i32
    %1 = arith.extui %0 : i1 to i32
    %c0_i32_0 = arith.constant 0 : i32
    %2 = arith.cmpi ne, %1, %c0_i32_0 : i32
    scf.if %2 {
      %cst_21 = arith.constant 0.000000e+00 : f32
      %38 = vector.broadcast %cst_21 : f32 to vector<1x128xf32>
      %c0_22 = arith.constant 0 : index
      %c0_23 = arith.constant 0 : index
      %39 = vector.load %arg4[%c0_22, %c0_23] : memref<1x128xf32, #tpu.memory_space<vmem>>, vector<1x128xf32>
      tpu.vector_store %arg4[%c0_22, %c0_23], %38 {strides = array<i32>} : memref<1x128xf32, #tpu.memory_space<vmem>>, vector<1x128xf32>,
      %cst_24 = arith.constant 0.000000e+00 : f32
      %40 = vector.broadcast %cst_24 : f32 to vector<1x128xf32>
      %c0_25 = arith.constant 0 : index
      %c0_26 = arith.constant 0 : index
      %41 = vector.load %arg5[%c0_25, %c0_26] : memref<1x128xf32, #tpu.memory_space<vmem>>, vector<1x128xf32>
      tpu.vector_store %arg5[%c0_25, %c0_26], %40 {strides = array<i32>} : memref<1x128xf32, #tpu.memory_space<vmem>>, vector<1x128xf32>,
    } else {
    }
    %c0 = arith.constant 0 : index
    %c0_1 = arith.constant 0 : index
    %3 = vector.load %arg1[%c0, %c0_1] : memref<1024x48xbf16, #tpu.memory_space<vmem>>, vector<1024x48xbf16>
    %c0_2 = arith.constant 0 : index
    %c0_3 = arith.constant 0 : index
    %4 = vector.load %arg2[%c0_2, %c0_3] : memref<48x128xbf16, #tpu.memory_space<vmem>>, vector<48x128xbf16>
    %cst = arith.constant dense<0.000000e+00> : vector<1024x128xf32>
    %5 = tpu.matmul %3, %4, %cst {dimension_numbers = #tpu.dot_dimension_numbers<[1], [0], [0], [1], [0, 0, 1, 1], [], []>} : vector<1024x48xbf16>, vector<48x128xbf16>, vector<1024x128xf32> -> vector<1024x128xf32>
    %c64_i32 = arith.constant 64 : i32
    %6 = tpu.dynamic_rotate %5 by %c64_i32 dim 1 : vector<1024x128xf32>, i32 -> vector<1024x128xf32>
    %cst_4 = arith.constant 0.000000e+00 : f32
    %7 = vector.broadcast %cst_4 : f32 to vector<1024x128xf32>
    %8 = arith.cmpf oge, %5, %7 : vector<1024x128xf32>
    %cst_5 = arith.constant 2.000000e-01 : f32
    %9 = vector.broadcast %cst_5 : f32 to vector<1024x128xf32>
    %10 = arith.mulf %9, %5 : vector<1024x128xf32>
    %11 = arith.select %8, %5, %10 : vector<1024x128xi1>, vector<1024x128xf32>
    %cst_6 = arith.constant 5.000000e-01 : f32
    %12 = vector.broadcast %cst_6 : f32 to vector<1024x128xf32>
    %13 = arith.mulf %12, %6 : vector<1024x128xf32>
    %14 = math.tanh %13 : vector<1024x128xf32>
    %cst_7 = arith.constant 1.000000e+00 : f32
    %15 = vector.broadcast %cst_7 : f32 to vector<1024x128xf32>
    %16 = arith.addf %14, %15 : vector<1024x128xf32>
    %cst_8 = arith.constant 5.000000e-01 : f32
    %17 = vector.broadcast %cst_8 : f32 to vector<1024x128xf32>
    %18 = arith.mulf %17, %16 : vector<1024x128xf32>
    %19 = arith.mulf %11, %18 : vector<1024x128xf32>
    %c1024_i32 = arith.constant 1024 : i32
    %20 = arith.muli %arg0, %c1024_i32 : i32
    %21 = tpu.assume_multiple %20, 1024 : i32
    %22 = arith.index_cast %21 : i32 to index
    %c0_9 = arith.constant 0 : index
    %23 = vector.load %arg3[%22, %c0_9] : memref<2048x128xf32, #tpu.memory_space<vmem>>, vector<1024x128xf32>
    tpu.vector_store %arg3[%22, %c0_9], %19 {strides = array<i32>} : memref<2048x128xf32, #tpu.memory_space<vmem>>, vector<1024x128xf32>,
    %c0_10 = arith.constant 0 : index
    %c0_11 = arith.constant 0 : index
    %24 = vector.load %arg4[%c0_10, %c0_11] : memref<1x128xf32, #tpu.memory_space<vmem>>, vector<1x128xf32>
    %cst_12 = arith.constant dense<0.000000e+00> : vector<128xf32>
    %25 = vector.multi_reduction <add>, %19, %cst_12 [0] : vector<1024x128xf32> to vector<128xf32>
    %26 = vector.shape_cast %25 : vector<128xf32> to vector<1x128xf32>
    %27 = arith.addf %24, %26 : vector<1x128xf32>
    %c0_13 = arith.constant 0 : index
    %c0_14 = arith.constant 0 : index
    %28 = vector.load %arg4[%c0_13, %c0_14] : memref<1x128xf32, #tpu.memory_space<vmem>>, vector<1x128xf32>
    tpu.vector_store %arg4[%c0_13, %c0_14], %27 {strides = array<i32>} : memref<1x128xf32, #tpu.memory_space<vmem>>, vector<1x128xf32>,
    %c0_15 = arith.constant 0 : index
    %c0_16 = arith.constant 0 : index
    %29 = vector.load %arg5[%c0_15, %c0_16] : memref<1x128xf32, #tpu.memory_space<vmem>>, vector<1x128xf32>
    %30 = arith.mulf %19, %19 : vector<1024x128xf32>
    %cst_17 = arith.constant dense<0.000000e+00> : vector<128xf32>
    %31 = vector.multi_reduction <add>, %30, %cst_17 [0] : vector<1024x128xf32> to vector<128xf32>
    %32 = vector.shape_cast %31 : vector<128xf32> to vector<1x128xf32>
    %33 = arith.addf %29, %32 : vector<1x128xf32>
    %c0_18 = arith.constant 0 : index
    %c0_19 = arith.constant 0 : index
    %34 = vector.load %arg5[%c0_18, %c0_19] : memref<1x128xf32, #tpu.memory_space<vmem>>, vector<1x128xf32>
    tpu.vector_store %arg5[%c0_18, %c0_19], %33 {strides = array<i32>} : memref<1x128xf32, #tpu.memory_space<vmem>>, vector<1x128xf32>,
    %c1_i32 = arith.constant 1 : i32
    %35 = arith.cmpi eq, %arg0, %c1_i32 : i32
    %36 = arith.extui %35 : i1 to i32
    %c0_i32_20 = arith.constant 0 : i32
    %37 = arith.cmpi ne, %36, %c0_i32_20 : i32
    scf.if %37 {
      %c0_21 = arith.constant 0 : index
      %c0_22 = arith.constant 0 : index
      %38 = vector.load %arg4[%c0_21, %c0_22] : memref<1x128xf32, #tpu.memory_space<vmem>>, vector<1x128xf32>
      %cst_23 = arith.constant 4.8828125E-4 : f32
      %39 = vector.broadcast %cst_23 : f32 to vector<1x128xf32>
      %40 = arith.mulf %38, %39 : vector<1x128xf32>
      %c0_24 = arith.constant 0 : index
      %c0_25 = arith.constant 0 : index
      %41 = vector.load %arg5[%c0_24, %c0_25] : memref<1x128xf32, #tpu.memory_space<vmem>>, vector<1x128xf32>
      %cst_26 = arith.constant 4.8828125E-4 : f32
      %42 = vector.broadcast %cst_26 : f32 to vector<1x128xf32>
      %43 = arith.mulf %41, %42 : vector<1x128xf32>
      %44 = arith.mulf %40, %40 : vector<1x128xf32>
      %45 = arith.subf %43, %44 : vector<1x128xf32>
      %cst_27 = arith.constant 9.99999974E-6 : f32
      %46 = vector.broadcast %cst_27 : f32 to vector<1x128xf32>
      %47 = arith.addf %45, %46 : vector<1x128xf32>
      %48 = math.rsqrt %47 : vector<1x128xf32>
      %49 = tpu.iota {dimensions = array<i32: 1>} : vector<1x128xi32>
      %c8_i32 = arith.constant 8 : i32
      %50 = vector.broadcast %c8_i32 : i32 to vector<1x128xi32>
      %51 = arith.cmpi slt, %49, %50 : vector<1x128xi32>
      %cst_28 = arith.constant 0.000000e+00 : f32
      %52 = vector.broadcast %cst_28 : f32 to vector<1x128xf32>
      %53 = arith.select %51, %48, %52 : vector<1x128xi1>, vector<1x128xf32>
      %cst_29 = arith.constant 0.000000e+00 : f32
      %54 = vector.broadcast %cst_29 : f32 to vector<1x128xf32>
      %55 = arith.subf %54, %40 : vector<1x128xf32>
      %56 = arith.mulf %55, %48 : vector<1x128xf32>
      %cst_30 = arith.constant 0.000000e+00 : f32
      %57 = vector.broadcast %cst_30 : f32 to vector<1x128xf32>
      %58 = arith.select %51, %56, %57 : vector<1x128xi1>, vector<1x128xf32>
      %c0_31 = arith.constant 0 : index
      %c0_32 = arith.constant 0 : index
      %59 = vector.load %arg3[%c0_31, %c0_32] : memref<2048x128xf32, #tpu.memory_space<vmem>>, vector<2048x128xf32>
      %60 = vector.broadcast %53 : vector<1x128xf32> to vector<2048x128xf32>
      %61 = arith.mulf %59, %60 : vector<2048x128xf32>
      %62 = vector.broadcast %58 : vector<1x128xf32> to vector<2048x128xf32>
      %63 = arith.addf %61, %62 : vector<2048x128xf32>
      %c0_33 = arith.constant 0 : index
      %c0_34 = arith.constant 0 : index
      %64 = vector.load %arg3[%c0_33, %c0_34] : memref<2048x128xf32, #tpu.memory_space<vmem>>, vector<2048x128xf32>
      tpu.vector_store %arg3[%c0_33, %c0_34], %63 {strides = array<i32>} : memref<2048x128xf32, #tpu.memory_space<vmem>>, vector<2048x128xf32>,
    } else {
    }
    return
  }
  func.func @transform_0(%arg0: i32) -> (i32, i32) {
    %c0_i32 = arith.constant 0 : i32
    %c0_i32_0 = arith.constant 0 : i32
    return %arg0, %c0_i32 : i32, i32
  }
  func.func @transform_1(%arg0: i32) -> (i32, i32) {
    %c0_i32 = arith.constant 0 : i32
    %c0_i32_0 = arith.constant 0 : i32
    %c0_i32_1 = arith.constant 0 : i32
    return %c0_i32, %c0_i32_0 : i32, i32
  }
  func.func @transform_2(%arg0: i32) -> (i32, i32) {
    %c0_i32 = arith.constant 0 : i32
    %c0_i32_0 = arith.constant 0 : i32
    %c0_i32_1 = arith.constant 0 : i32
    return %c0_i32, %c0_i32_0 : i32, i32
  }
}

</mosaic_0001>

<llo_original>
// kernel: sn_gated_deconv2d_forward.1
$region0: #{sn_gated_deconv2d_forward.1}
  #allocation0 [shape = 'u32[]', space=smem, size = 0x4, offset = 0x4, fixed_abs, tag = 'smem constant byte address 0x4 - core index']
  #allocation1 [shape = 'u32[144,128]{1,0:T(1,128)}', space=vmem, size = 0x12000, scoped, tag = 'internal scratch']
  #allocation2 [shape = 'f32[1,128]{1,0:T(1,128)}', space=vmem, size = 0x200, scoped, tag = 'scratch operand']
  #allocation3 [shape = 'f32[1,128]{1,0:T(1,128)}', space=vmem, size = 0x200, scoped, tag = 'scratch operand']
  %s0 = inlined_call_operand.vmem [shape: bf16[2048,48], index: 0, kind: input, shape index: {}]
  %s1 = inlined_call_operand.vmem [shape: bf16[48,128], index: 1, kind: input, shape index: {}]
  %s2 = inlined_call_operand.vmem [shape: f32[2048,128], index: 2, kind: output, shape index: {}]
  %s3 = sld [smem:[#allocation0]]
  $region49: #{sn_gated_deconv2d_forward.1} parent=0
    _
  %s5 = ssub.s32 1, %s3
  %s6 = scalar_select 0, %s5, %s3
  loop: start=0, step=1, limit=4
  $region2: #{sn_gated_deconv2d_forward.1} parent=0 // loop_pre_header
    _
  $region3: #{sn_gated_deconv2d_forward.1} parent=0 // loop_header
    %s8 = sphi 0, %s12
    %p9 = scmp.ge.s32.totalorder %s8, 4
    %s18 = sphi 0, %s20
    %s21 = sphi 0, %s18
    %s22 = sphi 0, %s21
    %s38 = sphi 0, %s22
    %s42 = sphi 0, %s42
    %s44 = sphi 0, %s42
    %s45 = sphi 0, %s44
    %s59 = sphi 0, %s45
    %s63 = sphi 0, %s63
    %s65 = sphi 0, %s63
    %s66 = sphi 0, %s65
    %s80 = sphi 0, %s66
  $region4: #{sn_gated_deconv2d_forward.1} parent=0 // loop_header_branch
    %11 = sbr.rel (%p9) target = $region8
  $region5: #{sn_gated_deconv2d_forward.1} parent=0 // loop_body
    %s13 = ssub.s32 %s8, 1
    %s14 = ssub.s32 %s8, 2
    %s15 = sadd.s32 %s8, 1
    %s16 = ssub.s32 %s8, %s15
    %p17 = scmp.eq.s32.totalorder %s16, 0
    %s19 = sadd.s32 %s18, 1
    %s20 = scalar_select %p17, %s18, %s19
    %p23 = pneg %p17
    %p24 = scmp.eq.s32.totalorder %s8, 1
    %p25 = por %p23, %p24
    %p26 = scmp.ne.s32.totalorder %s18, %s21
    %p27 = scmp.eq.s32.totalorder %s8, 0
    %p28 = por %p26, %p27
    %p29 = scmp.ne.s32.totalorder %s18, %s21
    %p30 = scmp.eq.s32.totalorder %s13, 1
    %p31 = por %p29, %p30
    %p32 = scmp.ne.s32.totalorder %s21, %s22
    %p33 = scmp.eq.s32.totalorder %s13, 0
    %p34 = por %p32, %p33
    %p35 = scmp.ne.s32.totalorder %s21, %s22
    %p36 = scmp.eq.s32.totalorder %s14, 1
    %p37 = por %p35, %p36
    %p39 = scmp.ne.s32.totalorder %s22, %s38
    %p40 = scmp.eq.s32.totalorder %s14, 0
    %p41 = por %p39, %p40
    %s43 = sadd.s32 %s42, 1
    %p46 = scmp.eq.s32.totalorder %s8, 1
    %p47 = scmp.ne.s32.totalorder %s42, %s44
    %p48 = scmp.eq.s32.totalorder %s8, 0
    %p49 = por %p47, %p48
    %p50 = scmp.ne.s32.totalorder %s42, %s44
    %p51 = scmp.eq.s32.totalorder %s13, 1
    %p52 = por %p50, %p51
    %p53 = scmp.ne.s32.totalorder %s44, %s45
    %p54 = scmp.eq.s32.totalorder %s13, 0
    %p55 = por %p53, %p54
    %p56 = scmp.ne.s32.totalorder %s44, %s45
    %p57 = scmp.eq.s32.totalorder %s14, 1
    %p58 = por %p56, %p57
    %p60 = scmp.ne.s32.totalorder %s45, %s59
    %p61 = scmp.eq.s32.totalorder %s14, 0
    %p62 = por %p60, %p61
    %s64 = sadd.s32 %s63, 1
    %p67 = scmp.eq.s32.totalorder %s8, 1
    %p68 = scmp.ne.s32.totalorder %s63, %s65
    %p69 = scmp.eq.s32.totalorder %s8, 0
    %p70 = por %p68, %p69
    %p71 = scmp.ne.s32.totalorder %s63, %s65
    %p72 = scmp.eq.s32.totalorder %s13, 1
    %p73 = por %p71, %p72
    %p74 = scmp.ne.s32.totalorder %s65, %s66
    %p75 = scmp.eq.s32.totalorder %s13, 0
    %p76 = por %p74, %p75
    %p77 = scmp.ne.s32.totalorder %s65, %s66
    %p78 = scmp.eq.s32.totalorder %s14, 1
    %p79 = por %p77, %p78
    %p81 = scmp.ne.s32.totalorder %s66, %s80
    %p82 = scmp.eq.s32.totalorder %s14, 0
    %p83 = por %p81, %p82
    %p84 = scmp.le.s32.totalorder 1, %s8
    %p85 = scmp.lt.s32.totalorder %s8, 3
    %p86 = pnand %p84, %p85
    %p87 = pneg %p86
    // Predicated region
    $region9: #{sn_gated_deconv2d_forward.1} parent=5 // pred_check
      _
    $region10: #{sn_gated_deconv2d_forward.1} parent=5 // pred_check_branch
      %89 = sbr.rel (%p86) target = $region12
    $region11: #{sn_gated_deconv2d_forward.1} parent=5 // pred_region
      %s90 = ssub.s32 %s8, 1
      // Predicated region
      $region13: #{sn_gated_deconv2d_forward.1} parent=11 // pred_check
        %p91 = pneg %p55
      $region14: #{sn_gated_deconv2d_forward.1} parent=11 // pred_check_branch
        %93 = sbr.rel (%p91) target = $region16
      $region15: #{sn_gated_deconv2d_forward.1} parent=11 // pred_region
        _
      $region16: #{sn_gated_deconv2d_forward.1} parent=11 // pred_fallthru
        _
    $region12: #{sn_gated_deconv2d_forward.1} parent=5 // pred_fallthru
      _
    %p94 = scmp.lt.s32.totalorder %s8, 2
    // Predicated region
    $region17: #{sn_gated_deconv2d_forward.1} parent=5 // pred_check
      %p95 = pneg %p94
    $region18: #{sn_gated_deconv2d_forward.1} parent=5 // pred_check_branch
      %97 = sbr.rel (%p95) target = $region20
    $region19: #{sn_gated_deconv2d_forward.1} parent=5 // pred_region
      // Predicated region
      $region21: #{sn_gated_deconv2d_forward.1} parent=19 // pred_check
        %p98 = pneg %p28
      $region22: #{sn_gated_deconv2d_forward.1} parent=19 // pred_check_branch
        %100 = sbr.rel (%p98) target = $region24
      $region23: #{sn_gated_deconv2d_forward.1} parent=19 // pred_region
        %s101 = smul.u32 128, %s8
        %p102 = scmp.lt.s32.totalorder %s101, 255
        %s103 = scalar_select %p102, %s101, 255
        %s104 = smul.addr %s103, 4
        %s105 = scalar_lea.vmem %s0, %s104
        %s106 = smul.u32 128, %s8
      $region24: #{sn_gated_deconv2d_forward.1} parent=19 // pred_fallthru
        _
    $region20: #{sn_gated_deconv2d_forward.1} parent=5 // pred_fallthru
      _
    %p107 = scmp.le.s32.totalorder 1, %s8
    %p108 = scmp.lt.s32.totalorder %s8, 3
    %p109 = pnand %p107, %p108
    %p110 = pneg %p109
    // Predicated region
    $region25: #{sn_gated_deconv2d_forward.1} parent=5 // pred_check
      _
    $region26: #{sn_gated_deconv2d_forward.1} parent=5 // pred_check_branch
      %112 = sbr.rel (%p109) target = $region28
    $region27: #{sn_gated_deconv2d_forward.1} parent=5 // pred_region
      %s113 = ssub.s32 %s8, 1
      %s114 = smul.u32 128, %s13
      %p115 = scmp.lt.s32.totalorder %s114, 255
      %s116 = scalar_select %p115, %s114, 255
      %s117 = smul.addr %s116, 4
      %s118 = scalar_lea.vmem %s0, %s117
      %p119 = pneg %p34
      %p120 = pneg %p31
      %p121 = pneg %p55
      %p122 = pneg %p52
      %p123 = pneg %p76
      %p124 = pneg %p73
      %s125 = smul.u32 128, %s13
      %p126 = scmp.lt.s32.totalorder %s125, 255
      %s127 = scalar_select %p126, %s125, 255
      %s128 = smul.addr %s127, 4
      %s129 = scalar_lea.vmem %s0, %s128
      %s130 = smul.u32 128, %s13
      %p132 = scmp.eq.s32.totalorder %s13, 0
      // Predicated region
      $region29: #{sn_gated_deconv2d_forward.1} parent=27 // pred_check
        %p133 = pneg %p132
      $region30: #{sn_gated_deconv2d_forward.1} parent=27 // pred_check_branch
        %135 = sbr.rel (%p133) target = $region32
      $region31: #{sn_gated_deconv2d_forward.1} parent=27 // pred_region
        %136 = vst [vmem:[#allocation2] sm:$0x1] 0.0
        %137 = vst [vmem:[#allocation3] sm:$0x1] 0.0
      $region32: #{sn_gated_deconv2d_forward.1} parent=27 // pred_fallthru
        _
      %v138 = vld [vmem:[%s129] sm:$0xf]
      %v139 = vld [vmem:[%s129 + $0x4] sm:$0xf]
      %v140 = vld [vmem:[%s129 + $0x8] sm:$0xf]
      %v141 = vld [vmem:[%s129 + $0xc] sm:$0xf]
      %v142 = vld [vmem:[%s129 + $0x10] sm:$0xf]
      %v143 = vld [vmem:[%s129 + $0x14] sm:$0xf]
      %v144 = vld [vmem:[%s129 + $0x18] sm:$0xf]
      %v145 = vld [vmem:[%s129 + $0x1c] sm:$0xf]
      %v146 = vld [vmem:[%s129 + $0x20] sm:$0xf]
      %v147 = vld [vmem:[%s129 + $0x24] sm:$0xf]
      %v148 = vld [vmem:[%s129 + $0x28] sm:$0xf]
      %v149 = vld [vmem:[%s129 + $0x2c] sm:$0xf]
      %v150 = vld [vmem:[%s129 + $0x30] sm:$0xf]
      %v151 = vld [vmem:[%s129 + $0x34] sm:$0xf]
      %v152 = vld [vmem:[%s129 + $0x38] sm:$0xf]
      %v153 = vld [vmem:[%s129 + $0x3c] sm:$0xf]
      %v154 = vld [vmem:[%s129 + $0x40] sm:$0xf]
      %v155 = vld [vmem:[%s129 + $0x44] sm:$0xf]
      %v156 = vld [vmem:[%s129 + $0x48] sm:$0xf]
      %v157 = vld [vmem:[%s129 + $0x4c] sm:$0xf]
      %v158 = vld [vmem:[%s129 + $0x50] sm:$0xf]
      %v159 = vld [vmem:[%s129 + $0x54] sm:$0xf]
      %v160 = vld [vmem:[%s129 + $0x58] sm:$0xf]
      %v161 = vld [vmem:[%s129 + $0x5c] sm:$0xf]
      %v162 = vld [vmem:[%s129 + $0x60] sm:$0xf]
      %v163 = vld [vmem:[%s129 + $0x64] sm:$0xf]
      %v164 = vld [vmem:[%s129 + $0x68] sm:$0xf]
      %v165 = vld [vmem:[%s129 + $0x6c] sm:$0xf]
      %v166 = vld [vmem:[%s129 + $0x70] sm:$0xf]
      %v167 = vld [vmem:[%s129 + $0x74] sm:$0xf]
      %v168 = vld [vmem:[%s129 + $0x78] sm:$0xf]
      %v169 = vld [vmem:[%s129 + $0x7c] sm:$0xf]
      %v170 = vld [vmem:[%s129 + $0x80] sm:$0xf]
      %v171 = vld [vmem:[%s129 + $0x84] sm:$0xf]
      %v172 = vld [vmem:[%s129 + $0x88] sm:$0xf]
      %v173 = vld [vmem:[%s129 + $0x8c] sm:$0xf]
      %v174 = vld [vmem:[%s129 + $0x90] sm:$0xf]
      %v175 = vld [vmem:[%s129 + $0x94] sm:$0xf]
      %v176 = vld [vmem:[%s129 + $0x98] sm:$0xf]
      %v177 = vld [vmem:[%s129 + $0x9c] sm:$0xf]
      %v178 = vld [vmem:[%s129 + $0xa0] sm:$0xf]
      %v179 = vld [vmem:[%s129 + $0xa4] sm:$0xf]
      %v180 = vld [vmem:[%s129 + $0xa8] sm:$0xf]
      %v181 = vld [vmem:[%s129 + $0xac] sm:$0xf]
      %v182 = vld [vmem:[%s129 + $0xb0] sm:$0xf]
      %v183 = vld [vmem:[%s129 + $0xb4] sm:$0xf]
      %v184 = vld [vmem:[%s129 + $0xb8] sm:$0xf]
      %v185 = vld [vmem:[%s129 + $0xbc] sm:$0xf]
      %v186 = vld [vmem:[%s129 + $0xc0] sm:$0xf]
      %v187 = vld [vmem:[%s129 + $0xc4] sm:$0xf]
      %v188 = vld [vmem:[%s129 + $0xc8] sm:$0xf]
      %v189 = vld [vmem:[%s129 + $0xcc] sm:$0xf]
      %v190 = vld [vmem:[%s129 + $0xd0] sm:$0xf]
      %v191 = vld [vmem:[%s129 + $0xd4] sm:$0xf]
      %v192 = vld [vmem:[%s129 + $0xd8] sm:$0xf]
      %v193 = vld [vmem:[%s129 + $0xdc] sm:$0xf]
      %v194 = vld [vmem:[%s129 + $0xe0] sm:$0xf]
      %v195 = vld [vmem:[%s129 + $0xe4] sm:$0xf]
      %v196 = vld [vmem:[%s129 + $0xe8] sm:$0xf]
      %v197 = vld [vmem:[%s129 + $0xec] sm:$0xf]
      %v198 = vld [vmem:[%s129 + $0xf0] sm:$0xf]
      %v199 = vld [vmem:[%s129 + $0xf4] sm:$0xf]
      %v200 = vld [vmem:[%s129 + $0xf8] sm:$0xf]
      %v201 = vld [vmem:[%s129 + $0xfc] sm:$0xf]
      %v202 = vld [vmem:[%s129 + $0x100] sm:$0xf]
      %v203 = vld [vmem:[%s129 + $0x104] sm:$0xf]
      %v204 = vld [vmem:[%s129 + $0x108] sm:$0xf]
      %v205 = vld [vmem:[%s129 + $0x10c] sm:$0xf]
      %v206 = vld [vmem:[%s129 + $0x110] sm:$0xf]
      %v207 = vld [vmem:[%s129 + $0x114] sm:$0xf]
      %v208 = vld [vmem:[%s129 + $0x118] sm:$0xf]
      %v209 = vld [vmem:[%s129 + $0x11c] sm:$0xf]
      %v210 = vld [vmem:[%s129 + $0x120] sm:$0xf]
      %v211 = vld [vmem:[%s129 + $0x124] sm:$0xf]
      %v212 = vld [vmem:[%s129 + $0x128] sm:$0xf]
      %v213 = vld [vmem:[%s129 + $0x12c] sm:$0xf]
      %v214 = vld [vmem:[%s129 + $0x130] sm:$0xf]
      %v215 = vld [vmem:[%s129 + $0x134] sm:$0xf]
      %v216 = vld [vmem:[%s129 + $0x138] sm:$0xf]
      %v217 = vld [vmem:[%s129 + $0x13c] sm:$0xf]
      %v218 = vld [vmem:[%s129 + $0x140] sm:$0xf]
      %v219 = vld [vmem:[%s129 + $0x144] sm:$0xf]
      %v220 = vld [vmem:[%s129 + $0x148] sm:$0xf]
      %v221 = vld [vmem:[%s129 + $0x14c] sm:$0xf]
      %v222 = vld [vmem:[%s129 + $0x150] sm:$0xf]
      %v223 = vld [vmem:[%s129 + $0x154] sm:$0xf]
      %v224 = vld [vmem:[%s129 + $0x158] sm:$0xf]
      %v225 = vld [vmem:[%s129 + $0x15c] sm:$0xf]
      %v226 = vld [vmem:[%s129 + $0x160] sm:$0xf]
      %v227 = vld [vmem:[%s129 + $0x164] sm:$0xf]
      %v228 = vld [vmem:[%s129 + $0x168] sm:$0xf]
      %v229 = vld [vmem:[%s129 + $0x16c] sm:$0xf]
      %v230 = vld [vmem:[%s129 + $0x170] sm:$0xf]
      %v231 = vld [vmem:[%s129 + $0x174] sm:$0xf]
      %v232 = vld [vmem:[%s129 + $0x178] sm:$0xf]
      %v233 = vld [vmem:[%s129 + $0x17c] sm:$0xf]
      %v234 = vld [vmem:[%s129 + $0x180] sm:$0xf]
      %v235 = vld [vmem:[%s129 + $0x184] sm:$0xf]
      %v236 = vld [vmem:[%s129 + $0x188] sm:$0xf]
      %v237 = vld [vmem:[%s129 + $0x18c] sm:$0xf]
      %v238 = vld [vmem:[%s129 + $0x190] sm:$0xf]
      %v239 = vld [vmem:[%s129 + $0x194] sm:$0xf]
      %v240 = vld [vmem:[%s129 + $0x198] sm:$0xf]
      %v241 = vld [vmem:[%s129 + $0x19c] sm:$0xf]
      %v242 = vld [vmem:[%s129 + $0x1a0] sm:$0xf]
      %v243 = vld [vmem:[%s129 + $0x1a4] sm:$0xf]
      %v244 = vld [vmem:[%s129 + $0x1a8] sm:$0xf]
      %v245 = vld [vmem:[%s129 + $0x1ac] sm:$0xf]
      %v246 = vld [vmem:[%s129 + $0x1b0] sm:$0xf]
      %v247 = vld [vmem:[%s129 + $0x1b4] sm:$0xf]
      %v248 = vld [vmem:[%s129 + $0x1b8] sm:$0xf]
      %v249 = vld [vmem:[%s129 + $0x1bc] sm:$0xf]
      %v250 = vld [vmem:[%s129 + $0x1c0] sm:$0xf]
      %v251 = vld [vmem:[%s129 + $0x1c4] sm:$0xf]
      %v252 = vld [vmem:[%s129 + $0x1c8] sm:$0xf]
      %v253 = vld [vmem:[%s129 + $0x1cc] sm:$0xf]
      %v254 = vld [vmem:[%s129 + $0x1d0] sm:$0xf]
      %v255 = vld [vmem:[%s129 + $0x1d4] sm:$0xf]
      %v256 = vld [vmem:[%s129 + $0x1d8] sm:$0xf]
      %v257 = vld [vmem:[%s129 + $0x1dc] sm:$0xf]
      %v258 = vld [vmem:[%s129 + $0x1e0] sm:$0xf]
      %v259 = vld [vmem:[%s129 + $0x1e4] sm:$0xf]
      %v260 = vld [vmem:[%s129 + $0x1e8] sm:$0xf]
      %v261 = vld [vmem:[%s129 + $0x1ec] sm:$0xf]
      %v262 = vld [vmem:[%s129 + $0x1f0] sm:$0xf]
      %v263 = vld [vmem:[%s129 + $0x1f4] sm:$0xf]
      %v264 = vld [vmem:[%s129 + $0x1f8] sm:$0xf]
      %v265 = vld [vmem:[%s129 + $0x1fc] sm:$0xf]
      %v266 = vld [vmem:[%s1] sm:$0xf]
      %v267 = vld [vmem:[%s1 + $0x4] sm:$0xf]
      %v268 = vld [vmem:[%s1 + $0x8] sm:$0xf]
      %v269 = vld [vmem:[%s1 + $0xc] sm:$0xf]
      %v270 = vld [vmem:[%s1 + $0x10] sm:$0xf]
      %v271 = vld [vmem:[%s1 + $0x14] sm:$0xf]
      %v400 = vunpack.c.l.b16 %v138
      %v401 = vunpack.c.l.b16 %v139
      %v402 = vunpack.c.l.b16 %v140
      %v403 = vunpack.c.l.b16 %v141
      %v404 = vunpack.c.l.b16 %v142
      %v405 = vunpack.c.l.b16 %v143
      %v406 = vunpack.c.l.b16 %v144
      %v407 = vunpack.c.l.b16 %v145
      %v408 = vunpack.c.l.b16 %v146
      %v409 = vunpack.c.l.b16 %v147
      %v410 = vunpack.c.l.b16 %v148
      %v411 = vunpack.c.l.b16 %v149
      %v412 = vunpack.c.l.b16 %v150
      %v413 = vunpack.c.l.b16 %v151
      %v414 = vunpack.c.l.b16 %v152
      %v415 = vunpack.c.l.b16 %v153
      %v416 = vunpack.c.l.b16 %v154
      %v417 = vunpack.c.l.b16 %v155
      %v418 = vunpack.c.l.b16 %v156
      %v419 = vunpack.c.l.b16 %v157
      %v420 = vunpack.c.l.b16 %v158
      %v421 = vunpack.c.l.b16 %v159
      %v422 = vunpack.c.l.b16 %v160
      %v423 = vunpack.c.l.b16 %v161
      %v424 = vunpack.c.l.b16 %v162
      %v425 = vunpack.c.l.b16 %v163
      %v426 = vunpack.c.l.b16 %v164
      %v427 = vunpack.c.l.b16 %v165
      %v428 = vunpack.c.l.b16 %v166
      %v429 = vunpack.c.l.b16 %v167
      %v430 = vunpack.c.l.b16 %v168
      %v431 = vunpack.c.l.b16 %v169
      %v432 = vunpack.c.l.b16 %v170
      %v433 = vunpack.c.l.b16 %v171
      %v434 = vunpack.c.l.b16 %v172
      %v435 = vunpack.c.l.b16 %v173
      %v436 = vunpack.c.l.b16 %v174
      %v437 = vunpack.c.l.b16 %v175
      %v438 = vunpack.c.l.b16 %v176
      %v439 = vunpack.c.l.b16 %v177
      %v440 = vunpack.c.l.b16 %v178
      %v441 = vunpack.c.l.b16 %v179
      %v442 = vunpack.c.l.b16 %v180
      %v443 = vunpack.c.l.b16 %v181
      %v444 = vunpack.c.l.b16 %v182
      %v445 = vunpack.c.l.b16 %v183
      %v446 = vunpack.c.l.b16 %v184
      %v447 = vunpack.c.l.b16 %v185
      %v448 = vunpack.c.l.b16 %v186
      %v449 = vunpack.c.l.b16 %v187
      %v450 = vunpack.c.l.b16 %v188
      %v451 = vunpack.c.l.b16 %v189
      %v452 = vunpack.c.l.b16 %v190
      %v453 = vunpack.c.l.b16 %v191
      %v454 = vunpack.c.l.b16 %v192
      %v455 = vunpack.c.l.b16 %v193
      %v456 = vunpack.c.l.b16 %v194
      %v457 = vunpack.c.l.b16 %v195
      %v458 = vunpack.c.l.b16 %v196
      %v459 = vunpack.c.l.b16 %v197
      %v460 = vunpack.c.l.b16 %v198
      %v461 = vunpack.c.l.b16 %v199
      %v462 = vunpack.c.l.b16 %v200
      %v463 = vunpack.c.l.b16 %v201
      %v464 = vunpack.c.l.b16 %v202
      %v465 = vunpack.c.l.b16 %v203
      %v466 = vunpack.c.l.b16 %v204
      %v467 = vunpack.c.l.b16 %v205
      %v468 = vunpack.c.l.b16 %v206
      %v469 = vunpack.c.l.b16 %v207
      %v470 = vunpack.c.l.b16 %v208
      %v471 = vunpack.c.l.b16 %v209
      %v472 = vunpack.c.l.b16 %v210
      %v473 = vunpack.c.l.b16 %v211
      %v474 = vunpack.c.l.b16 %v212
      %v475 = vunpack.c.l.b16 %v213
      %v476 = vunpack.c.l.b16 %v214
      %v477 = vunpack.c.l.b16 %v215
      %v478 = vunpack.c.l.b16 %v216
      %v479 = vunpack.c.l.b16 %v217
      %v480 = vunpack.c.l.b16 %v218
      %v481 = vunpack.c.l.b16 %v219
      %v482 = vunpack.c.l.b16 %v220
      %v483 = vunpack.c.l.b16 %v221
      %v484 = vunpack.c.l.b16 %v222
      %v485 = vunpack.c.l.b16 %v223
      %v486 = vunpack.c.l.b16 %v224
      %v487 = vunpack.c.l.b16 %v225
      %v488 = vunpack.c.l.b16 %v226
      %v489 = vunpack.c.l.b16 %v227
      %v490 = vunpack.c.l.b16 %v228
      %v491 = vunpack.c.l.b16 %v229
      %v492 = vunpack.c.l.b16 %v230
      %v493 = vunpack.c.l.b16 %v231
      %v494 = vunpack.c.l.b16 %v232
      %v495 = vunpack.c.l.b16 %v233
      %v496 = vunpack.c.l.b16 %v234
      %v497 = vunpack.c.l.b16 %v235
      %v498 = vunpack.c.l.b16 %v236
      %v499 = vunpack.c.l.b16 %v237
      %v500 = vunpack.c.l.b16 %v238
      %v501 = vunpack.c.l.b16 %v239
      %v502 = vunpack.c.l.b16 %v240
      %v503 = vunpack.c.l.b16 %v241
      %v504 = vunpack.c.l.b16 %v242
      %v505 = vunpack.c.l.b16 %v243
      %v506 = vunpack.c.l.b16 %v244
      %v507 = vunpack.c.l.b16 %v245
      %v508 = vunpack.c.l.b16 %v246
      %v509 = vunpack.c.l.b16 %v247
      %v510 = vunpack.c.l.b16 %v248
      %v511 = vunpack.c.l.b16 %v249
      %v512 = vunpack.c.l.b16 %v250
      %v513 = vunpack.c.l.b16 %v251
      %v514 = vunpack.c.l.b16 %v252
      %v515 = vunpack.c.l.b16 %v253
      %v516 = vunpack.c.l.b16 %v254
      %v517 = vunpack.c.l.b16 %v255
      %v518 = vunpack.c.l.b16 %v256
      %v519 = vunpack.c.l.b16 %v257
      %v520 = vunpack.c.l.b16 %v258
      %v521 = vunpack.c.l.b16 %v259
      %v522 = vunpack.c.l.b16 %v260
      %v523 = vunpack.c.l.b16 %v261
      %v524 = vunpack.c.l.b16 %v262
      %v525 = vunpack.c.l.b16 %v263
      %v526 = vunpack.c.l.b16 %v264
      %v527 = vunpack.c.l.b16 %v265
      %v528 = vpack.c.b16 %v401, %v400
      %v529 = vpack.c.b16 %v403, %v402
      %v530 = vpack.c.b16 %v405, %v404
      %v531 = vpack.c.b16 %v407, %v406
      %v532 = vpack.c.b16 %v409, %v408
      %v533 = vpack.c.b16 %v411, %v410
      %v534 = vpack.c.b16 %v413, %v412
      %v535 = vpack.c.b16 %v415, %v414
      %v536 = vpack.c.b16 %v417, %v416
      %v537 = vpack.c.b16 %v419, %v418
      %v538 = vpack.c.b16 %v421, %v420
      %v539 = vpack.c.b16 %v423, %v422
      %v540 = vpack.c.b16 %v425, %v424
      %v541 = vpack.c.b16 %v427, %v426
      %v542 = vpack.c.b16 %v429, %v428
      %v543 = vpack.c.b16 %v431, %v430
      %v544 = vpack.c.b16 %v433, %v432
      %v545 = vpack.c.b16 %v435, %v434
      %v546 = vpack.c.b16 %v437, %v436
      %v547 = vpack.c.b16 %v439, %v438
      %v548 = vpack.c.b16 %v441, %v440
      %v549 = vpack.c.b16 %v443, %v442
      %v550 = vpack.c.b16 %v445, %v444
      %v551 = vpack.c.b16 %v447, %v446
      %v552 = vpack.c.b16 %v449, %v448
      %v553 = vpack.c.b16 %v451, %v450
      %v554 = vpack.c.b16 %v453, %v452
      %v555 = vpack.c.b16 %v455, %v454
      %v556 = vpack.c.b16 %v457, %v456
      %v557 = vpack.c.b16 %v459, %v458
      %v558 = vpack.c.b16 %v461, %v460
      %v559 = vpack.c.b16 %v463, %v462
      %v560 = vpack.c.b16 %v465, %v464
      %v561 = vpack.c.b16 %v467, %v466
      %v562 = vpack.c.b16 %v469, %v468
      %v563 = vpack.c.b16 %v471, %v470
      %v564 = vpack.c.b16 %v473, %v472
      %v565 = vpack.c.b16 %v475, %v474
      %v566 = vpack.c.b16 %v477, %v476
      %v567 = vpack.c.b16 %v479, %v478
      %v568 = vpack.c.b16 %v481, %v480
      %v569 = vpack.c.b16 %v483, %v482
      %v570 = vpack.c.b16 %v485, %v484
      %v571 = vpack.c.b16 %v487, %v486
      %v572 = vpack.c.b16 %v489, %v488
      %v573 = vpack.c.b16 %v491, %v490
      %v574 = vpack.c.b16 %v493, %v492
      %v575 = vpack.c.b16 %v495, %v494
      %v576 = vpack.c.b16 %v497, %v496
      %v577 = vpack.c.b16 %v499, %v498
      %v578 = vpack.c.b16 %v501, %v500
      %v579 = vpack.c.b16 %v503, %v502
      %v580 = vpack.c.b16 %v505, %v504
      %v581 = vpack.c.b16 %v507, %v506
      %v582 = vpack.c.b16 %v509, %v508
      %v583 = vpack.c.b16 %v511, %v510
      %v584 = vpack.c.b16 %v513, %v512
      %v585 = vpack.c.b16 %v515, %v514
      %v586 = vpack.c.b16 %v517, %v516
      %v587 = vpack.c.b16 %v519, %v518
      %v588 = vpack.c.b16 %v521, %v520
      %v589 = vpack.c.b16 %v523, %v522
      %v590 = vpack.c.b16 %v525, %v524
      %v591 = vpack.c.b16 %v527, %v526
      %v598 = vunpack.c.l.b16 %v266
      %v599 = vunpack.c.l.b16 %v267
      %v600 = vunpack.c.l.b16 %v268
      %v601 = vunpack.c.l.b16 %v269
      %v602 = vunpack.c.l.b16 %v270
      %v603 = vunpack.c.l.b16 %v271
      %v604 = vpack.c.b16 %v599, %v598
      %v605 = vpack.c.b16 %v601, %v600
      %v606 = vpack.c.b16 %v603, %v602
      %vm610 = vcmask 392192
      %v612 = vsel %vm610, %v528, 0
      %v615 = vsel %vm610, %v529, 0
      %v618 = vsel %vm610, %v530, 0
      %v621 = vsel %vm610, %v531, 0
      %v624 = vsel %vm610, %v532, 0
      %v627 = vsel %vm610, %v533, 0
      %v630 = vsel %vm610, %v534, 0
      %v633 = vsel %vm610, %v535, 0
      %v636 = vsel %vm610, %v536, 0
      %v639 = vsel %vm610, %v537, 0
      %v642 = vsel %vm610, %v538, 0
      %v645 = vsel %vm610, %v539, 0
      %v648 = vsel %vm610, %v540, 0
      %v651 = vsel %vm610, %v541, 0
      %v654 = vsel %vm610, %v542, 0
      %v657 = vsel %vm610, %v543, 0
      %v660 = vsel %vm610, %v544, 0
      %v663 = vsel %vm610, %v545, 0
      %v666 = vsel %vm610, %v546, 0
      %v669 = vsel %vm610, %v547, 0
      %v672 = vsel %vm610, %v548, 0
      %v675 = vsel %vm610, %v549, 0
      %v678 = vsel %vm610, %v550, 0
      %v681 = vsel %vm610, %v551, 0
      %v684 = vsel %vm610, %v552, 0
      %v687 = vsel %vm610, %v553, 0
      %v690 = vsel %vm610, %v554, 0
      %v693 = vsel %vm610, %v555, 0
      %v696 = vsel %vm610, %v556, 0
      %v699 = vsel %vm610, %v557, 0
      %v702 = vsel %vm610, %v558, 0
      %v705 = vsel %vm610, %v559, 0
      %v708 = vsel %vm610, %v560, 0
      %v711 = vsel %vm610, %v561, 0
      %v714 = vsel %vm610, %v562, 0
      %v717 = vsel %vm610, %v563, 0
      %v720 = vsel %vm610, %v564, 0
      %v723 = vsel %vm610, %v565, 0
      %v726 = vsel %vm610, %v566, 0
      %v729 = vsel %vm610, %v567, 0
      %v732 = vsel %vm610, %v568, 0
      %v735 = vsel %vm610, %v569, 0
      %v738 = vsel %vm610, %v570, 0
      %v741 = vsel %vm610, %v571, 0
      %v744 = vsel %vm610, %v572, 0
      %v747 = vsel %vm610, %v573, 0
      %v750 = vsel %vm610, %v574, 0
      %v753 = vsel %vm610, %v575, 0
      %v756 = vsel %vm610, %v576, 0
      %v759 = vsel %vm610, %v577, 0
      %v762 = vsel %vm610, %v578, 0
      %v765 = vsel %vm610, %v579, 0
      %v768 = vsel %vm610, %v580, 0
      %v771 = vsel %vm610, %v581, 0
      %v774 = vsel %vm610, %v582, 0
      %v777 = vsel %vm610, %v583, 0
      %v780 = vsel %vm610, %v584, 0
      %v783 = vsel %vm610, %v585, 0
      %v786 = vsel %vm610, %v586, 0
      %v789 = vsel %vm610, %v587, 0
      %v792 = vsel %vm610, %v588, 0
      %v795 = vsel %vm610, %v589, 0
      %v798 = vsel %vm610, %v590, 0
      %v801 = vsel %vm610, %v591, 0
      %803 = vmatprep.subr.bf16.mxu0 0
      %804 = vmatpush1.bf16.msra.mxu0 %v604
      %805 = vmatprep.subr.bf16.mxu0 0
      %806 = vmatpush1.bf16.msra.mxu0 %v605
      %807 = vmatprep.subr.bf16.mxu0 0
      %808 = vmatpush1.bf16.msra.mxu0 %v606
      %809 = vmatprep.subr.bf16.mxu0 0
      %810 = vmatpush1.bf16.msra.mxu0 0
      %811 = vmatprep.subr.bf16.mxu0 0
      %812 = vmatpush1.bf16.msra.mxu0 0
      %813 = vmatprep.subr.bf16.mxu0 0
      %814 = vmatpush1.bf16.msra.mxu0 0
      %815 = vmatprep.subr.bf16.mxu0 0
      %816 = vmatpush1.bf16.msra.mxu0 0
      %817 = vmatprep.subr.bf16.mxu0 0
      %818 = vmatpush1.bf16.msra.mxu0 0
      %819 = vmatprep.subr.bf16.mxu0 0
      %820 = vmatpush1.bf16.msra.mxu0 0
      %821 = vmatprep.subr.bf16.mxu0 0
      %822 = vmatpush1.bf16.msra.mxu0 0
      %823 = vmatprep.subr.bf16.mxu0 0
      %824 = vmatpush1.bf16.msra.mxu0 0
      %825 = vmatprep.subr.bf16.mxu0 0
      %826 = vmatpush1.bf16.msra.mxu0 0
      %827 = vmatprep.subr.bf16.mxu0 0
      %828 = vmatpush1.bf16.msra.mxu0 0
      %829 = vmatprep.subr.bf16.mxu0 0
      %830 = vmatpush1.bf16.msra.mxu0 0
      %831 = vmatprep.subr.bf16.mxu0 0
      %832 = vmatpush1.bf16.msra.mxu0 0
      %833 = vmatprep.subr.bf16.mxu0 0
      %834 = vmatpush1.bf16.msra.mxu0 0
      %835 = vmatprep.mubr.bf16.mxu0 0
      %836 = vmatmul.mubr.bf16.gmra.mrb[0].mxu0 %v612
      %v837 = vpop.f32.mrb[0].mxu0
      %v838 = vadd.f32 0.0, %v837
      %v839 = vpop.f32.mrb[0].mxu0
      %v840 = vpop.f32.mrb[0].mxu0
      %v841 = vadd.f32 0.0, %v840
      %v842 = vpop.f32.mrb[0].mxu0
      %843 = vmatprep.mubr.bf16.mxu0 0
      %844 = vmatmul.mubr.bf16.gmra.mrb[0].mxu0 %v615
      %v845 = vpop.f32.mrb[0].mxu0
      %v846 = vadd.f32 0.0, %v845
      %v847 = vpop.f32.mrb[0].mxu0
      %v848 = vpop.f32.mrb[0].mxu0
      %v849 = vadd.f32 0.0, %v848
      %v850 = vpop.f32.mrb[0].mxu0
      %851 = vmatprep.mubr.bf16.mxu0 0
      %852 = vmatmul.mubr.bf16.gmra.mrb[0].mxu0 %v618
      %v853 = vpop.f32.mrb[0].mxu0
      %v854 = vadd.f32 0.0, %v853
      %v855 = vpop.f32.mrb[0].mxu0
      %v856 = vpop.f32.mrb[0].mxu0
      %v857 = vadd.f32 0.0, %v856
      %v858 = vpop.f32.mrb[0].mxu0
      %859 = vmatprep.mubr.bf16.mxu0 0
      %860 = vmatmul.mubr.bf16.gmra.mrb[0].mxu0 %v621
      %v861 = vpop.f32.mrb[0].mxu0
      %v862 = vadd.f32 0.0, %v861
      %v863 = vpop.f32.mrb[0].mxu0
      %v864 = vpop.f32.mrb[0].mxu0
      %v865 = vadd.f32 0.0, %v864
      %v866 = vpop.f32.mrb[0].mxu0
      %867 = vmatprep.mubr.bf16.mxu0 0
      %868 = vmatmul.mubr.bf16.gmra.mrb[0].mxu0 %v624
      %v869 = vpop.f32.mrb[0].mxu0
      %v870 = vadd.f32 0.0, %v869
      %v871 = vpop.f32.mrb[0].mxu0
      %v872 = vpop.f32.mrb[0].mxu0
      %v873 = vadd.f32 0.0, %v872
      %v874 = vpop.f32.mrb[0].mxu0
      %875 = vmatprep.mubr.bf16.mxu0 0
      %876 = vmatmul.mubr.bf16.gmra.mrb[0].mxu0 %v627
      %v877 = vpop.f32.mrb[0].mxu0
      %v878 = vadd.f32 0.0, %v877
      %v879 = vpop.f32.mrb[0].mxu0
      %v880 = vpop.f32.mrb[0].mxu0
      %v881 = vadd.f32 0.0, %v880
      %v882 = vpop.f32.mrb[0].mxu0
      %883 = vmatprep.mubr.bf16.mxu0 0
      %884 = vmatmul.mubr.bf16.gmra.mrb[0].mxu0 %v630
      %v885 = vpop.f32.mrb[0].mxu0
      %v886 = vadd.f32 0.0, %v885
      %v887 = vpop.f32.mrb[0].mxu0
      %v888 = vpop.f32.mrb[0].mxu0
      %v889 = vadd.f32 0.0, %v888
      %v890 = vpop.f32.mrb[0].mxu0
      %891 = vmatprep.mubr.bf16.mxu0 0
      %892 = vmatmul.mubr.bf16.gmra.mrb[0].mxu0 %v633
      %v893 = vpop.f32.mrb[0].mxu0
      %v894 = vadd.f32 0.0, %v893
      %v895 = vpop.f32.mrb[0].mxu0
      %v896 = vpop.f32.mrb[0].mxu0
      %v897 = vadd.f32 0.0, %v896
      %v898 = vpop.f32.mrb[0].mxu0
      %899 = vmatprep.mubr.bf16.mxu0 0
      %900 = vmatmul.mubr.bf16.gmra.mrb[0].mxu0 %v636
      %v901 = vpop.f32.mrb[0].mxu0
      %v902 = vadd.f32 0.0, %v901
      %v903 = vpop.f32.mrb[0].mxu0
      %v904 = vpop.f32.mrb[0].mxu0
      %v905 = vadd.f32 0.0, %v904
      %v906 = vpop.f32.mrb[0].mxu0
      %907 = vmatprep.mubr.bf16.mxu0 0
      %908 = vmatmul.mubr.bf16.gmra.mrb[0].mxu0 %v639
      %v909 = vpop.f32.mrb[0].mxu0
      %v910 = vadd.f32 0.0, %v909
      %v911 = vpop.f32.mrb[0].mxu0
      %v912 = vpop.f32.mrb[0].mxu0
      %v913 = vadd.f32 0.0, %v912
      %v914 = vpop.f32.mrb[0].mxu0
      %915 = vmatprep.mubr.bf16.mxu0 0
      %916 = vmatmul.mubr.bf16.gmra.mrb[0].mxu0 %v642
      %v917 = vpop.f32.mrb[0].mxu0
      %v918 = vadd.f32 0.0, %v917
      %v919 = vpop.f32.mrb[0].mxu0
      %v920 = vpop.f32.mrb[0].mxu0
      %v921 = vadd.f32 0.0, %v920
      %v922 = vpop.f32.mrb[0].mxu0
      %923 = vmatprep.mubr.bf16.mxu0 0
      %924 = vmatmul.mubr.bf16.gmra.mrb[0].mxu0 %v645
      %v925 = vpop.f32.mrb[0].mxu0
      %v926 = vadd.f32 0.0, %v925
      %v927 = vpop.f32.mrb[0].mxu0
      %v928 = vpop.f32.mrb[0].mxu0
      %v929 = vadd.f32 0.0, %v928
      %v930 = vpop.f32.mrb[0].mxu0
      %931 = vmatprep.mubr.bf16.mxu0 0
      %932 = vmatmul.mubr.bf16.gmra.mrb[0].mxu0 %v648
      %v933 = vpop.f32.mrb[0].mxu0
      %v934 = vadd.f32 0.0, %v933
      %v935 = vpop.f32.mrb[0].mxu0
      %v936 = vpop.f32.mrb[0].mxu0
      %v937 = vadd.f32 0.0, %v936
      %v938 = vpop.f32.mrb[0].mxu0
      %939 = vmatprep.mubr.bf16.mxu0 0
      %940 = vmatmul.mubr.bf16.gmra.mrb[0].mxu0 %v651
      %v941 = vpop.f32.mrb[0].mxu0
      %v942 = vadd.f32 0.0, %v941
      %v943 = vpop.f32.mrb[0].mxu0
      %v944 = vpop.f32.mrb[0].mxu0
      %v945 = vadd.f32 0.0, %v944
      %v946 = vpop.f32.mrb[0].mxu0
      %947 = vmatprep.mubr.bf16.mxu0 0
      %948 = vmatmul.mubr.bf16.gmra.mrb[0].mxu0 %v654
      %v949 = vpop.f32.mrb[0].mxu0
      %v950 = vadd.f32 0.0, %v949
      %v951 = vpop.f32.mrb[0].mxu0
      %v952 = vpop.f32.mrb[0].mxu0
      %v953 = vadd.f32 0.0, %v952
      %v954 = vpop.f32.mrb[0].mxu0
      %955 = vmatprep.mubr.bf16.mxu0 0
      %956 = vmatmul.mubr.bf16.gmra.mrb[0].mxu0 %v657
      %v957 = vpop.f32.mrb[0].mxu0
      %v958 = vadd.f32 0.0, %v957
      %v959 = vpop.f32.mrb[0].mxu0
      %v960 = vpop.f32.mrb[0].mxu0
      %v961 = vadd.f32 0.0, %v960
      %v962 = vpop.f32.mrb[0].mxu0
      %963 = vmatprep.mubr.bf16.mxu0 0
      %964 = vmatmul.mubr.bf16.gmra.mrb[0].mxu0 %v660
      %v965 = vpop.f32.mrb[0].mxu0
      %v966 = vadd.f32 0.0, %v965
      %v967 = vpop.f32.mrb[0].mxu0
      %v968 = vpop.f32.mrb[0].mxu0
      %v969 = vadd.f32 0.0, %v968
      %v970 = vpop.f32.mrb[0].mxu0
      %971 = vmatprep.mubr.bf16.mxu0 0
      %972 = vmatmul.mubr.bf16.gmra.mrb[0].mxu0 %v663
      %v973 = vpop.f32.mrb[0].mxu0
      %v974 = vadd.f32 0.0, %v973
      %v975 = vpop.f32.mrb[0].mxu0
      %v976 = vpop.f32.mrb[0].mxu0
      %v977 = vadd.f32 0.0, %v976
      %v978 = vpop.f32.mrb[0].mxu0
      %979 = vmatprep.mubr.bf16.mxu0 0
      %980 = vmatmul.mubr.bf16.gmra.mrb[0].mxu0 %v666
      %v981 = vpop.f32.mrb[0].mxu0
      %v982 = vadd.f32 0.0, %v981
      %v983 = vpop.f32.mrb[0].mxu0
      %v984 = vpop.f32.mrb[0].mxu0
      %v985 = vadd.f32 0.0, %v984
      %v986 = vpop.f32.mrb[0].mxu0
      %987 = vmatprep.mubr.bf16.mxu0 0
      %988 = vmatmul.mubr.bf16.gmra.mrb[0].mxu0 %v669
      %v989 = vpop.f32.mrb[0].mxu0
      %v990 = vadd.f32 0.0, %v989
      %v991 = vpop.f32.mrb[0].mxu0
      %v992 = vpop.f32.mrb[0].mxu0
      %v993 = vadd.f32 0.0, %v992
      %v994 = vpop.f32.mrb[0].mxu0
      %995 = vmatprep.mubr.bf16.mxu0 0
      %996 = vmatmul.mubr.bf16.gmra.mrb[0].mxu0 %v672
      %v997 = vpop.f32.mrb[0].mxu0
      %v998 = vadd.f32 0.0, %v997
      %v999 = vpop.f32.mrb[0].mxu0
      %v1000 = vpop.f32.mrb[0].mxu0
      %v1001 = vadd.f32 0.0, %v1000
      %v1002 = vpop.f32.mrb[0].mxu0
      %1003 = vmatprep.mubr.bf16.mxu0 0
      %1004 = vmatmul.mubr.bf16.gmra.mrb[0].mxu0 %v675
      %v1005 = vpop.f32.mrb[0].mxu0
      %v1006 = vadd.f32 0.0, %v1005
      %v1007 = vpop.f32.mrb[0].mxu0
      %v1008 = vpop.f32.mrb[0].mxu0
      %v1009 = vadd.f32 0.0, %v1008
      %v1010 = vpop.f32.mrb[0].mxu0
      %1011 = vmatprep.mubr.bf16.mxu0 0
      %1012 = vmatmul.mubr.bf16.gmra.mrb[0].mxu0 %v678
      %v1013 = vpop.f32.mrb[0].mxu0
      %v1014 = vadd.f32 0.0, %v1013
      %v1015 = vpop.f32.mrb[0].mxu0
      %v1016 = vpop.f32.mrb[0].mxu0
      %v1017 = vadd.f32 0.0, %v1016
      %v1018 = vpop.f32.mrb[0].mxu0
      %1019 = vmatprep.mubr.bf16.mxu0 0
      %1020 = vmatmul.mubr.bf16.gmra.mrb[0].mxu0 %v681
      %v1021 = vpop.f32.mrb[0].mxu0
      %v1022 = vadd.f32 0.0, %v1021
      %v1023 = vpop.f32.mrb[0].mxu0
      %v1024 = vpop.f32.mrb[0].mxu0
      %v1025 = vadd.f32 0.0, %v1024
      %v1026 = vpop.f32.mrb[0].mxu0
      %1027 = vmatprep.mubr.bf16.mxu0 0
      %1028 = vmatmul.mubr.bf16.gmra.mrb[0].mxu0 %v684
      %v1029 = vpop.f32.mrb[0].mxu0
      %v1030 = vadd.f32 0.0, %v1029
      %v1031 = vpop.f32.mrb[0].mxu0
      %v1032 = vpop.f32.mrb[0].mxu0
      %v1033 = vadd.f32 0.0, %v1032
      %v1034 = vpop.f32.mrb[0].mxu0
      %1035 = vmatprep.mubr.bf16.mxu0 0
      %1036 = vmatmul.mubr.bf16.gmra.mrb[0].mxu0 %v687
      %v1037 = vpop.f32.mrb[0].mxu0
      %v1038 = vadd.f32 0.0, %v1037
      %v1039 = vpop.f32.mrb[0].mxu0
      %v1040 = vpop.f32.mrb[0].mxu0
      %v1041 = vadd.f32 0.0, %v1040
      %v1042 = vpop.f32.mrb[0].mxu0
      %1043 = vmatprep.mubr.bf16.mxu0 0
      %1044 = vmatmul.mubr.bf16.gmra.mrb[0].mxu0 %v690
      %v1045 = vpop.f32.mrb[0].mxu0
      %v1046 = vadd.f32 0.0, %v1045
      %v1047 = vpop.f32.mrb[0].mxu0
      %v1048 = vpop.f32.mrb[0].mxu0
      %v1049 = vadd.f32 0.0, %v1048
      %v1050 = vpop.f32.mrb[0].mxu0
      %1051 = vmatprep.mubr.bf16.mxu0 0
      %1052 = vmatmul.mubr.bf16.gmra.mrb[0].mxu0 %v693
      %v1053 = vpop.f32.mrb[0].mxu0
      %v1054 = vadd.f32 0.0, %v1053
      %v1055 = vpop.f32.mrb[0].mxu0
      %v1056 = vpop.f32.mrb[0].mxu0
      %v1057 = vadd.f32 0.0, %v1056
      %v1058 = vpop.f32.mrb[0].mxu0
      %1059 = vmatprep.mubr.bf16.mxu0 0
      %1060 = vmatmul.mubr.bf16.gmra.mrb[0].mxu0 %v696
      %v1061 = vpop.f32.mrb[0].mxu0
      %v1062 = vadd.f32 0.0, %v1061
      %v1063 = vpop.f32.mrb[0].mxu0
      %v1064 = vpop.f32.mrb[0].mxu0
      %v1065 = vadd.f32 0.0, %v1064
      %v1066 = vpop.f32.mrb[0].mxu0
      %1067 = vmatprep.mubr.bf16.mxu0 0
      %1068 = vmatmul.mubr.bf16.gmra.mrb[0].mxu0 %v699
      %v1069 = vpop.f32.mrb[0].mxu0
      %v1070 = vadd.f32 0.0, %v1069
      %v1071 = vpop.f32.mrb[0].mxu0
      %v1072 = vpop.f32.mrb[0].mxu0
      %v1073 = vadd.f32 0.0, %v1072
      %v1074 = vpop.f32.mrb[0].mxu0
      %1075 = vmatprep.mubr.bf16.mxu0 0
      %1076 = vmatmul.mubr.bf16.gmra.mrb[0].mxu0 %v702
      %v1077 = vpop.f32.mrb[0].mxu0
      %v1078 = vadd.f32 0.0, %v1077
      %v1079 = vpop.f32.mrb[0].mxu0
      %v1080 = vpop.f32.mrb[0].mxu0
      %v1081 = vadd.f32 0.0, %v1080
      %v1082 = vpop.f32.mrb[0].mxu0
      %1083 = vmatprep.mubr.bf16.mxu0 0
      %1084 = vmatmul.mubr.bf16.gmra.mrb[0].mxu0 %v705
      %v1085 = vpop.f32.mrb[0].mxu0
      %v1086 = vadd.f32 0.0, %v1085
      %v1087 = vpop.f32.mrb[0].mxu0
      %v1088 = vpop.f32.mrb[0].mxu0
      %v1089 = vadd.f32 0.0, %v1088
      %v1090 = vpop.f32.mrb[0].mxu0
      %1091 = vmatprep.mubr.bf16.mxu0 0
      %1092 = vmatmul.mubr.bf16.gmra.mrb[0].mxu0 %v708
      %v1093 = vpop.f32.mrb[0].mxu0
      %v1094 = vadd.f32 0.0, %v1093
      %v1095 = vpop.f32.mrb[0].mxu0
      %v1096 = vpop.f32.mrb[0].mxu0
      %v1097 = vadd.f32 0.0, %v1096
      %v1098 = vpop.f32.mrb[0].mxu0
      %1099 = vmatprep.mubr.bf16.mxu0 0
      %1100 = vmatmul.mubr.bf16.gmra.mrb[0].mxu0 %v711
      %v1101 = vpop.f32.mrb[0].mxu0
      %v1102 = vadd.f32 0.0, %v1101
      %v1103 = vpop.f32.mrb[0].mxu0
      %v1104 = vpop.f32.mrb[0].mxu0
      %v1105 = vadd.f32 0.0, %v1104
      %v1106 = vpop.f32.mrb[0].mxu0
      %1107 = vmatprep.mubr.bf16.mxu0 0
      %1108 = vmatmul.mubr.bf16.gmra.mrb[0].mxu0 %v714
      %v1109 = vpop.f32.mrb[0].mxu0
      %v1110 = vadd.f32 0.0, %v1109
      %v1111 = vpop.f32.mrb[0].mxu0
      %v1112 = vpop.f32.mrb[0].mxu0
      %v1113 = vadd.f32 0.0, %v1112
      %v1114 = vpop.f32.mrb[0].mxu0
      %1115 = vmatprep.mubr.bf16.mxu0 0
      %1116 = vmatmul.mubr.bf16.gmra.mrb[0].mxu0 %v717
      %v1117 = vpop.f32.mrb[0].mxu0
      %v1118 = vadd.f32 0.0, %v1117
      %v1119 = vpop.f32.mrb[0].mxu0
      %v1120 = vpop.f32.mrb[0].mxu0
      %v1121 = vadd.f32 0.0, %v1120
      %v1122 = vpop.f32.mrb[0].mxu0
      %1123 = vmatprep.mubr.bf16.mxu0 0
      %1124 = vmatmul.mubr.bf16.gmra.mrb[0].mxu0 %v720
      %v1125 = vpop.f32.mrb[0].mxu0
      %v1126 = vadd.f32 0.0, %v1125
      %v1127 = vpop.f32.mrb[0].mxu0
      %v1128 = vpop.f32.mrb[0].mxu0
      %v1129 = vadd.f32 0.0, %v1128
      %v1130 = vpop.f32.mrb[0].mxu0
      %1131 = vmatprep.mubr.bf16.mxu0 0
      %1132 = vmatmul.mubr.bf16.gmra.mrb[0].mxu0 %v723
      %v1133 = vpop.f32.mrb[0].mxu0
      %v1134 = vadd.f32 0.0, %v1133
      %v1135 = vpop.f32.mrb[0].mxu0
      %v1136 = vpop.f32.mrb[0].mxu0
      %v1137 = vadd.f32 0.0, %v1136
      %v1138 = vpop.f32.mrb[0].mxu0
      %1139 = vmatprep.mubr.bf16.mxu0 0
      %1140 = vmatmul.mubr.bf16.gmra.mrb[0].mxu0 %v726
      %v1141 = vpop.f32.mrb[0].mxu0
      %v1142 = vadd.f32 0.0, %v1141
      %v1143 = vpop.f32.mrb[0].mxu0
      %v1144 = vpop.f32.mrb[0].mxu0
      %v1145 = vadd.f32 0.0, %v1144
      %v1146 = vpop.f32.mrb[0].mxu0
      %1147 = vmatprep.mubr.bf16.mxu0 0
      %1148 = vmatmul.mubr.bf16.gmra.mrb[0].mxu0 %v729
      %v1149 = vpop.f32.mrb[0].mxu0
      %v1150 = vadd.f32 0.0, %v1149
      %v1151 = vpop.f32.mrb[0].mxu0
      %v1152 = vpop.f32.mrb[0].mxu0
      %v1153 = vadd.f32 0.0, %v1152
      %v1154 = vpop.f32.mrb[0].mxu0
      %1155 = vmatprep.mubr.bf16.mxu0 0
      %1156 = vmatmul.mubr.bf16.gmra.mrb[0].mxu0 %v732
      %v1157 = vpop.f32.mrb[0].mxu0
      %v1158 = vadd.f32 0.0, %v1157
      %v1159 = vpop.f32.mrb[0].mxu0
      %v1160 = vpop.f32.mrb[0].mxu0
      %v1161 = vadd.f32 0.0, %v1160
      %v1162 = vpop.f32.mrb[0].mxu0
      %1163 = vmatprep.mubr.bf16.mxu0 0
      %1164 = vmatmul.mubr.bf16.gmra.mrb[0].mxu0 %v735
      %v1165 = vpop.f32.mrb[0].mxu0
      %v1166 = vadd.f32 0.0, %v1165
      %v1167 = vpop.f32.mrb[0].mxu0
      %v1168 = vpop.f32.mrb[0].mxu0
      %v1169 = vadd.f32 0.0, %v1168
      %v1170 = vpop.f32.mrb[0].mxu0
      %1171 = vmatprep.mubr.bf16.mxu0 0
      %1172 = vmatmul.mubr.bf16.gmra.mrb[0].mxu0 %v738
      %v1173 = vpop.f32.mrb[0].mxu0
      %v1174 = vadd.f32 0.0, %v1173
      %v1175 = vpop.f32.mrb[0].mxu0
      %v1176 = vpop.f32.mrb[0].mxu0
      %v1177 = vadd.f32 0.0, %v1176
      %v1178 = vpop.f32.mrb[0].mxu0
      %1179 = vmatprep.mubr.bf16.mxu0 0
      %1180 = vmatmul.mubr.bf16.gmra.mrb[0].mxu0 %v741
      %v1181 = vpop.f32.mrb[0].mxu0
      %v1182 = vadd.f32 0.0, %v1181
      %v1183 = vpop.f32.mrb[0].mxu0
      %v1184 = vpop.f32.mrb[0].mxu0
      %v1185 = vadd.f32 0.0, %v1184
      %v1186 = vpop.f32.mrb[0].mxu0
      %1187 = vmatprep.mubr.bf16.mxu0 0
      %1188 = vmatmul.mubr.bf16.gmra.mrb[0].mxu0 %v744
      %v1189 = vpop.f32.mrb[0].mxu0
      %v1190 = vadd.f32 0.0, %v1189
      %v1191 = vpop.f32.mrb[0].mxu0
      %v1192 = vpop.f32.mrb[0].mxu0
      %v1193 = vadd.f32 0.0, %v1192
      %v1194 = vpop.f32.mrb[0].mxu0
      %1195 = vmatprep.mubr.bf16.mxu0 0
      %1196 = vmatmul.mubr.bf16.gmra.mrb[0].mxu0 %v747
      %v1197 = vpop.f32.mrb[0].mxu0
      %v1198 = vadd.f32 0.0, %v1197
      %v1199 = vpop.f32.mrb[0].mxu0
      %v1200 = vpop.f32.mrb[0].mxu0
      %v1201 = vadd.f32 0.0, %v1200
      %v1202 = vpop.f32.mrb[0].mxu0
      %1203 = vmatprep.mubr.bf16.mxu0 0
      %1204 = vmatmul.mubr.bf16.gmra.mrb[0].mxu0 %v750
      %v1205 = vpop.f32.mrb[0].mxu0
      %v1206 = vadd.f32 0.0, %v1205
      %v1207 = vpop.f32.mrb[0].mxu0
      %v1208 = vpop.f32.mrb[0].mxu0
      %v1209 = vadd.f32 0.0, %v1208
      %v1210 = vpop.f32.mrb[0].mxu0
      %1211 = vmatprep.mubr.bf16.mxu0 0
      %1212 = vmatmul.mubr.bf16.gmra.mrb[0].mxu0 %v753
      %v1213 = vpop.f32.mrb[0].mxu0
      %v1214 = vadd.f32 0.0, %v1213
      %v1215 = vpop.f32.mrb[0].mxu0
      %v1216 = vpop.f32.mrb[0].mxu0
      %v1217 = vadd.f32 0.0, %v1216
      %v1218 = vpop.f32.mrb[0].mxu0
      %1219 = vmatprep.mubr.bf16.mxu0 0
      %1220 = vmatmul.mubr.bf16.gmra.mrb[0].mxu0 %v756
      %v1221 = vpop.f32.mrb[0].mxu0
      %v1222 = vadd.f32 0.0, %v1221
      %v1223 = vpop.f32.mrb[0].mxu0
      %v1224 = vpop.f32.mrb[0].mxu0
      %v1225 = vadd.f32 0.0, %v1224
      %v1226 = vpop.f32.mrb[0].mxu0
      %1227 = vmatprep.mubr.bf16.mxu0 0
      %1228 = vmatmul.mubr.bf16.gmra.mrb[0].mxu0 %v759
      %v1229 = vpop.f32.mrb[0].mxu0
      %v1230 = vadd.f32 0.0, %v1229
      %v1231 = vpop.f32.mrb[0].mxu0
      %v1232 = vpop.f32.mrb[0].mxu0
      %v1233 = vadd.f32 0.0, %v1232
      %v1234 = vpop.f32.mrb[0].mxu0
      %1235 = vmatprep.mubr.bf16.mxu0 0
      %1236 = vmatmul.mubr.bf16.gmra.mrb[0].mxu0 %v762
      %v1237 = vpop.f32.mrb[0].mxu0
      %v1238 = vadd.f32 0.0, %v1237
      %v1239 = vpop.f32.mrb[0].mxu0
      %v1240 = vpop.f32.mrb[0].mxu0
      %v1241 = vadd.f32 0.0, %v1240
      %v1242 = vpop.f32.mrb[0].mxu0
      %1243 = vmatprep.mubr.bf16.mxu0 0
      %1244 = vmatmul.mubr.bf16.gmra.mrb[0].mxu0 %v765
      %v1245 = vpop.f32.mrb[0].mxu0
      %v1246 = vadd.f32 0.0, %v1245
      %v1247 = vpop.f32.mrb[0].mxu0
      %v1248 = vpop.f32.mrb[0].mxu0
      %v1249 = vadd.f32 0.0, %v1248
      %v1250 = vpop.f32.mrb[0].mxu0
      %1251 = vmatprep.mubr.bf16.mxu0 0
      %1252 = vmatmul.mubr.bf16.gmra.mrb[0].mxu0 %v768
      %v1253 = vpop.f32.mrb[0].mxu0
      %v1254 = vadd.f32 0.0, %v1253
      %v1255 = vpop.f32.mrb[0].mxu0
      %v1256 = vpop.f32.mrb[0].mxu0
      %v1257 = vadd.f32 0.0, %v1256
      %v1258 = vpop.f32.mrb[0].mxu0
      %1259 = vmatprep.mubr.bf16.mxu0 0
      %1260 = vmatmul.mubr.bf16.gmra.mrb[0].mxu0 %v771
      %v1261 = vpop.f32.mrb[0].mxu0
      %v1262 = vadd.f32 0.0, %v1261
      %v1263 = vpop.f32.mrb[0].mxu0
      %v1264 = vpop.f32.mrb[0].mxu0
      %v1265 = vadd.f32 0.0, %v1264
      %v1266 = vpop.f32.mrb[0].mxu0
      %1267 = vmatprep.mubr.bf16.mxu0 0
      %1268 = vmatmul.mubr.bf16.gmra.mrb[0].mxu0 %v774
      %v1269 = vpop.f32.mrb[0].mxu0
      %v1270 = vadd.f32 0.0, %v1269
      %v1271 = vpop.f32.mrb[0].mxu0
      %v1272 = vpop.f32.mrb[0].mxu0
      %v1273 = vadd.f32 0.0, %v1272
      %v1274 = vpop.f32.mrb[0].mxu0
      %1275 = vmatprep.mubr.bf16.mxu0 0
      %1276 = vmatmul.mubr.bf16.gmra.mrb[0].mxu0 %v777
      %v1277 = vpop.f32.mrb[0].mxu0
      %v1278 = vadd.f32 0.0, %v1277
      %v1279 = vpop.f32.mrb[0].mxu0
      %v1280 = vpop.f32.mrb[0].mxu0
      %v1281 = vadd.f32 0.0, %v1280
      %v1282 = vpop.f32.mrb[0].mxu0
      %1283 = vmatprep.mubr.bf16.mxu0 0
      %1284 = vmatmul.mubr.bf16.gmra.mrb[0].mxu0 %v780
      %v1285 = vpop.f32.mrb[0].mxu0
      %v1286 = vadd.f32 0.0, %v1285
      %v1287 = vpop.f32.mrb[0].mxu0
      %v1288 = vpop.f32.mrb[0].mxu0
      %v1289 = vadd.f32 0.0, %v1288
      %v1290 = vpop.f32.mrb[0].mxu0
      %1291 = vmatprep.mubr.bf16.mxu0 0
      %1292 = vmatmul.mubr.bf16.gmra.mrb[0].mxu0 %v783
      %v1293 = vpop.f32.mrb[0].mxu0
      %v1294 = vadd.f32 0.0, %v1293
      %v1295 = vpop.f32.mrb[0].mxu0
      %v1296 = vpop.f32.mrb[0].mxu0
      %v1297 = vadd.f32 0.0, %v1296
      %v1298 = vpop.f32.mrb[0].mxu0
      %1299 = vmatprep.mubr.bf16.mxu0 0
      %1300 = vmatmul.mubr.bf16.gmra.mrb[0].mxu0 %v786
      %v1301 = vpop.f32.mrb[0].mxu0
      %v1302 = vadd.f32 0.0, %v1301
      %v1303 = vpop.f32.mrb[0].mxu0
      %v1304 = vpop.f32.mrb[0].mxu0
      %v1305 = vadd.f32 0.0, %v1304
      %v1306 = vpop.f32.mrb[0].mxu0
      %1307 = vmatprep.mubr.bf16.mxu0 0
      %1308 = vmatmul.mubr.bf16.gmra.mrb[0].mxu0 %v789
      %v1309 = vpop.f32.mrb[0].mxu0
      %v1310 = vadd.f32 0.0, %v1309
      %v1311 = vpop.f32.mrb[0].mxu0
      %v1312 = vpop.f32.mrb[0].mxu0
      %v1313 = vadd.f32 0.0, %v1312
      %v1314 = vpop.f32.mrb[0].mxu0
      %1315 = vmatprep.mubr.bf16.mxu0 0
      %1316 = vmatmul.mubr.bf16.gmra.mrb[0].mxu0 %v792
      %v1317 = vpop.f32.mrb[0].mxu0
      %v1318 = vadd.f32 0.0, %v1317
      %v1319 = vpop.f32.mrb[0].mxu0
      %v1320 = vpop.f32.mrb[0].mxu0
      %v1321 = vadd.f32 0.0, %v1320
      %v1322 = vpop.f32.mrb[0].mxu0
      %1323 = vmatprep.mubr.bf16.mxu0 0
      %1324 = vmatmul.mubr.bf16.gmra.mrb[0].mxu0 %v795
      %v1325 = vpop.f32.mrb[0].mxu0
      %v1326 = vadd.f32 0.0, %v1325
      %v1327 = vpop.f32.mrb[0].mxu0
      %v1328 = vpop.f32.mrb[0].mxu0
      %v1329 = vadd.f32 0.0, %v1328
      %v1330 = vpop.f32.mrb[0].mxu0
      %1331 = vmatprep.mubr.bf16.mxu0 0
      %1332 = vmatmul.mubr.bf16.gmra.mrb[0].mxu0 %v798
      %v1333 = vpop.f32.mrb[0].mxu0
      %v1334 = vadd.f32 0.0, %v1333
      %v1335 = vpop.f32.mrb[0].mxu0
      %v1336 = vpop.f32.mrb[0].mxu0
      %v1337 = vadd.f32 0.0, %v1336
      %v1338 = vpop.f32.mrb[0].mxu0
      %1339 = vmatprep.mubr.bf16.mxu0 0
      %1340 = vmatmul.mubr.bf16.gmra.mrb[0].mxu0 %v801
      %v1341 = vpop.f32.mrb[0].mxu0
      %v1342 = vadd.f32 0.0, %v1341
      %v1343 = vpop.f32.mrb[0].mxu0
      %v1344 = vpop.f32.mrb[0].mxu0
      %v1345 = vadd.f32 0.0, %v1344
      %v1346 = vpop.f32.mrb[0].mxu0
      %1347 = vdwg.mxu0
      %1348 = vrot.lane.b32.xlu0 %v838, 64
      %v1349 = vpop.permute.xlu0 %1348
      %1350 = vrot.lane.b32.xlu0 %v841, 64
      %v1351 = vpop.permute.xlu0 %1350
      %1352 = vrot.lane.b32.xlu0 %v846, 64
      %v1353 = vpop.permute.xlu0 %1352
      %1354 = vrot.lane.b32.xlu0 %v849, 64
      %v1355 = vpop.permute.xlu0 %1354
      %1356 = vrot.lane.b32.xlu0 %v854, 64
      %v1357 = vpop.permute.xlu0 %1356
      %1358 = vrot.lane.b32.xlu0 %v857, 64
      %v1359 = vpop.permute.xlu0 %1358
      %1360 = vrot.lane.b32.xlu0 %v862, 64
      %v1361 = vpop.permute.xlu0 %1360
      %1362 = vrot.lane.b32.xlu0 %v865, 64
      %v1363 = vpop.permute.xlu0 %1362
      %1364 = vrot.lane.b32.xlu0 %v870, 64
      %v1365 = vpop.permute.xlu0 %1364
      %1366 = vrot.lane.b32.xlu0 %v873, 64
      %v1367 = vpop.permute.xlu0 %1366
      %1368 = vrot.lane.b32.xlu0 %v878, 64
      %v1369 = vpop.permute.xlu0 %1368
      %1370 = vrot.lane.b32.xlu0 %v881, 64
      %v1371 = vpop.permute.xlu0 %1370
      %1372 = vrot.lane.b32.xlu0 %v886, 64
      %v1373 = vpop.permute.xlu0 %1372
      %1374 = vrot.lane.b32.xlu0 %v889, 64
      %v1375 = vpop.permute.xlu0 %1374
      %1376 = vrot.lane.b32.xlu0 %v894, 64
      %v1377 = vpop.permute.xlu0 %1376
      %1378 = vrot.lane.b32.xlu0 %v897, 64
      %v1379 = vpop.permute.xlu0 %1378
      %1380 = vrot.lane.b32.xlu0 %v902, 64
      %v1381 = vpop.permute.xlu0 %1380
      %1382 = vrot.lane.b32.xlu0 %v905, 64
      %v1383 = vpop.permute.xlu0 %1382
      %1384 = vrot.lane.b32.xlu0 %v910, 64
      %v1385 = vpop.permute.xlu0 %1384
      %1386 = vrot.lane.b32.xlu0 %v913, 64
      %v1387 = vpop.permute.xlu0 %1386
      %1388 = vrot.lane.b32.xlu0 %v918, 64
      %v1389 = vpop.permute.xlu0 %1388
      %1390 = vrot.lane.b32.xlu0 %v921, 64
      %v1391 = vpop.permute.xlu0 %1390
      %1392 = vrot.lane.b32.xlu0 %v926, 64
      %v1393 = vpop.permute.xlu0 %1392
      %1394 = vrot.lane.b32.xlu0 %v929, 64
      %v1395 = vpop.permute.xlu0 %1394
      %1396 = vrot.lane.b32.xlu0 %v934, 64
      %v1397 = vpop.permute.xlu0 %1396
      %1398 = vrot.lane.b32.xlu0 %v937, 64
      %v1399 = vpop.permute.xlu0 %1398
      %1400 = vrot.lane.b32.xlu0 %v942, 64
      %v1401 = vpop.permute.xlu0 %1400
      %1402 = vrot.lane.b32.xlu0 %v945, 64
      %v1403 = vpop.permute.xlu0 %1402
      %1404 = vrot.lane.b32.xlu0 %v950, 64
      %v1405 = vpop.permute.xlu0 %1404
      %1406 = vrot.lane.b32.xlu0 %v953, 64
      %v1407 = vpop.permute.xlu0 %1406
      %1408 = vrot.lane.b32.xlu0 %v958, 64
      %v1409 = vpop.permute.xlu0 %1408
      %1410 = vrot.lane.b32.xlu0 %v961, 64
      %v1411 = vpop.permute.xlu0 %1410
      %1412 = vrot.lane.b32.xlu0 %v966, 64
      %v1413 = vpop.permute.xlu0 %1412
      %1414 = vrot.lane.b32.xlu0 %v969, 64
      %v1415 = vpop.permute.xlu0 %1414
      %1416 = vrot.lane.b32.xlu0 %v974, 64
      %v1417 = vpop.permute.xlu0 %1416
      %1418 = vrot.lane.b32.xlu0 %v977, 64
      %v1419 = vpop.permute.xlu0 %1418
      %1420 = vrot.lane.b32.xlu0 %v982, 64
      %v1421 = vpop.permute.xlu0 %1420
      %1422 = vrot.lane.b32.xlu0 %v985, 64
      %v1423 = vpop.permute.xlu0 %1422
      %1424 = vrot.lane.b32.xlu0 %v990, 64
      %v1425 = vpop.permute.xlu0 %1424
      %1426 = vrot.lane.b32.xlu0 %v993, 64
      %v1427 = vpop.permute.xlu0 %1426
      %1428 = vrot.lane.b32.xlu0 %v998, 64
      %v1429 = vpop.permute.xlu0 %1428
      %1430 = vrot.lane.b32.xlu0 %v1001, 64
      %v1431 = vpop.permute.xlu0 %1430
      %1432 = vrot.lane.b32.xlu0 %v1006, 64
      %v1433 = vpop.permute.xlu0 %1432
      %1434 = vrot.lane.b32.xlu0 %v1009, 64
      %v1435 = vpop.permute.xlu0 %1434
      %1436 = vrot.lane.b32.xlu0 %v1014, 64
      %v1437 = vpop.permute.xlu0 %1436
      %1438 = vrot.lane.b32.xlu0 %v1017, 64
      %v1439 = vpop.permute.xlu0 %1438
      %1440 = vrot.lane.b32.xlu0 %v1022, 64
      %v1441 = vpop.permute.xlu0 %1440
      %1442 = vrot.lane.b32.xlu0 %v1025, 64
      %v1443 = vpop.permute.xlu0 %1442
      %1444 = vrot.lane.b32.xlu0 %v1030, 64
      %v1445 = vpop.permute.xlu0 %1444
      %1446 = vrot.lane.b32.xlu0 %v1033, 64
      %v1447 = vpop.permute.xlu0 %1446
      %1448 = vrot.lane.b32.xlu0 %v1038, 64
      %v1449 = vpop.permute.xlu0 %1448
      %1450 = vrot.lane.b32.xlu0 %v1041, 64
      %v1451 = vpop.permute.xlu0 %1450
      %1452 = vrot.lane.b32.xlu0 %v1046, 64
      %v1453 = vpop.permute.xlu0 %1452
      %1454 = vrot.lane.b32.xlu0 %v1049, 64
      %v1455 = vpop.permute.xlu0 %1454
      %1456 = vrot.lane.b32.xlu0 %v1054, 64
      %v1457 = vpop.permute.xlu0 %1456
      %1458 = vrot.lane.b32.xlu0 %v1057, 64
      %v1459 = vpop.permute.xlu0 %1458
      %1460 = vrot.lane.b32.xlu0 %v1062, 64
      %v1461 = vpop.permute.xlu0 %1460
      %1462 = vrot.lane.b32.xlu0 %v1065, 64
      %v1463 = vpop.permute.xlu0 %1462
      %1464 = vrot.lane.b32.xlu0 %v1070, 64
      %v1465 = vpop.permute.xlu0 %1464
      %1466 = vrot.lane.b32.xlu0 %v1073, 64
      %v1467 = vpop.permute.xlu0 %1466
      %1468 = vrot.lane.b32.xlu0 %v1078, 64
      %v1469 = vpop.permute.xlu0 %1468
      %1470 = vrot.lane.b32.xlu0 %v1081, 64
      %v1471 = vpop.permute.xlu0 %1470
      %1472 = vrot.lane.b32.xlu0 %v1086, 64
      %v1473 = vpop.permute.xlu0 %1472
      %1474 = vrot.lane.b32.xlu0 %v1089, 64
      %v1475 = vpop.permute.xlu0 %1474
      %1476 = vrot.lane.b32.xlu0 %v1094, 64
      %v1477 = vpop.permute.xlu0 %1476
      %1478 = vrot.lane.b32.xlu0 %v1097, 64
      %v1479 = vpop.permute.xlu0 %1478
      %1480 = vrot.lane.b32.xlu0 %v1102, 64
      %v1481 = vpop.permute.xlu0 %1480
      %1482 = vrot.lane.b32.xlu0 %v1105, 64
      %v1483 = vpop.permute.xlu0 %1482
      %1484 = vrot.lane.b32.xlu0 %v1110, 64
      %v1485 = vpop.permute.xlu0 %1484
      %1486 = vrot.lane.b32.xlu0 %v1113, 64
      %v1487 = vpop.permute.xlu0 %1486
      %1488 = vrot.lane.b32.xlu0 %v1118, 64
      %v1489 = vpop.permute.xlu0 %1488
      %1490 = vrot.lane.b32.xlu0 %v1121, 64
      %v1491 = vpop.permute.xlu0 %1490
      %1492 = vrot.lane.b32.xlu0 %v1126, 64
      %v1493 = vpop.permute.xlu0 %1492
      %1494 = vrot.lane.b32.xlu0 %v1129, 64
      %v1495 = vpop.permute.xlu0 %1494
      %1496 = vrot.lane.b32.xlu0 %v1134, 64
      %v1497 = vpop.permute.xlu0 %1496
      %1498 = vrot.lane.b32.xlu0 %v1137, 64
      %v1499 = vpop.permute.xlu0 %1498
      %1500 = vrot.lane.b32.xlu0 %v1142, 64
      %v1501 = vpop.permute.xlu0 %1500
      %1502 = vrot.lane.b32.xlu0 %v1145, 64
      %v1503 = vpop.permute.xlu0 %1502
      %1504 = vrot.lane.b32.xlu0 %v1150, 64
      %v1505 = vpop.permute.xlu0 %1504
      %1506 = vrot.lane.b32.xlu0 %v1153, 64
      %v1507 = vpop.permute.xlu0 %1506
      %1508 = vrot.lane.b32.xlu0 %v1158, 64
      %v1509 = vpop.permute.xlu0 %1508
      %1510 = vrot.lane.b32.xlu0 %v1161, 64
      %v1511 = vpop.permute.xlu0 %1510
      %1512 = vrot.lane.b32.xlu0 %v1166, 64
      %v1513 = vpop.permute.xlu0 %1512
      %1514 = vrot.lane.b32.xlu0 %v1169, 64
      %v1515 = vpop.permute.xlu0 %1514
      %1516 = vrot.lane.b32.xlu0 %v1174, 64
      %v1517 = vpop.permute.xlu0 %1516
      %1518 = vrot.lane.b32.xlu0 %v1177, 64
      %v1519 = vpop.permute.xlu0 %1518
      %1520 = vrot.lane.b32.xlu0 %v1182, 64
      %v1521 = vpop.permute.xlu0 %1520
      %1522 = vrot.lane.b32.xlu0 %v1185, 64
      %v1523 = vpop.permute.xlu0 %1522
      %1524 = vrot.lane.b32.xlu0 %v1190, 64
      %v1525 = vpop.permute.xlu0 %1524
      %1526 = vrot.lane.b32.xlu0 %v1193, 64
      %v1527 = vpop.permute.xlu0 %1526
      %1528 = vrot.lane.b32.xlu0 %v1198, 64
      %v1529 = vpop.permute.xlu0 %1528
      %1530 = vrot.lane.b32.xlu0 %v1201, 64
      %v1531 = vpop.permute.xlu0 %1530
      %1532 = vrot.lane.b32.xlu0 %v1206, 64
      %v1533 = vpop.permute.xlu0 %1532
      %1534 = vrot.lane.b32.xlu0 %v1209, 64
      %v1535 = vpop.permute.xlu0 %1534
      %1536 = vrot.lane.b32.xlu0 %v1214, 64
      %v1537 = vpop.permute.xlu0 %1536
      %1538 = vrot.lane.b32.xlu0 %v1217, 64
      %v1539 = vpop.permute.xlu0 %1538
      %1540 = vrot.lane.b32.xlu0 %v1222, 64
      %v1541 = vpop.permute.xlu0 %1540
      %1542 = vrot.lane.b32.xlu0 %v1225, 64
      %v1543 = vpop.permute.xlu0 %1542
      %1544 = vrot.lane.b32.xlu0 %v1230, 64
      %v1545 = vpop.permute.xlu0 %1544
      %1546 = vrot.lane.b32.xlu0 %v1233, 64
      %v1547 = vpop.permute.xlu0 %1546
      %1548 = vrot.lane.b32.xlu0 %v1238, 64
      %v1549 = vpop.permute.xlu0 %1548
      %1550 = vrot.lane.b32.xlu0 %v1241, 64
      %v1551 = vpop.permute.xlu0 %1550
      %1552 = vrot.lane.b32.xlu0 %v1246, 64
      %v1553 = vpop.permute.xlu0 %1552
      %1554 = vrot.lane.b32.xlu0 %v1249, 64
      %v1555 = vpop.permute.xlu0 %1554
      %1556 = vrot.lane.b32.xlu0 %v1254, 64
      %v1557 = vpop.permute.xlu0 %1556
      %1558 = vrot.lane.b32.xlu0 %v1257, 64
      %v1559 = vpop.permute.xlu0 %1558
      %1560 = vrot.lane.b32.xlu0 %v1262, 64
      %v1561 = vpop.permute.xlu0 %1560
      %1562 = vrot.lane.b32.xlu0 %v1265, 64
      %v1563 = vpop.permute.xlu0 %1562
      %1564 = vrot.lane.b32.xlu0 %v1270, 64
      %v1565 = vpop.permute.xlu0 %1564
      %1566 = vrot.lane.b32.xlu0 %v1273, 64
      %v1567 = vpop.permute.xlu0 %1566
      %1568 = vrot.lane.b32.xlu0 %v1278, 64
      %v1569 = vpop.permute.xlu0 %1568
      %1570 = vrot.lane.b32.xlu0 %v1281, 64
      %v1571 = vpop.permute.xlu0 %1570
      %1572 = vrot.lane.b32.xlu0 %v1286, 64
      %v1573 = vpop.permute.xlu0 %1572
      %1574 = vrot.lane.b32.xlu0 %v1289, 64
      %v1575 = vpop.permute.xlu0 %1574
      %1576 = vrot.lane.b32.xlu0 %v1294, 64
      %v1577 = vpop.permute.xlu0 %1576
      %1578 = vrot.lane.b32.xlu0 %v1297, 64
      %v1579 = vpop.permute.xlu0 %1578
      %1580 = vrot.lane.b32.xlu0 %v1302, 64
      %v1581 = vpop.permute.xlu0 %1580
      %1582 = vrot.lane.b32.xlu0 %v1305, 64
      %v1583 = vpop.permute.xlu0 %1582
      %1584 = vrot.lane.b32.xlu0 %v1310, 64
      %v1585 = vpop.permute.xlu0 %1584
      %1586 = vrot.lane.b32.xlu0 %v1313, 64
      %v1587 = vpop.permute.xlu0 %1586
      %1588 = vrot.lane.b32.xlu0 %v1318, 64
      %v1589 = vpop.permute.xlu0 %1588
      %1590 = vrot.lane.b32.xlu0 %v1321, 64
      %v1591 = vpop.permute.xlu0 %1590
      %1592 = vrot.lane.b32.xlu0 %v1326, 64
      %v1593 = vpop.permute.xlu0 %1592
      %1594 = vrot.lane.b32.xlu0 %v1329, 64
      %v1595 = vpop.permute.xlu0 %1594
      %1596 = vrot.lane.b32.xlu0 %v1334, 64
      %v1597 = vpop.permute.xlu0 %1596
      %1598 = vrot.lane.b32.xlu0 %v1337, 64
      %v1599 = vpop.permute.xlu0 %1598
      %1600 = vrot.lane.b32.xlu0 %v1342, 64
      %v1601 = vpop.permute.xlu0 %1600
      %1602 = vrot.lane.b32.xlu0 %v1345, 64
      %v1603 = vpop.permute.xlu0 %1602
      %vm1604 = vcmp.ge.f32.partialorder %v838, 0.0
      %vm1605 = vcmp.ge.f32.partialorder %v841, 0.0
      %vm1606 = vcmp.ge.f32.partialorder %v846, 0.0
      %vm1607 = vcmp.ge.f32.partialorder %v849, 0.0
      %vm1608 = vcmp.ge.f32.partialorder %v854, 0.0
      %vm1609 = vcmp.ge.f32.partialorder %v857, 0.0
      %vm1610 = vcmp.ge.f32.partialorder %v862, 0.0
      %vm1611 = vcmp.ge.f32.partialorder %v865, 0.0
      %vm1612 = vcmp.ge.f32.partialorder %v870, 0.0
      %vm1613 = vcmp.ge.f32.partialorder %v873, 0.0
      %vm1614 = vcmp.ge.f32.partialorder %v878, 0.0
      %vm1615 = vcmp.ge.f32.partialorder %v881, 0.0
      %vm1616 = vcmp.ge.f32.partialorder %v886, 0.0
      %vm1617 = vcmp.ge.f32.partialorder %v889, 0.0
      %vm1618 = vcmp.ge.f32.partialorder %v894, 0.0
      %vm1619 = vcmp.ge.f32.partialorder %v897, 0.0
      %vm1620 = vcmp.ge.f32.partialorder %v902, 0.0
      %vm1621 = vcmp.ge.f32.partialorder %v905, 0.0
      %vm1622 = vcmp.ge.f32.partialorder %v910, 0.0
      %vm1623 = vcmp.ge.f32.partialorder %v913, 0.0
      %vm1624 = vcmp.ge.f32.partialorder %v918, 0.0
      %vm1625 = vcmp.ge.f32.partialorder %v921, 0.0
      %vm1626 = vcmp.ge.f32.partialorder %v926, 0.0
      %vm1627 = vcmp.ge.f32.partialorder %v929, 0.0
      %vm1628 = vcmp.ge.f32.partialorder %v934, 0.0
      %vm1629 = vcmp.ge.f32.partialorder %v937, 0.0
      %vm1630 = vcmp.ge.f32.partialorder %v942, 0.0
      %vm1631 = vcmp.ge.f32.partialorder %v945, 0.0
      %vm1632 = vcmp.ge.f32.partialorder %v950, 0.0
      %vm1633 = vcmp.ge.f32.partialorder %v953, 0.0
      %vm1634 = vcmp.ge.f32.partialorder %v958, 0.0
      %vm1635 = vcmp.ge.f32.partialorder %v961, 0.0
      %vm1636 = vcmp.ge.f32.partialorder %v966, 0.0
      %vm1637 = vcmp.ge.f32.partialorder %v969, 0.0
      %vm1638 = vcmp.ge.f32.partialorder %v974, 0.0
      %vm1639 = vcmp.ge.f32.partialorder %v977, 0.0
      %vm1640 = vcmp.ge.f32.partialorder %v982, 0.0
      %vm1641 = vcmp.ge.f32.partialorder %v985, 0.0
      %vm1642 = vcmp.ge.f32.partialorder %v990, 0.0
      %vm1643 = vcmp.ge.f32.partialorder %v993, 0.0
      %vm1644 = vcmp.ge.f32.partialorder %v998, 0.0
      %vm1645 = vcmp.ge.f32.partialorder %v1001, 0.0
      %vm1646 = vcmp.ge.f32.partialorder %v1006, 0.0
      %vm1647 = vcmp.ge.f32.partialorder %v1009, 0.0
      %vm1648 = vcmp.ge.f32.partialorder %v1014, 0.0
      %vm1649 = vcmp.ge.f32.partialorder %v1017, 0.0
      %vm1650 = vcmp.ge.f32.partialorder %v1022, 0.0
      %vm1651 = vcmp.ge.f32.partialorder %v1025, 0.0
      %vm1652 = vcmp.ge.f32.partialorder %v1030, 0.0
      %vm1653 = vcmp.ge.f32.partialorder %v1033, 0.0
      %vm1654 = vcmp.ge.f32.partialorder %v1038, 0.0
      %vm1655 = vcmp.ge.f32.partialorder %v1041, 0.0
      %vm1656 = vcmp.ge.f32.partialorder %v1046, 0.0
      %vm1657 = vcmp.ge.f32.partialorder %v1049, 0.0
      %vm1658 = vcmp.ge.f32.partialorder %v1054, 0.0
      %vm1659 = vcmp.ge.f32.partialorder %v1057, 0.0
      %vm1660 = vcmp.ge.f32.partialorder %v1062, 0.0
      %vm1661 = vcmp.ge.f32.partialorder %v1065, 0.0
      %vm1662 = vcmp.ge.f32.partialorder %v1070, 0.0
      %vm1663 = vcmp.ge.f32.partialorder %v1073, 0.0
      %vm1664 = vcmp.ge.f32.partialorder %v1078, 0.0
      %vm1665 = vcmp.ge.f32.partialorder %v1081, 0.0
      %vm1666 = vcmp.ge.f32.partialorder %v1086, 0.0
      %vm1667 = vcmp.ge.f32.partialorder %v1089, 0.0
      %vm1668 = vcmp.ge.f32.partialorder %v1094, 0.0
      %vm1669 = vcmp.ge.f32.partialorder %v1097, 0.0
      %vm1670 = vcmp.ge.f32.partialorder %v1102, 0.0
      %vm1671 = vcmp.ge.f32.partialorder %v1105, 0.0
      %vm1672 = vcmp.ge.f32.partialorder %v1110, 0.0
      %vm1673 = vcmp.ge.f32.partialorder %v1113, 0.0
      %vm1674 = vcmp.ge.f32.partialorder %v1118, 0.0
      %vm1675 = vcmp.ge.f32.partialorder %v1121, 0.0
      %vm1676 = vcmp.ge.f32.partialorder %v1126, 0.0
      %vm1677 = vcmp.ge.f32.partialorder %v1129, 0.0
      %vm1678 = vcmp.ge.f32.partialorder %v1134, 0.0
      %vm1679 = vcmp.ge.f32.partialorder %v1137, 0.0
      %vm1680 = vcmp.ge.f32.partialorder %v1142, 0.0
      %vm1681 = vcmp.ge.f32.partialorder %v1145, 0.0
      %vm1682 = vcmp.ge.f32.partialorder %v1150, 0.0
      %vm1683 = vcmp.ge.f32.partialorder %v1153, 0.0
      %vm1684 = vcmp.ge.f32.partialorder %v1158, 0.0
      %vm1685 = vcmp.ge.f32.partialorder %v1161, 0.0
      %vm1686 = vcmp.ge.f32.partialorder %v1166, 0.0
      %vm1687 = vcmp.ge.f32.partialorder %v1169, 0.0
      %vm1688 = vcmp.ge.f32.partialorder %v1174, 0.0
      %vm1689 = vcmp.ge.f32.partialorder %v1177, 0.0
      %vm1690 = vcmp.ge.f32.partialorder %v1182, 0.0
      %vm1691 = vcmp.ge.f32.partialorder %v1185, 0.0
      %vm1692 = vcmp.ge.f32.partialorder %v1190, 0.0
      %vm1693 = vcmp.ge.f32.partialorder %v1193, 0.0
      %vm1694 = vcmp.ge.f32.partialorder %v1198, 0.0
      %vm1695 = vcmp.ge.f32.partialorder %v1201, 0.0
      %vm1696 = vcmp.ge.f32.partialorder %v1206, 0.0
      %vm1697 = vcmp.ge.f32.partialorder %v1209, 0.0
      %vm1698 = vcmp.ge.f32.partialorder %v1214, 0.0
      %vm1699 = vcmp.ge.f32.partialorder %v1217, 0.0
      %vm1700 = vcmp.ge.f32.partialorder %v1222, 0.0
      %vm1701 = vcmp.ge.f32.partialorder %v1225, 0.0
      %vm1702 = vcmp.ge.f32.partialorder %v1230, 0.0
      %vm1703 = vcmp.ge.f32.partialorder %v1233, 0.0
      %vm1704 = vcmp.ge.f32.partialorder %v1238, 0.0
      %vm1705 = vcmp.ge.f32.partialorder %v1241, 0.0
      %vm1706 = vcmp.ge.f32.partialorder %v1246, 0.0
      %vm1707 = vcmp.ge.f32.partialorder %v1249, 0.0
      %vm1708 = vcmp.ge.f32.partialorder %v1254, 0.0
      %vm1709 = vcmp.ge.f32.partialorder %v1257, 0.0
      %vm1710 = vcmp.ge.f32.partialorder %v1262, 0.0
      %vm1711 = vcmp.ge.f32.partialorder %v1265, 0.0
      %vm1712 = vcmp.ge.f32.partialorder %v1270, 0.0
      %vm1713 = vcmp.ge.f32.partialorder %v1273, 0.0
      %vm1714 = vcmp.ge.f32.partialorder %v1278, 0.0
      %vm1715 = vcmp.ge.f32.partialorder %v1281, 0.0
      %vm1716 = vcmp.ge.f32.partialorder %v1286, 0.0
      %vm1717 = vcmp.ge.f32.partialorder %v1289, 0.0
      %vm1718 = vcmp.ge.f32.partialorder %v1294, 0.0
      %vm1719 = vcmp.ge.f32.partialorder %v1297, 0.0
      %vm1720 = vcmp.ge.f32.partialorder %v1302, 0.0
      %vm1721 = vcmp.ge.f32.partialorder %v1305, 0.0
      %vm1722 = vcmp.ge.f32.partialorder %v1310, 0.0
      %vm1723 = vcmp.ge.f32.partialorder %v1313, 0.0
      %vm1724 = vcmp.ge.f32.partialorder %v1318, 0.0
      %vm1725 = vcmp.ge.f32.partialorder %v1321, 0.0
      %vm1726 = vcmp.ge.f32.partialorder %v1326, 0.0
      %vm1727 = vcmp.ge.f32.partialorder %v1329, 0.0
      %vm1728 = vcmp.ge.f32.partialorder %v1334, 0.0
      %vm1729 = vcmp.ge.f32.partialorder %v1337, 0.0
      %vm1730 = vcmp.ge.f32.partialorder %v1342, 0.0
      %vm1731 = vcmp.ge.f32.partialorder %v1345, 0.0
      %v1732 = vmul.f32 %v838, 0.2
      %v1733 = vmul.f32 %v841, 0.2
      %v1734 = vmul.f32 %v846, 0.2
      %v1735 = vmul.f32 %v849, 0.2
      %v1736 = vmul.f32 %v854, 0.2
      %v1737 = vmul.f32 %v857, 0.2
      %v1738 = vmul.f32 %v862, 0.2
      %v1739 = vmul.f32 %v865, 0.2
      %v1740 = vmul.f32 %v870, 0.2
      %v1741 = vmul.f32 %v873, 0.2
      %v1742 = vmul.f32 %v878, 0.2
      %v1743 = vmul.f32 %v881, 0.2
      %v1744 = vmul.f32 %v886, 0.2
      %v1745 = vmul.f32 %v889, 0.2
      %v1746 = vmul.f32 %v894, 0.2
      %v1747 = vmul.f32 %v897, 0.2
      %v1748 = vmul.f32 %v902, 0.2
      %v1749 = vmul.f32 %v905, 0.2
      %v1750 = vmul.f32 %v910, 0.2
      %v1751 = vmul.f32 %v913, 0.2
      %v1752 = vmul.f32 %v918, 0.2
      %v1753 = vmul.f32 %v921, 0.2
      %v1754 = vmul.f32 %v926, 0.2
      %v1755 = vmul.f32 %v929, 0.2
      %v1756 = vmul.f32 %v934, 0.2
      %v1757 = vmul.f32 %v937, 0.2
      %v1758 = vmul.f32 %v942, 0.2
      %v1759 = vmul.f32 %v945, 0.2
      %v1760 = vmul.f32 %v950, 0.2
      %v1761 = vmul.f32 %v953, 0.2
      %v1762 = vmul.f32 %v958, 0.2
      %v1763 = vmul.f32 %v961, 0.2
      %v1764 = vmul.f32 %v966, 0.2
      %v1765 = vmul.f32 %v969, 0.2
      %v1766 = vmul.f32 %v974, 0.2
      %v1767 = vmul.f32 %v977, 0.2
      %v1768 = vmul.f32 %v982, 0.2
      %v1769 = vmul.f32 %v985, 0.2
      %v1770 = vmul.f32 %v990, 0.2
      %v1771 = vmul.f32 %v993, 0.2
      %v1772 = vmul.f32 %v998, 0.2
      %v1773 = vmul.f32 %v1001, 0.2
      %v1774 = vmul.f32 %v1006, 0.2
      %v1775 = vmul.f32 %v1009, 0.2
      %v1776 = vmul.f32 %v1014, 0.2
      %v1777 = vmul.f32 %v1017, 0.2
      %v1778 = vmul.f32 %v1022, 0.2
      %v1779 = vmul.f32 %v1025, 0.2
      %v1780 = vmul.f32 %v1030, 0.2
      %v1781 = vmul.f32 %v1033, 0.2
      %v1782 = vmul.f32 %v1038, 0.2
      %v1783 = vmul.f32 %v1041, 0.2
      %v1784 = vmul.f32 %v1046, 0.2
      %v1785 = vmul.f32 %v1049, 0.2
      %v1786 = vmul.f32 %v1054, 0.2
      %v1787 = vmul.f32 %v1057, 0.2
      %v1788 = vmul.f32 %v1062, 0.2
      %v1789 = vmul.f32 %v1065, 0.2
      %v1790 = vmul.f32 %v1070, 0.2
      %v1791 = vmul.f32 %v1073, 0.2
      %v1792 = vmul.f32 %v1078, 0.2
      %v1793 = vmul.f32 %v1081, 0.2
      %v1794 = vmul.f32 %v1086, 0.2
      %v1795 = vmul.f32 %v1089, 0.2
      %v1796 = vmul.f32 %v1094, 0.2
      %v1797 = vmul.f32 %v1097, 0.2
      %v1798 = vmul.f32 %v1102, 0.2
      %v1799 = vmul.f32 %v1105, 0.2
      %v1800 = vmul.f32 %v1110, 0.2
      %v1801 = vmul.f32 %v1113, 0.2
      %v1802 = vmul.f32 %v1118, 0.2
      %v1803 = vmul.f32 %v1121, 0.2
      %v1804 = vmul.f32 %v1126, 0.2
      %v1805 = vmul.f32 %v1129, 0.2
      %v1806 = vmul.f32 %v1134, 0.2
      %v1807 = vmul.f32 %v1137, 0.2
      %v1808 = vmul.f32 %v1142, 0.2
      %v1809 = vmul.f32 %v1145, 0.2
      %v1810 = vmul.f32 %v1150, 0.2
      %v1811 = vmul.f32 %v1153, 0.2
      %v1812 = vmul.f32 %v1158, 0.2
      %v1813 = vmul.f32 %v1161, 0.2
      %v1814 = vmul.f32 %v1166, 0.2
      %v1815 = vmul.f32 %v1169, 0.2
      %v1816 = vmul.f32 %v1174, 0.2
      %v1817 = vmul.f32 %v1177, 0.2
      %v1818 = vmul.f32 %v1182, 0.2
      %v1819 = vmul.f32 %v1185, 0.2
      %v1820 = vmul.f32 %v1190, 0.2
      %v1821 = vmul.f32 %v1193, 0.2
      %v1822 = vmul.f32 %v1198, 0.2
      %v1823 = vmul.f32 %v1201, 0.2
      %v1824 = vmul.f32 %v1206, 0.2
      %v1825 = vmul.f32 %v1209, 0.2
      %v1826 = vmul.f32 %v1214, 0.2
      %v1827 = vmul.f32 %v1217, 0.2
      %v1828 = vmul.f32 %v1222, 0.2
      %v1829 = vmul.f32 %v1225, 0.2
      %v1830 = vmul.f32 %v1230, 0.2
      %v1831 = vmul.f32 %v1233, 0.2
      %v1832 = vmul.f32 %v1238, 0.2
      %v1833 = vmul.f32 %v1241, 0.2
      %v1834 = vmul.f32 %v1246, 0.2
      %v1835 = vmul.f32 %v1249, 0.2
      %v1836 = vmul.f32 %v1254, 0.2
      %v1837 = vmul.f32 %v1257, 0.2
      %v1838 = vmul.f32 %v1262, 0.2
      %v1839 = vmul.f32 %v1265, 0.2
      %v1840 = vmul.f32 %v1270, 0.2
      %v1841 = vmul.f32 %v1273, 0.2
      %v1842 = vmul.f32 %v1278, 0.2
      %v1843 = vmul.f32 %v1281, 0.2
      %v1844 = vmul.f32 %v1286, 0.2
      %v1845 = vmul.f32 %v1289, 0.2
      %v1846 = vmul.f32 %v1294, 0.2
      %v1847 = vmul.f32 %v1297, 0.2
      %v1848 = vmul.f32 %v1302, 0.2
      %v1849 = vmul.f32 %v1305, 0.2
      %v1850 = vmul.f32 %v1310, 0.2
      %v1851 = vmul.f32 %v1313, 0.2
      %v1852 = vmul.f32 %v1318, 0.2
      %v1853 = vmul.f32 %v1321, 0.2
      %v1854 = vmul.f32 %v1326, 0.2
      %v1855 = vmul.f32 %v1329, 0.2
      %v1856 = vmul.f32 %v1334, 0.2
      %v1857 = vmul.f32 %v1337, 0.2
      %v1858 = vmul.f32 %v1342, 0.2
      %v1859 = vmul.f32 %v1345, 0.2
      %v1860 = vsel %vm1604, %v838, %v1732
      %v1861 = vsel %vm1605, %v841, %v1733
      %v1862 = vsel %vm1606, %v846, %v1734
      %v1863 = vsel %vm1607, %v849, %v1735
      %v1864 = vsel %vm1608, %v854, %v1736
      %v1865 = vsel %vm1609, %v857, %v1737
      %v1866 = vsel %vm1610, %v862, %v1738
      %v1867 = vsel %vm1611, %v865, %v1739
      %v1868 = vsel %vm1612, %v870, %v1740
      %v1869 = vsel %vm1613, %v873, %v1741
      %v1870 = vsel %vm1614, %v878, %v1742
      %v1871 = vsel %vm1615, %v881, %v1743
      %v1872 = vsel %vm1616, %v886, %v1744
      %v1873 = vsel %vm1617, %v889, %v1745
      %v1874 = vsel %vm1618, %v894, %v1746
      %v1875 = vsel %vm1619, %v897, %v1747
      %v1876 = vsel %vm1620, %v902, %v1748
      %v1877 = vsel %vm1621, %v905, %v1749
      %v1878 = vsel %vm1622, %v910, %v1750
      %v1879 = vsel %vm1623, %v913, %v1751
      %v1880 = vsel %vm1624, %v918, %v1752
      %v1881 = vsel %vm1625, %v921, %v1753
      %v1882 = vsel %vm1626, %v926, %v1754
      %v1883 = vsel %vm1627, %v929, %v1755
      %v1884 = vsel %vm1628, %v934, %v1756
      %v1885 = vsel %vm1629, %v937, %v1757
      %v1886 = vsel %vm1630, %v942, %v1758
      %v1887 = vsel %vm1631, %v945, %v1759
      %v1888 = vsel %vm1632, %v950, %v1760
      %v1889 = vsel %vm1633, %v953, %v1761
      %v1890 = vsel %vm1634, %v958, %v1762
      %v1891 = vsel %vm1635, %v961, %v1763
      %v1892 = vsel %vm1636, %v966, %v1764
      %v1893 = vsel %vm1637, %v969, %v1765
      %v1894 = vsel %vm1638, %v974, %v1766
      %v1895 = vsel %vm1639, %v977, %v1767
      %v1896 = vsel %vm1640, %v982, %v1768
      %v1897 = vsel %vm1641, %v985, %v1769
      %v1898 = vsel %vm1642, %v990, %v1770
      %v1899 = vsel %vm1643, %v993, %v1771
      %v1900 = vsel %vm1644, %v998, %v1772
      %v1901 = vsel %vm1645, %v1001, %v1773
      %v1902 = vsel %vm1646, %v1006, %v1774
      %v1903 = vsel %vm1647, %v1009, %v1775
      %v1904 = vsel %vm1648, %v1014, %v1776
      %v1905 = vsel %vm1649, %v1017, %v1777
      %v1906 = vsel %vm1650, %v1022, %v1778
      %v1907 = vsel %vm1651, %v1025, %v1779
      %v1908 = vsel %vm1652, %v1030, %v1780
      %v1909 = vsel %vm1653, %v1033, %v1781
      %v1910 = vsel %vm1654, %v1038, %v1782
      %v1911 = vsel %vm1655, %v1041, %v1783
      %v1912 = vsel %vm1656, %v1046, %v1784
      %v1913 = vsel %vm1657, %v1049, %v1785
      %v1914 = vsel %vm1658, %v1054, %v1786
      %v1915 = vsel %vm1659, %v1057, %v1787
      %v1916 = vsel %vm1660, %v1062, %v1788
      %v1917 = vsel %vm1661, %v1065, %v1789
      %v1918 = vsel %vm1662, %v1070, %v1790
      %v1919 = vsel %vm1663, %v1073, %v1791
      %v1920 = vsel %vm1664, %v1078, %v1792
      %v1921 = vsel %vm1665, %v1081, %v1793
      %v1922 = vsel %vm1666, %v1086, %v1794
      %v1923 = vsel %vm1667, %v1089, %v1795
      %v1924 = vsel %vm1668, %v1094, %v1796
      %v1925 = vsel %vm1669, %v1097, %v1797
      %v1926 = vsel %vm1670, %v1102, %v1798
      %v1927 = vsel %vm1671, %v1105, %v1799
      %v1928 = vsel %vm1672, %v1110, %v1800
      %v1929 = vsel %vm1673, %v1113, %v1801
      %v1930 = vsel %vm1674, %v1118, %v1802
      %v1931 = vsel %vm1675, %v1121, %v1803
      %v1932 = vsel %vm1676, %v1126, %v1804
      %v1933 = vsel %vm1677, %v1129, %v1805
      %v1934 = vsel %vm1678, %v1134, %v1806
      %v1935 = vsel %vm1679, %v1137, %v1807
      %v1936 = vsel %vm1680, %v1142, %v1808
      %v1937 = vsel %vm1681, %v1145, %v1809
      %v1938 = vsel %vm1682, %v1150, %v1810
      %v1939 = vsel %vm1683, %v1153, %v1811
      %v1940 = vsel %vm1684, %v1158, %v1812
      %v1941 = vsel %vm1685, %v1161, %v1813
      %v1942 = vsel %vm1686, %v1166, %v1814
      %v1943 = vsel %vm1687, %v1169, %v1815
      %v1944 = vsel %vm1688, %v1174, %v1816
      %v1945 = vsel %vm1689, %v1177, %v1817
      %v1946 = vsel %vm1690, %v1182, %v1818
      %v1947 = vsel %vm1691, %v1185, %v1819
      %v1948 = vsel %vm1692, %v1190, %v1820
      %v1949 = vsel %vm1693, %v1193, %v1821
      %v1950 = vsel %vm1694, %v1198, %v1822
      %v1951 = vsel %vm1695, %v1201, %v1823
      %v1952 = vsel %vm1696, %v1206, %v1824
      %v1953 = vsel %vm1697, %v1209, %v1825
      %v1954 = vsel %vm1698, %v1214, %v1826
      %v1955 = vsel %vm1699, %v1217, %v1827
      %v1956 = vsel %vm1700, %v1222, %v1828
      %v1957 = vsel %vm1701, %v1225, %v1829
      %v1958 = vsel %vm1702, %v1230, %v1830
      %v1959 = vsel %vm1703, %v1233, %v1831
      %v1960 = vsel %vm1704, %v1238, %v1832
      %v1961 = vsel %vm1705, %v1241, %v1833
      %v1962 = vsel %vm1706, %v1246, %v1834
      %v1963 = vsel %vm1707, %v1249, %v1835
      %v1964 = vsel %vm1708, %v1254, %v1836
      %v1965 = vsel %vm1709, %v1257, %v1837
      %v1966 = vsel %vm1710, %v1262, %v1838
      %v1967 = vsel %vm1711, %v1265, %v1839
      %v1968 = vsel %vm1712, %v1270, %v1840
      %v1969 = vsel %vm1713, %v1273, %v1841
      %v1970 = vsel %vm1714, %v1278, %v1842
      %v1971 = vsel %vm1715, %v1281, %v1843
      %v1972 = vsel %vm1716, %v1286, %v1844
      %v1973 = vsel %vm1717, %v1289, %v1845
      %v1974 = vsel %vm1718, %v1294, %v1846
      %v1975 = vsel %vm1719, %v1297, %v1847
      %v1976 = vsel %vm1720, %v1302, %v1848
      %v1977 = vsel %vm1721, %v1305, %v1849
      %v1978 = vsel %vm1722, %v1310, %v1850
      %v1979 = vsel %vm1723, %v1313, %v1851
      %v1980 = vsel %vm1724, %v1318, %v1852
      %v1981 = vsel %vm1725, %v1321, %v1853
      %v1982 = vsel %vm1726, %v1326, %v1854
      %v1983 = vsel %vm1727, %v1329, %v1855
      %v1984 = vsel %vm1728, %v1334, %v1856
      %v1985 = vsel %vm1729, %v1337, %v1857
      %v1986 = vsel %vm1730, %v1342, %v1858
      %v1987 = vsel %vm1731, %v1345, %v1859
      %v1988 = vmul.f32 %v1349, 0.5
      %v1989 = vmul.f32 %v1351, 0.5
      %v1990 = vmul.f32 %v1353, 0.5
      %v1991 = vmul.f32 %v1355, 0.5
      %v1992 = vmul.f32 %v1357, 0.5
      %v1993 = vmul.f32 %v1359, 0.5
      %v1994 = vmul.f32 %v1361, 0.5
      %v1995 = vmul.f32 %v1363, 0.5
      %v1996 = vmul.f32 %v1365, 0.5
      %v1997 = vmul.f32 %v1367, 0.5
      %v1998 = vmul.f32 %v1369, 0.5
      %v1999 = vmul.f32 %v1371, 0.5
      %v2000 = vmul.f32 %v1373, 0.5
      %v2001 = vmul.f32 %v1375, 0.5
      %v2002 = vmul.f32 %v1377, 0.5
      %v2003 = vmul.f32 %v1379, 0.5
      %v2004 = vmul.f32 %v1381, 0.5
      %v2005 = vmul.f32 %v1383, 0.5
      %v2006 = vmul.f32 %v1385, 0.5
      %v2007 = vmul.f32 %v1387, 0.5
      %v2008 = vmul.f32 %v1389, 0.5
      %v2009 = vmul.f32 %v1391, 0.5
      %v2010 = vmul.f32 %v1393, 0.5
      %v2011 = vmul.f32 %v1395, 0.5
      %v2012 = vmul.f32 %v1397, 0.5
      %v2013 = vmul.f32 %v1399, 0.5
      %v2014 = vmul.f32 %v1401, 0.5
      %v2015 = vmul.f32 %v1403, 0.5
      %v2016 = vmul.f32 %v1405, 0.5
      %v2017 = vmul.f32 %v1407, 0.5
      %v2018 = vmul.f32 %v1409, 0.5
      %v2019 = vmul.f32 %v1411, 0.5
      %v2020 = vmul.f32 %v1413, 0.5
      %v2021 = vmul.f32 %v1415, 0.5
      %v2022 = vmul.f32 %v1417, 0.5
      %v2023 = vmul.f32 %v1419, 0.5
      %v2024 = vmul.f32 %v1421, 0.5
      %v2025 = vmul.f32 %v1423, 0.5
      %v2026 = vmul.f32 %v1425, 0.5
      %v2027 = vmul.f32 %v1427, 0.5
      %v2028 = vmul.f32 %v1429, 0.5
      %v2029 = vmul.f32 %v1431, 0.5
      %v2030 = vmul.f32 %v1433, 0.5
      %v2031 = vmul.f32 %v1435, 0.5
      %v2032 = vmul.f32 %v1437, 0.5
      %v2033 = vmul.f32 %v1439, 0.5
      %v2034 = vmul.f32 %v1441, 0.5
      %v2035 = vmul.f32 %v1443, 0.5
      %v2036 = vmul.f32 %v1445, 0.5
      %v2037 = vmul.f32 %v1447, 0.5
      %v2038 = vmul.f32 %v1449, 0.5
      %v2039 = vmul.f32 %v1451, 0.5
      %v2040 = vmul.f32 %v1453, 0.5
      %v2041 = vmul.f32 %v1455, 0.5
      %v2042 = vmul.f32 %v1457, 0.5
      %v2043 = vmul.f32 %v1459, 0.5
      %v2044 = vmul.f32 %v1461, 0.5
      %v2045 = vmul.f32 %v1463, 0.5
      %v2046 = vmul.f32 %v1465, 0.5
      %v2047 = vmul.f32 %v1467, 0.5
      %v2048 = vmul.f32 %v1469, 0.5
      %v2049 = vmul.f32 %v1471, 0.5
      %v2050 = vmul.f32 %v1473, 0.5
      %v2051 = vmul.f32 %v1475, 0.5
      %v2052 = vmul.f32 %v1477, 0.5
      %v2053 = vmul.f32 %v1479, 0.5
      %v2054 = vmul.f32 %v1481, 0.5
      %v2055 = vmul.f32 %v1483, 0.5
      %v2056 = vmul.f32 %v1485, 0.5
      %v2057 = vmul.f32 %v1487, 0.5
      %v2058 = vmul.f32 %v1489, 0.5
      %v2059 = vmul.f32 %v1491, 0.5
      %v2060 = vmul.f32 %v1493, 0.5
      %v2061 = vmul.f32 %v1495, 0.5
      %v2062 = vmul.f32 %v1497, 0.5
      %v2063 = vmul.f32 %v1499, 0.5
      %v2064 = vmul.f32 %v1501, 0.5
      %v2065 = vmul.f32 %v1503, 0.5
      %v2066 = vmul.f32 %v1505, 0.5
      %v2067 = vmul.f32 %v1507, 0.5
      %v2068 = vmul.f32 %v1509, 0.5
      %v2069 = vmul.f32 %v1511, 0.5
      %v2070 = vmul.f32 %v1513, 0.5
      %v2071 = vmul.f32 %v1515, 0.5
      %v2072 = vmul.f32 %v1517, 0.5
      %v2073 = vmul.f32 %v1519, 0.5
      %v2074 = vmul.f32 %v1521, 0.5
      %v2075 = vmul.f32 %v1523, 0.5
      %v2076 = vmul.f32 %v1525, 0.5
      %v2077 = vmul.f32 %v1527, 0.5
      %v2078 = vmul.f32 %v1529, 0.5
      %v2079 = vmul.f32 %v1531, 0.5
      %v2080 = vmul.f32 %v1533, 0.5
      %v2081 = vmul.f32 %v1535, 0.5
      %v2082 = vmul.f32 %v1537, 0.5
      %v2083 = vmul.f32 %v1539, 0.5
      %v2084 = vmul.f32 %v1541, 0.5
      %v2085 = vmul.f32 %v1543, 0.5
      %v2086 = vmul.f32 %v1545, 0.5
      %v2087 = vmul.f32 %v1547, 0.5
      %v2088 = vmul.f32 %v1549, 0.5
      %v2089 = vmul.f32 %v1551, 0.5
      %v2090 = vmul.f32 %v1553, 0.5
      %v2091 = vmul.f32 %v1555, 0.5
      %v2092 = vmul.f32 %v1557, 0.5
      %v2093 = vmul.f32 %v1559, 0.5
      %v2094 = vmul.f32 %v1561, 0.5
      %v2095 = vmul.f32 %v1563, 0.5
      %v2096 = vmul.f32 %v1565, 0.5
      %v2097 = vmul.f32 %v1567, 0.5
      %v2098 = vmul.f32 %v1569, 0.5
      %v2099 = vmul.f32 %v1571, 0.5
      %v2100 = vmul.f32 %v1573, 0.5
      %v2101 = vmul.f32 %v1575, 0.5
      %v2102 = vmul.f32 %v1577, 0.5
      %v2103 = vmul.f32 %v1579, 0.5
      %v2104 = vmul.f32 %v1581, 0.5
      %v2105 = vmul.f32 %v1583, 0.5
      %v2106 = vmul.f32 %v1585, 0.5
      %v2107 = vmul.f32 %v1587, 0.5
      %v2108 = vmul.f32 %v1589, 0.5
      %v2109 = vmul.f32 %v1591, 0.5
      %v2110 = vmul.f32 %v1593, 0.5
      %v2111 = vmul.f32 %v1595, 0.5
      %v2112 = vmul.f32 %v1597, 0.5
      %v2113 = vmul.f32 %v1599, 0.5
      %v2114 = vmul.f32 %v1601, 0.5
      %v2115 = vmul.f32 %v1603, 0.5
      %v2116 = vtanh.pop %v1988
      %v2117 = vtanh.pop %v1989
      %v2118 = vtanh.pop %v1990
      %v2119 = vtanh.pop %v1991
      %v2120 = vtanh.pop %v1992
      %v2121 = vtanh.pop %v1993
      %v2122 = vtanh.pop %v1994
      %v2123 = vtanh.pop %v1995
      %v2124 = vtanh.pop %v1996
      %v2125 = vtanh.pop %v1997
      %v2126 = vtanh.pop %v1998
      %v2127 = vtanh.pop %v1999
      %v2128 = vtanh.pop %v2000
      %v2129 = vtanh.pop %v2001
      %v2130 = vtanh.pop %v2002
      %v2131 = vtanh.pop %v2003
      %v2132 = vtanh.pop %v2004
      %v2133 = vtanh.pop %v2005
      %v2134 = vtanh.pop %v2006
      %v2135 = vtanh.pop %v2007
      %v2136 = vtanh.pop %v2008
      %v2137 = vtanh.pop %v2009
      %v2138 = vtanh.pop %v2010
      %v2139 = vtanh.pop %v2011
      %v2140 = vtanh.pop %v2012
      %v2141 = vtanh.pop %v2013
      %v2142 = vtanh.pop %v2014
      %v2143 = vtanh.pop %v2015
      %v2144 = vtanh.pop %v2016
      %v2145 = vtanh.pop %v2017
      %v2146 = vtanh.pop %v2018
      %v2147 = vtanh.pop %v2019
      %v2148 = vtanh.pop %v2020
      %v2149 = vtanh.pop %v2021
      %v2150 = vtanh.pop %v2022
      %v2151 = vtanh.pop %v2023
      %v2152 = vtanh.pop %v2024
      %v2153 = vtanh.pop %v2025
      %v2154 = vtanh.pop %v2026
      %v2155 = vtanh.pop %v2027
      %v2156 = vtanh.pop %v2028
      %v2157 = vtanh.pop %v2029
      %v2158 = vtanh.pop %v2030
      %v2159 = vtanh.pop %v2031
      %v2160 = vtanh.pop %v2032
      %v2161 = vtanh.pop %v2033
      %v2162 = vtanh.pop %v2034
      %v2163 = vtanh.pop %v2035
      %v2164 = vtanh.pop %v2036
      %v2165 = vtanh.pop %v2037
      %v2166 = vtanh.pop %v2038
      %v2167 = vtanh.pop %v2039
      %v2168 = vtanh.pop %v2040
      %v2169 = vtanh.pop %v2041
      %v2170 = vtanh.pop %v2042
      %v2171 = vtanh.pop %v2043
      %v2172 = vtanh.pop %v2044
      %v2173 = vtanh.pop %v2045
      %v2174 = vtanh.pop %v2046
      %v2175 = vtanh.pop %v2047
      %v2176 = vtanh.pop %v2048
      %v2177 = vtanh.pop %v2049
      %v2178 = vtanh.pop %v2050
      %v2179 = vtanh.pop %v2051
      %v2180 = vtanh.pop %v2052
      %v2181 = vtanh.pop %v2053
      %v2182 = vtanh.pop %v2054
      %v2183 = vtanh.pop %v2055
      %v2184 = vtanh.pop %v2056
      %v2185 = vtanh.pop %v2057
      %v2186 = vtanh.pop %v2058
      %v2187 = vtanh.pop %v2059
      %v2188 = vtanh.pop %v2060
      %v2189 = vtanh.pop %v2061
      %v2190 = vtanh.pop %v2062
      %v2191 = vtanh.pop %v2063
      %v2192 = vtanh.pop %v2064
      %v2193 = vtanh.pop %v2065
      %v2194 = vtanh.pop %v2066
      %v2195 = vtanh.pop %v2067
      %v2196 = vtanh.pop %v2068
      %v2197 = vtanh.pop %v2069
      %v2198 = vtanh.pop %v2070
      %v2199 = vtanh.pop %v2071
      %v2200 = vtanh.pop %v2072
      %v2201 = vtanh.pop %v2073
      %v2202 = vtanh.pop %v2074
      %v2203 = vtanh.pop %v2075
      %v2204 = vtanh.pop %v2076
      %v2205 = vtanh.pop %v2077
      %v2206 = vtanh.pop %v2078
      %v2207 = vtanh.pop %v2079
      %v2208 = vtanh.pop %v2080
      %v2209 = vtanh.pop %v2081
      %v2210 = vtanh.pop %v2082
      %v2211 = vtanh.pop %v2083
      %v2212 = vtanh.pop %v2084
      %v2213 = vtanh.pop %v2085
      %v2214 = vtanh.pop %v2086
      %v2215 = vtanh.pop %v2087
      %v2216 = vtanh.pop %v2088
      %v2217 = vtanh.pop %v2089
      %v2218 = vtanh.pop %v2090
      %v2219 = vtanh.pop %v2091
      %v2220 = vtanh.pop %v2092
      %v2221 = vtanh.pop %v2093
      %v2222 = vtanh.pop %v2094
      %v2223 = vtanh.pop %v2095
      %v2224 = vtanh.pop %v2096
      %v2225 = vtanh.pop %v2097
      %v2226 = vtanh.pop %v2098
      %v2227 = vtanh.pop %v2099
      %v2228 = vtanh.pop %v2100
      %v2229 = vtanh.pop %v2101
      %v2230 = vtanh.pop %v2102
      %v2231 = vtanh.pop %v2103
      %v2232 = vtanh.pop %v2104
      %v2233 = vtanh.pop %v2105
      %v2234 = vtanh.pop %v2106
      %v2235 = vtanh.pop %v2107
      %v2236 = vtanh.pop %v2108
      %v2237 = vtanh.pop %v2109
      %v2238 = vtanh.pop %v2110
      %v2239 = vtanh.pop %v2111
      %v2240 = vtanh.pop %v2112
      %v2241 = vtanh.pop %v2113
      %v2242 = vtanh.pop %v2114
      %v2243 = vtanh.pop %v2115
      %v2244 = vadd.f32 %v2116, 1.0
      %v2245 = vadd.f32 %v2117, 1.0
      %v2246 = vadd.f32 %v2118, 1.0
      %v2247 = vadd.f32 %v2119, 1.0
      %v2248 = vadd.f32 %v2120, 1.0
      %v2249 = vadd.f32 %v2121, 1.0
      %v2250 = vadd.f32 %v2122, 1.0
      %v2251 = vadd.f32 %v2123, 1.0
      %v2252 = vadd.f32 %v2124, 1.0
      %v2253 = vadd.f32 %v2125, 1.0
      %v2254 = vadd.f32 %v2126, 1.0
      %v2255 = vadd.f32 %v2127, 1.0
      %v2256 = vadd.f32 %v2128, 1.0
      %v2257 = vadd.f32 %v2129, 1.0
      %v2258 = vadd.f32 %v2130, 1.0
      %v2259 = vadd.f32 %v2131, 1.0
      %v2260 = vadd.f32 %v2132, 1.0
      %v2261 = vadd.f32 %v2133, 1.0
      %v2262 = vadd.f32 %v2134, 1.0
      %v2263 = vadd.f32 %v2135, 1.0
      %v2264 = vadd.f32 %v2136, 1.0
      %v2265 = vadd.f32 %v2137, 1.0
      %v2266 = vadd.f32 %v2138, 1.0
      %v2267 = vadd.f32 %v2139, 1.0
      %v2268 = vadd.f32 %v2140, 1.0
      %v2269 = vadd.f32 %v2141, 1.0
      %v2270 = vadd.f32 %v2142, 1.0
      %v2271 = vadd.f32 %v2143, 1.0
      %v2272 = vadd.f32 %v2144, 1.0
      %v2273 = vadd.f32 %v2145, 1.0
      %v2274 = vadd.f32 %v2146, 1.0
      %v2275 = vadd.f32 %v2147, 1.0
      %v2276 = vadd.f32 %v2148, 1.0
      %v2277 = vadd.f32 %v2149, 1.0
      %v2278 = vadd.f32 %v2150, 1.0
      %v2279 = vadd.f32 %v2151, 1.0
      %v2280 = vadd.f32 %v2152, 1.0
      %v2281 = vadd.f32 %v2153, 1.0
      %v2282 = vadd.f32 %v2154, 1.0
      %v2283 = vadd.f32 %v2155, 1.0
      %v2284 = vadd.f32 %v2156, 1.0
      %v2285 = vadd.f32 %v2157, 1.0
      %v2286 = vadd.f32 %v2158, 1.0
      %v2287 = vadd.f32 %v2159, 1.0
      %v2288 = vadd.f32 %v2160, 1.0
      %v2289 = vadd.f32 %v2161, 1.0
      %v2290 = vadd.f32 %v2162, 1.0
      %v2291 = vadd.f32 %v2163, 1.0
      %v2292 = vadd.f32 %v2164, 1.0
      %v2293 = vadd.f32 %v2165, 1.0
      %v2294 = vadd.f32 %v2166, 1.0
      %v2295 = vadd.f32 %v2167, 1.0
      %v2296 = vadd.f32 %v2168, 1.0
      %v2297 = vadd.f32 %v2169, 1.0
      %v2298 = vadd.f32 %v2170, 1.0
      %v2299 = vadd.f32 %v2171, 1.0
      %v2300 = vadd.f32 %v2172, 1.0
      %v2301 = vadd.f32 %v2173, 1.0
      %v2302 = vadd.f32 %v2174, 1.0
      %v2303 = vadd.f32 %v2175, 1.0
      %v2304 = vadd.f32 %v2176, 1.0
      %v2305 = vadd.f32 %v2177, 1.0
      %v2306 = vadd.f32 %v2178, 1.0
      %v2307 = vadd.f32 %v2179, 1.0
      %v2308 = vadd.f32 %v2180, 1.0
      %v2309 = vadd.f32 %v2181, 1.0
      %v2310 = vadd.f32 %v2182, 1.0
      %v2311 = vadd.f32 %v2183, 1.0
      %v2312 = vadd.f32 %v2184, 1.0
      %v2313 = vadd.f32 %v2185, 1.0
      %v2314 = vadd.f32 %v2186, 1.0
      %v2315 = vadd.f32 %v2187, 1.0
      %v2316 = vadd.f32 %v2188, 1.0
      %v2317 = vadd.f32 %v2189, 1.0
      %v2318 = vadd.f32 %v2190, 1.0
      %v2319 = vadd.f32 %v2191, 1.0
      %v2320 = vadd.f32 %v2192, 1.0
      %v2321 = vadd.f32 %v2193, 1.0
      %v2322 = vadd.f32 %v2194, 1.0
      %v2323 = vadd.f32 %v2195, 1.0
      %v2324 = vadd.f32 %v2196, 1.0
      %v2325 = vadd.f32 %v2197, 1.0
      %v2326 = vadd.f32 %v2198, 1.0
      %v2327 = vadd.f32 %v2199, 1.0
      %v2328 = vadd.f32 %v2200, 1.0
      %v2329 = vadd.f32 %v2201, 1.0
      %v2330 = vadd.f32 %v2202, 1.0
      %v2331 = vadd.f32 %v2203, 1.0
      %v2332 = vadd.f32 %v2204, 1.0
      %v2333 = vadd.f32 %v2205, 1.0
      %v2334 = vadd.f32 %v2206, 1.0
      %v2335 = vadd.f32 %v2207, 1.0
      %v2336 = vadd.f32 %v2208, 1.0
      %v2337 = vadd.f32 %v2209, 1.0
      %v2338 = vadd.f32 %v2210, 1.0
      %v2339 = vadd.f32 %v2211, 1.0
      %v2340 = vadd.f32 %v2212, 1.0
      %v2341 = vadd.f32 %v2213, 1.0
      %v2342 = vadd.f32 %v2214, 1.0
      %v2343 = vadd.f32 %v2215, 1.0
      %v2344 = vadd.f32 %v2216, 1.0
      %v2345 = vadd.f32 %v2217, 1.0
      %v2346 = vadd.f32 %v2218, 1.0
      %v2347 = vadd.f32 %v2219, 1.0
      %v2348 = vadd.f32 %v2220, 1.0
      %v2349 = vadd.f32 %v2221, 1.0
      %v2350 = vadd.f32 %v2222, 1.0
      %v2351 = vadd.f32 %v2223, 1.0
      %v2352 = vadd.f32 %v2224, 1.0
      %v2353 = vadd.f32 %v2225, 1.0
      %v2354 = vadd.f32 %v2226, 1.0
      %v2355 = vadd.f32 %v2227, 1.0
      %v2356 = vadd.f32 %v2228, 1.0
      %v2357 = vadd.f32 %v2229, 1.0
      %v2358 = vadd.f32 %v2230, 1.0
      %v2359 = vadd.f32 %v2231, 1.0
      %v2360 = vadd.f32 %v2232, 1.0
      %v2361 = vadd.f32 %v2233, 1.0
      %v2362 = vadd.f32 %v2234, 1.0
      %v2363 = vadd.f32 %v2235, 1.0
      %v2364 = vadd.f32 %v2236, 1.0
      %v2365 = vadd.f32 %v2237, 1.0
      %v2366 = vadd.f32 %v2238, 1.0
      %v2367 = vadd.f32 %v2239, 1.0
      %v2368 = vadd.f32 %v2240, 1.0
      %v2369 = vadd.f32 %v2241, 1.0
      %v2370 = vadd.f32 %v2242, 1.0
      %v2371 = vadd.f32 %v2243, 1.0
      %v2372 = vmul.f32 %v2244, 0.5
      %v2373 = vmul.f32 %v2245, 0.5
      %v2374 = vmul.f32 %v2246, 0.5
      %v2375 = vmul.f32 %v2247, 0.5
      %v2376 = vmul.f32 %v2248, 0.5
      %v2377 = vmul.f32 %v2249, 0.5
      %v2378 = vmul.f32 %v2250, 0.5
      %v2379 = vmul.f32 %v2251, 0.5
      %v2380 = vmul.f32 %v2252, 0.5
      %v2381 = vmul.f32 %v2253, 0.5
      %v2382 = vmul.f32 %v2254, 0.5
      %v2383 = vmul.f32 %v2255, 0.5
      %v2384 = vmul.f32 %v2256, 0.5
      %v2385 = vmul.f32 %v2257, 0.5
      %v2386 = vmul.f32 %v2258, 0.5
      %v2387 = vmul.f32 %v2259, 0.5
      %v2388 = vmul.f32 %v2260, 0.5
      %v2389 = vmul.f32 %v2261, 0.5
      %v2390 = vmul.f32 %v2262, 0.5
      %v2391 = vmul.f32 %v2263, 0.5
      %v2392 = vmul.f32 %v2264, 0.5
      %v2393 = vmul.f32 %v2265, 0.5
      %v2394 = vmul.f32 %v2266, 0.5
      %v2395 = vmul.f32 %v2267, 0.5
      %v2396 = vmul.f32 %v2268, 0.5
      %v2397 = vmul.f32 %v2269, 0.5
      %v2398 = vmul.f32 %v2270, 0.5
      %v2399 = vmul.f32 %v2271, 0.5
      %v2400 = vmul.f32 %v2272, 0.5
      %v2401 = vmul.f32 %v2273, 0.5
      %v2402 = vmul.f32 %v2274, 0.5
      %v2403 = vmul.f32 %v2275, 0.5
      %v2404 = vmul.f32 %v2276, 0.5
      %v2405 = vmul.f32 %v2277, 0.5
      %v2406 = vmul.f32 %v2278, 0.5
      %v2407 = vmul.f32 %v2279, 0.5
      %v2408 = vmul.f32 %v2280, 0.5
      %v2409 = vmul.f32 %v2281, 0.5
      %v2410 = vmul.f32 %v2282, 0.5
      %v2411 = vmul.f32 %v2283, 0.5
      %v2412 = vmul.f32 %v2284, 0.5
      %v2413 = vmul.f32 %v2285, 0.5
      %v2414 = vmul.f32 %v2286, 0.5
      %v2415 = vmul.f32 %v2287, 0.5
      %v2416 = vmul.f32 %v2288, 0.5
      %v2417 = vmul.f32 %v2289, 0.5
      %v2418 = vmul.f32 %v2290, 0.5
      %v2419 = vmul.f32 %v2291, 0.5
      %v2420 = vmul.f32 %v2292, 0.5
      %v2421 = vmul.f32 %v2293, 0.5
      %v2422 = vmul.f32 %v2294, 0.5
      %v2423 = vmul.f32 %v2295, 0.5
      %v2424 = vmul.f32 %v2296, 0.5
      %v2425 = vmul.f32 %v2297, 0.5
      %v2426 = vmul.f32 %v2298, 0.5
      %v2427 = vmul.f32 %v2299, 0.5
      %v2428 = vmul.f32 %v2300, 0.5
      %v2429 = vmul.f32 %v2301, 0.5
      %v2430 = vmul.f32 %v2302, 0.5
      %v2431 = vmul.f32 %v2303, 0.5
      %v2432 = vmul.f32 %v2304, 0.5
      %v2433 = vmul.f32 %v2305, 0.5
      %v2434 = vmul.f32 %v2306, 0.5
      %v2435 = vmul.f32 %v2307, 0.5
      %v2436 = vmul.f32 %v2308, 0.5
      %v2437 = vmul.f32 %v2309, 0.5
      %v2438 = vmul.f32 %v2310, 0.5
      %v2439 = vmul.f32 %v2311, 0.5
      %v2440 = vmul.f32 %v2312, 0.5
      %v2441 = vmul.f32 %v2313, 0.5
      %v2442 = vmul.f32 %v2314, 0.5
      %v2443 = vmul.f32 %v2315, 0.5
      %v2444 = vmul.f32 %v2316, 0.5
      %v2445 = vmul.f32 %v2317, 0.5
      %v2446 = vmul.f32 %v2318, 0.5
      %v2447 = vmul.f32 %v2319, 0.5
      %v2448 = vmul.f32 %v2320, 0.5
      %v2449 = vmul.f32 %v2321, 0.5
      %v2450 = vmul.f32 %v2322, 0.5
      %v2451 = vmul.f32 %v2323, 0.5
      %v2452 = vmul.f32 %v2324, 0.5
      %v2453 = vmul.f32 %v2325, 0.5
      %v2454 = vmul.f32 %v2326, 0.5
      %v2455 = vmul.f32 %v2327, 0.5
      %v2456 = vmul.f32 %v2328, 0.5
      %v2457 = vmul.f32 %v2329, 0.5
      %v2458 = vmul.f32 %v2330, 0.5
      %v2459 = vmul.f32 %v2331, 0.5
      %v2460 = vmul.f32 %v2332, 0.5
      %v2461 = vmul.f32 %v2333, 0.5
      %v2462 = vmul.f32 %v2334, 0.5
      %v2463 = vmul.f32 %v2335, 0.5
      %v2464 = vmul.f32 %v2336, 0.5
      %v2465 = vmul.f32 %v2337, 0.5
      %v2466 = vmul.f32 %v2338, 0.5
      %v2467 = vmul.f32 %v2339, 0.5
      %v2468 = vmul.f32 %v2340, 0.5
      %v2469 = vmul.f32 %v2341, 0.5
      %v2470 = vmul.f32 %v2342, 0.5
      %v2471 = vmul.f32 %v2343, 0.5
      %v2472 = vmul.f32 %v2344, 0.5
      %v2473 = vmul.f32 %v2345, 0.5
      %v2474 = vmul.f32 %v2346, 0.5
      %v2475 = vmul.f32 %v2347, 0.5
      %v2476 = vmul.f32 %v2348, 0.5
      %v2477 = vmul.f32 %v2349, 0.5
      %v2478 = vmul.f32 %v2350, 0.5
      %v2479 = vmul.f32 %v2351, 0.5
      %v2480 = vmul.f32 %v2352, 0.5
      %v2481 = vmul.f32 %v2353, 0.5
      %v2482 = vmul.f32 %v2354, 0.5
      %v2483 = vmul.f32 %v2355, 0.5
      %v2484 = vmul.f32 %v2356, 0.5
      %v2485 = vmul.f32 %v2357, 0.5
      %v2486 = vmul.f32 %v2358, 0.5
      %v2487 = vmul.f32 %v2359, 0.5
      %v2488 = vmul.f32 %v2360, 0.5
      %v2489 = vmul.f32 %v2361, 0.5
      %v2490 = vmul.f32 %v2362, 0.5
      %v2491 = vmul.f32 %v2363, 0.5
      %v2492 = vmul.f32 %v2364, 0.5
      %v2493 = vmul.f32 %v2365, 0.5
      %v2494 = vmul.f32 %v2366, 0.5
      %v2495 = vmul.f32 %v2367, 0.5
      %v2496 = vmul.f32 %v2368, 0.5
      %v2497 = vmul.f32 %v2369, 0.5
      %v2498 = vmul.f32 %v2370, 0.5
      %v2499 = vmul.f32 %v2371, 0.5
      %v2500 = vmul.f32 %v1860, %v2372
      %v2501 = vmul.f32 %v1861, %v2373
      %v2502 = vmul.f32 %v1862, %v2374
      %v2503 = vmul.f32 %v1863, %v2375
      %v2504 = vmul.f32 %v1864, %v2376
      %v2505 = vmul.f32 %v1865, %v2377
      %v2506 = vmul.f32 %v1866, %v2378
      %v2507 = vmul.f32 %v1867, %v2379
      %v2508 = vmul.f32 %v1868, %v2380
      %v2509 = vmul.f32 %v1869, %v2381
      %v2510 = vmul.f32 %v1870, %v2382
      %v2511 = vmul.f32 %v1871, %v2383
      %v2512 = vmul.f32 %v1872, %v2384
      %v2513 = vmul.f32 %v1873, %v2385
      %v2514 = vmul.f32 %v1874, %v2386
      %v2515 = vmul.f32 %v1875, %v2387
      %v2516 = vmul.f32 %v1876, %v2388
      %v2517 = vmul.f32 %v1877, %v2389
      %v2518 = vmul.f32 %v1878, %v2390
      %v2519 = vmul.f32 %v1879, %v2391
      %v2520 = vmul.f32 %v1880, %v2392
      %v2521 = vmul.f32 %v1881, %v2393
      %v2522 = vmul.f32 %v1882, %v2394
      %v2523 = vmul.f32 %v1883, %v2395
      %v2524 = vmul.f32 %v1884, %v2396
      %v2525 = vmul.f32 %v1885, %v2397
      %v2526 = vmul.f32 %v1886, %v2398
      %v2527 = vmul.f32 %v1887, %v2399
      %v2528 = vmul.f32 %v1888, %v2400
      %v2529 = vmul.f32 %v1889, %v2401
      %v2530 = vmul.f32 %v1890, %v2402
      %v2531 = vmul.f32 %v1891, %v2403
      %v2532 = vmul.f32 %v1892, %v2404
      %v2533 = vmul.f32 %v1893, %v2405
      %v2534 = vmul.f32 %v1894, %v2406
      %v2535 = vmul.f32 %v1895, %v2407
      %v2536 = vmul.f32 %v1896, %v2408
      %v2537 = vmul.f32 %v1897, %v2409
      %v2538 = vmul.f32 %v1898, %v2410
      %v2539 = vmul.f32 %v1899, %v2411
      %v2540 = vmul.f32 %v1900, %v2412
      %v2541 = vmul.f32 %v1901, %v2413
      %v2542 = vmul.f32 %v1902, %v2414
      %v2543 = vmul.f32 %v1903, %v2415
      %v2544 = vmul.f32 %v1904, %v2416
      %v2545 = vmul.f32 %v1905, %v2417
      %v2546 = vmul.f32 %v1906, %v2418
      %v2547 = vmul.f32 %v1907, %v2419
      %v2548 = vmul.f32 %v1908, %v2420
      %v2549 = vmul.f32 %v1909, %v2421
      %v2550 = vmul.f32 %v1910, %v2422
      %v2551 = vmul.f32 %v1911, %v2423
      %v2552 = vmul.f32 %v1912, %v2424
      %v2553 = vmul.f32 %v1913, %v2425
      %v2554 = vmul.f32 %v1914, %v2426
      %v2555 = vmul.f32 %v1915, %v2427
      %v2556 = vmul.f32 %v1916, %v2428
      %v2557 = vmul.f32 %v1917, %v2429
      %v2558 = vmul.f32 %v1918, %v2430
      %v2559 = vmul.f32 %v1919, %v2431
      %v2560 = vmul.f32 %v1920, %v2432
      %v2561 = vmul.f32 %v1921, %v2433
      %v2562 = vmul.f32 %v1922, %v2434
      %v2563 = vmul.f32 %v1923, %v2435
      %v2564 = vmul.f32 %v1924, %v2436
      %v2565 = vmul.f32 %v1925, %v2437
      %v2566 = vmul.f32 %v1926, %v2438
      %v2567 = vmul.f32 %v1927, %v2439
      %v2568 = vmul.f32 %v1928, %v2440
      %v2569 = vmul.f32 %v1929, %v2441
      %v2570 = vmul.f32 %v1930, %v2442
      %v2571 = vmul.f32 %v1931, %v2443
      %v2572 = vmul.f32 %v1932, %v2444
      %v2573 = vmul.f32 %v1933, %v2445
      %v2574 = vmul.f32 %v1934, %v2446
      %v2575 = vmul.f32 %v1935, %v2447
      %v2576 = vmul.f32 %v1936, %v2448
      %v2577 = vmul.f32 %v1937, %v2449
      %v2578 = vmul.f32 %v1938, %v2450
      %v2579 = vmul.f32 %v1939, %v2451
      %v2580 = vmul.f32 %v1940, %v2452
      %v2581 = vmul.f32 %v1941, %v2453
      %v2582 = vmul.f32 %v1942, %v2454
      %v2583 = vmul.f32 %v1943, %v2455
      %v2584 = vmul.f32 %v1944, %v2456
      %v2585 = vmul.f32 %v1945, %v2457
      %v2586 = vmul.f32 %v1946, %v2458
      %v2587 = vmul.f32 %v1947, %v2459
      %v2588 = vmul.f32 %v1948, %v2460
      %v2589 = vmul.f32 %v1949, %v2461
      %v2590 = vmul.f32 %v1950, %v2462
      %v2591 = vmul.f32 %v1951, %v2463
      %v2592 = vmul.f32 %v1952, %v2464
      %v2593 = vmul.f32 %v1953, %v2465
      %v2594 = vmul.f32 %v1954, %v2466
      %v2595 = vmul.f32 %v1955, %v2467
      %v2596 = vmul.f32 %v1956, %v2468
      %v2597 = vmul.f32 %v1957, %v2469
      %v2598 = vmul.f32 %v1958, %v2470
      %v2599 = vmul.f32 %v1959, %v2471
      %v2600 = vmul.f32 %v1960, %v2472
      %v2601 = vmul.f32 %v1961, %v2473
      %v2602 = vmul.f32 %v1962, %v2474
      %v2603 = vmul.f32 %v1963, %v2475
      %v2604 = vmul.f32 %v1964, %v2476
      %v2605 = vmul.f32 %v1965, %v2477
      %v2606 = vmul.f32 %v1966, %v2478
      %v2607 = vmul.f32 %v1967, %v2479
      %v2608 = vmul.f32 %v1968, %v2480
      %v2609 = vmul.f32 %v1969, %v2481
      %v2610 = vmul.f32 %v1970, %v2482
      %v2611 = vmul.f32 %v1971, %v2483
      %v2612 = vmul.f32 %v1972, %v2484
      %v2613 = vmul.f32 %v1973, %v2485
      %v2614 = vmul.f32 %v1974, %v2486
      %v2615 = vmul.f32 %v1975, %v2487
      %v2616 = vmul.f32 %v1976, %v2488
      %v2617 = vmul.f32 %v1977, %v2489
      %v2618 = vmul.f32 %v1978, %v2490
      %v2619 = vmul.f32 %v1979, %v2491
      %v2620 = vmul.f32 %v1980, %v2492
      %v2621 = vmul.f32 %v1981, %v2493
      %v2622 = vmul.f32 %v1982, %v2494
      %v2623 = vmul.f32 %v1983, %v2495
      %v2624 = vmul.f32 %v1984, %v2496
      %v2625 = vmul.f32 %v1985, %v2497
      %v2626 = vmul.f32 %v1986, %v2498
      %v2627 = vmul.f32 %v1987, %v2499
      %s2628 = smul.u32 %s13, 1024
      %s2629 = scalar_lea.vmem %s2, %s2628
      %2630 = vst [vmem:[%s2629] sm:$0xff] %v2500
      %2631 = vst [vmem:[%s2629 + $0x8] sm:$0xff] %v2501
      %2632 = vst [vmem:[%s2629 + $0x10] sm:$0xff] %v2502
      %2633 = vst [vmem:[%s2629 + $0x18] sm:$0xff] %v2503
      %2634 = vst [vmem:[%s2629 + $0x20] sm:$0xff] %v2504
      %2635 = vst [vmem:[%s2629 + $0x28] sm:$0xff] %v2505
      %2636 = vst [vmem:[%s2629 + $0x30] sm:$0xff] %v2506
      %2637 = vst [vmem:[%s2629 + $0x38] sm:$0xff] %v2507
      %2638 = vst [vmem:[%s2629 + $0x40] sm:$0xff] %v2508
      %2639 = vst [vmem:[%s2629 + $0x48] sm:$0xff] %v2509
      %2640 = vst [vmem:[%s2629 + $0x50] sm:$0xff] %v2510
      %2641 = vst [vmem:[%s2629 + $0x58] sm:$0xff] %v2511
      %2642 = vst [vmem:[%s2629 + $0x60] sm:$0xff] %v2512
      %2643 = vst [vmem:[%s2629 + $0x68] sm:$0xff] %v2513
      %2644 = vst [vmem:[%s2629 + $0x70] sm:$0xff] %v2514
      %2645 = vst [vmem:[%s2629 + $0x78] sm:$0xff] %v2515
      %2646 = vst [vmem:[%s2629 + $0x80] sm:$0xff] %v2516
      %2647 = vst [vmem:[%s2629 + $0x88] sm:$0xff] %v2517
      %2648 = vst [vmem:[%s2629 + $0x90] sm:$0xff] %v2518
      %2649 = vst [vmem:[%s2629 + $0x98] sm:$0xff] %v2519
      %2650 = vst [vmem:[%s2629 + $0xa0] sm:$0xff] %v2520
      %2651 = vst [vmem:[%s2629 + $0xa8] sm:$0xff] %v2521
      %2652 = vst [vmem:[%s2629 + $0xb0] sm:$0xff] %v2522
      %2653 = vst [vmem:[%s2629 + $0xb8] sm:$0xff] %v2523
      %2654 = vst [vmem:[%s2629 + $0xc0] sm:$0xff] %v2524
      %2655 = vst [vmem:[%s2629 + $0xc8] sm:$0xff] %v2525
      %2656 = vst [vmem:[%s2629 + $0xd0] sm:$0xff] %v2526
      %2657 = vst [vmem:[%s2629 + $0xd8] sm:$0xff] %v2527
      %2658 = vst [vmem:[%s2629 + $0xe0] sm:$0xff] %v2528
      %2659 = vst [vmem:[%s2629 + $0xe8] sm:$0xff] %v2529
      %2660 = vst [vmem:[%s2629 + $0xf0] sm:$0xff] %v2530
      %2661 = vst [vmem:[%s2629 + $0xf8] sm:$0xff] %v2531
      %2662 = vst [vmem:[%s2629 + $0x100] sm:$0xff] %v2532
      %2663 = vst [vmem:[%s2629 + $0x108] sm:$0xff] %v2533
      %2664 = vst [vmem:[%s2629 + $0x110] sm:$0xff] %v2534
      %2665 = vst [vmem:[%s2629 + $0x118] sm:$0xff] %v2535
      %2666 = vst [vmem:[%s2629 + $0x120] sm:$0xff] %v2536
      %2667 = vst [vmem:[%s2629 + $0x128] sm:$0xff] %v2537
      %2668 = vst [vmem:[%s2629 + $0x130] sm:$0xff] %v2538
      %2669 = vst [vmem:[%s2629 + $0x138] sm:$0xff] %v2539
      %2670 = vst [vmem:[%s2629 + $0x140] sm:$0xff] %v2540
      %2671 = vst [vmem:[%s2629 + $0x148] sm:$0xff] %v2541
      %2672 = vst [vmem:[%s2629 + $0x150] sm:$0xff] %v2542
      %2673 = vst [vmem:[%s2629 + $0x158] sm:$0xff] %v2543
      %2674 = vst [vmem:[%s2629 + $0x160] sm:$0xff] %v2544
      %2675 = vst [vmem:[%s2629 + $0x168] sm:$0xff] %v2545
      %2676 = vst [vmem:[%s2629 + $0x170] sm:$0xff] %v2546
      %2677 = vst [vmem:[%s2629 + $0x178] sm:$0xff] %v2547
      %2678 = vst [vmem:[%s2629 + $0x180] sm:$0xff] %v2548
      %2679 = vst [vmem:[%s2629 + $0x188] sm:$0xff] %v2549
      %2680 = vst [vmem:[%s2629 + $0x190] sm:$0xff] %v2550
      %2681 = vst [vmem:[%s2629 + $0x198] sm:$0xff] %v2551
      %2682 = vst [vmem:[%s2629 + $0x1a0] sm:$0xff] %v2552
      %2683 = vst [vmem:[%s2629 + $0x1a8] sm:$0xff] %v2553
      %2684 = vst [vmem:[%s2629 + $0x1b0] sm:$0xff] %v2554
      %2685 = vst [vmem:[%s2629 + $0x1b8] sm:$0xff] %v2555
      %2686 = vst [vmem:[%s2629 + $0x1c0] sm:$0xff] %v2556
      %2687 = vst [vmem:[%s2629 + $0x1c8] sm:$0xff] %v2557
      %2688 = vst [vmem:[%s2629 + $0x1d0] sm:$0xff] %v2558
      %2689 = vst [vmem:[%s2629 + $0x1d8] sm:$0xff] %v2559
      %2690 = vst [vmem:[%s2629 + $0x1e0] sm:$0xff] %v2560
      %2691 = vst [vmem:[%s2629 + $0x1e8] sm:$0xff] %v2561
      %2692 = vst [vmem:[%s2629 + $0x1f0] sm:$0xff] %v2562
      %2693 = vst [vmem:[%s2629 + $0x1f8] sm:$0xff] %v2563
      %2694 = vst [vmem:[%s2629 + $0x200] sm:$0xff] %v2564
      %2695 = vst [vmem:[%s2629 + $0x208] sm:$0xff] %v2565
      %2696 = vst [vmem:[%s2629 + $0x210] sm:$0xff] %v2566
      %2697 = vst [vmem:[%s2629 + $0x218] sm:$0xff] %v2567
      %2698 = vst [vmem:[%s2629 + $0x220] sm:$0xff] %v2568
      %2699 = vst [vmem:[%s2629 + $0x228] sm:$0xff] %v2569
      %2700 = vst [vmem:[%s2629 + $0x230] sm:$0xff] %v2570
      %2701 = vst [vmem:[%s2629 + $0x238] sm:$0xff] %v2571
      %2702 = vst [vmem:[%s2629 + $0x240] sm:$0xff] %v2572
      %2703 = vst [vmem:[%s2629 + $0x248] sm:$0xff] %v2573
      %2704 = vst [vmem:[%s2629 + $0x250] sm:$0xff] %v2574
      %2705 = vst [vmem:[%s2629 + $0x258] sm:$0xff] %v2575
      %2706 = vst [vmem:[%s2629 + $0x260] sm:$0xff] %v2576
      %2707 = vst [vmem:[%s2629 + $0x268] sm:$0xff] %v2577
      %2708 = vst [vmem:[%s2629 + $0x270] sm:$0xff] %v2578
      %2709 = vst [vmem:[%s2629 + $0x278] sm:$0xff] %v2579
      %2710 = vst [vmem:[%s2629 + $0x280] sm:$0xff] %v2580
      %2711 = vst [vmem:[%s2629 + $0x288] sm:$0xff] %v2581
      %2712 = vst [vmem:[%s2629 + $0x290] sm:$0xff] %v2582
      %2713 = vst [vmem:[%s2629 + $0x298] sm:$0xff] %v2583
      %2714 = vst [vmem:[%s2629 + $0x2a0] sm:$0xff] %v2584
      %2715 = vst [vmem:[%s2629 + $0x2a8] sm:$0xff] %v2585
      %2716 = vst [vmem:[%s2629 + $0x2b0] sm:$0xff] %v2586
      %2717 = vst [vmem:[%s2629 + $0x2b8] sm:$0xff] %v2587
      %2718 = vst [vmem:[%s2629 + $0x2c0] sm:$0xff] %v2588
      %2719 = vst [vmem:[%s2629 + $0x2c8] sm:$0xff] %v2589
      %2720 = vst [vmem:[%s2629 + $0x2d0] sm:$0xff] %v2590
      %2721 = vst [vmem:[%s2629 + $0x2d8] sm:$0xff] %v2591
      %2722 = vst [vmem:[%s2629 + $0x2e0] sm:$0xff] %v2592
      %2723 = vst [vmem:[%s2629 + $0x2e8] sm:$0xff] %v2593
      %2724 = vst [vmem:[%s2629 + $0x2f0] sm:$0xff] %v2594
      %2725 = vst [vmem:[%s2629 + $0x2f8] sm:$0xff] %v2595
      %2726 = vst [vmem:[%s2629 + $0x300] sm:$0xff] %v2596
      %2727 = vst [vmem:[%s2629 + $0x308] sm:$0xff] %v2597
      %2728 = vst [vmem:[%s2629 + $0x310] sm:$0xff] %v2598
      %2729 = vst [vmem:[%s2629 + $0x318] sm:$0xff] %v2599
      %2730 = vst [vmem:[%s2629 + $0x320] sm:$0xff] %v2600
      %2731 = vst [vmem:[%s2629 + $0x328] sm:$0xff] %v2601
      %2732 = vst [vmem:[%s2629 + $0x330] sm:$0xff] %v2602
      %2733 = vst [vmem:[%s2629 + $0x338] sm:$0xff] %v2603
      %2734 = vst [vmem:[%s2629 + $0x340] sm:$0xff] %v2604
      %2735 = vst [vmem:[%s2629 + $0x348] sm:$0xff] %v2605
      %2736 = vst [vmem:[%s2629 + $0x350] sm:$0xff] %v2606
      %2737 = vst [vmem:[%s2629 + $0x358] sm:$0xff] %v2607
      %2738 = vst [vmem:[%s2629 + $0x360] sm:$0xff] %v2608
      %2739 = vst [vmem:[%s2629 + $0x368] sm:$0xff] %v2609
      %2740 = vst [vmem:[%s2629 + $0x370] sm:$0xff] %v2610
      %2741 = vst [vmem:[%s2629 + $0x378] sm:$0xff] %v2611
      %2742 = vst [vmem:[%s2629 + $0x380] sm:$0xff] %v2612
      %2743 = vst [vmem:[%s2629 + $0x388] sm:$0xff] %v2613
      %2744 = vst [vmem:[%s2629 + $0x390] sm:$0xff] %v2614
      %2745 = vst [vmem:[%s2629 + $0x398] sm:$0xff] %v2615
      %2746 = vst [vmem:[%s2629 + $0x3a0] sm:$0xff] %v2616
      %2747 = vst [vmem:[%s2629 + $0x3a8] sm:$0xff] %v2617
      %2748 = vst [vmem:[%s2629 + $0x3b0] sm:$0xff] %v2618
      %2749 = vst [vmem:[%s2629 + $0x3b8] sm:$0xff] %v2619
      %2750 = vst [vmem:[%s2629 + $0x3c0] sm:$0xff] %v2620
      %2751 = vst [vmem:[%s2629 + $0x3c8] sm:$0xff] %v2621
      %2752 = vst [vmem:[%s2629 + $0x3d0] sm:$0xff] %v2622
      %2753 = vst [vmem:[%s2629 + $0x3d8] sm:$0xff] %v2623
      %2754 = vst [vmem:[%s2629 + $0x3e0] sm:$0xff] %v2624
      %2755 = vst [vmem:[%s2629 + $0x3e8] sm:$0xff] %v2625
      %2756 = vst [vmem:[%s2629 + $0x3f0] sm:$0xff] %v2626
      %2757 = vst [vmem:[%s2629 + $0x3f8] sm:$0xff] %v2627
      %v2758 = vld [vmem:[#allocation2] sm:$0x1]
      %v2759 = vadd.f32 %v2500, %v2501
      %v2760 = vadd.f32 %v2759, %v2502
      %v2761 = vadd.f32 %v2760, %v2503
      %v2762 = vadd.f32 %v2761, %v2504
      %v2763 = vadd.f32 %v2762, %v2505
      %v2764 = vadd.f32 %v2763, %v2506
      %v2765 = vadd.f32 %v2764, %v2507
      %v2766 = vadd.f32 %v2765, %v2508
      %v2767 = vadd.f32 %v2766, %v2509
      %v2768 = vadd.f32 %v2767, %v2510
      %v2769 = vadd.f32 %v2768, %v2511
      %v2770 = vadd.f32 %v2769, %v2512
      %v2771 = vadd.f32 %v2770, %v2513
      %v2772 = vadd.f32 %v2771, %v2514
      %v2773 = vadd.f32 %v2772, %v2515
      %v2774 = vadd.f32 %v2773, %v2516
      %v2775 = vadd.f32 %v2774, %v2517
      %v2776 = vadd.f32 %v2775, %v2518
      %v2777 = vadd.f32 %v2776, %v2519
      %v2778 = vadd.f32 %v2777, %v2520
      %v2779 = vadd.f32 %v2778, %v2521
      %v2780 = vadd.f32 %v2779, %v2522
      %v2781 = vadd.f32 %v2780, %v2523
      %v2782 = vadd.f32 %v2781, %v2524
      %v2783 = vadd.f32 %v2782, %v2525
      %v2784 = vadd.f32 %v2783, %v2526
      %v2785 = vadd.f32 %v2784, %v2527
      %v2786 = vadd.f32 %v2785, %v2528
      %v2787 = vadd.f32 %v2786, %v2529
      %v2788 = vadd.f32 %v2787, %v2530
      %v2789 = vadd.f32 %v2788, %v2531
      %v2790 = vadd.f32 %v2789, %v2532
      %v2791 = vadd.f32 %v2790, %v2533
      %v2792 = vadd.f32 %v2791, %v2534
      %v2793 = vadd.f32 %v2792, %v2535
      %v2794 = vadd.f32 %v2793, %v2536
      %v2795 = vadd.f32 %v2794, %v2537
      %v2796 = vadd.f32 %v2795, %v2538
      %v2797 = vadd.f32 %v2796, %v2539
      %v2798 = vadd.f32 %v2797, %v2540
      %v2799 = vadd.f32 %v2798, %v2541
      %v2800 = vadd.f32 %v2799, %v2542
      %v2801 = vadd.f32 %v2800, %v2543
      %v2802 = vadd.f32 %v2801, %v2544
      %v2803 = vadd.f32 %v2802, %v2545
      %v2804 = vadd.f32 %v2803, %v2546
      %v2805 = vadd.f32 %v2804, %v2547
      %v2806 = vadd.f32 %v2805, %v2548
      %v2807 = vadd.f32 %v2806, %v2549
      %v2808 = vadd.f32 %v2807, %v2550
      %v2809 = vadd.f32 %v2808, %v2551
      %v2810 = vadd.f32 %v2809, %v2552
      %v2811 = vadd.f32 %v2810, %v2553
      %v2812 = vadd.f32 %v2811, %v2554
      %v2813 = vadd.f32 %v2812, %v2555
      %v2814 = vadd.f32 %v2813, %v2556
      %v2815 = vadd.f32 %v2814, %v2557
      %v2816 = vadd.f32 %v2815, %v2558
      %v2817 = vadd.f32 %v2816, %v2559
      %v2818 = vadd.f32 %v2817, %v2560
      %v2819 = vadd.f32 %v2818, %v2561
      %v2820 = vadd.f32 %v2819, %v2562
      %v2821 = vadd.f32 %v2820, %v2563
      %v2822 = vadd.f32 %v2821, %v2564
      %v2823 = vadd.f32 %v2822, %v2565
      %v2824 = vadd.f32 %v2823, %v2566
      %v2825 = vadd.f32 %v2824, %v2567
      %v2826 = vadd.f32 %v2825, %v2568
      %v2827 = vadd.f32 %v2826, %v2569
      %v2828 = vadd.f32 %v2827, %v2570
      %v2829 = vadd.f32 %v2828, %v2571
      %v2830 = vadd.f32 %v2829, %v2572
      %v2831 = vadd.f32 %v2830, %v2573
      %v2832 = vadd.f32 %v2831, %v2574
      %v2833 = vadd.f32 %v2832, %v2575
      %v2834 = vadd.f32 %v2833, %v2576
      %v2835 = vadd.f32 %v2834, %v2577
      %v2836 = vadd.f32 %v2835, %v2578
      %v2837 = vadd.f32 %v2836, %v2579
      %v2838 = vadd.f32 %v2837, %v2580
      %v2839 = vadd.f32 %v2838, %v2581
      %v2840 = vadd.f32 %v2839, %v2582
      %v2841 = vadd.f32 %v2840, %v2583
      %v2842 = vadd.f32 %v2841, %v2584
      %v2843 = vadd.f32 %v2842, %v2585
      %v2844 = vadd.f32 %v2843, %v2586
      %v2845 = vadd.f32 %v2844, %v2587
      %v2846 = vadd.f32 %v2845, %v2588
      %v2847 = vadd.f32 %v2846, %v2589
      %v2848 = vadd.f32 %v2847, %v2590
      %v2849 = vadd.f32 %v2848, %v2591
      %v2850 = vadd.f32 %v2849, %v2592
      %v2851 = vadd.f32 %v2850, %v2593
      %v2852 = vadd.f32 %v2851, %v2594
      %v2853 = vadd.f32 %v2852, %v2595
      %v2854 = vadd.f32 %v2853, %v2596
      %v2855 = vadd.f32 %v2854, %v2597
      %v2856 = vadd.f32 %v2855, %v2598
      %v2857 = vadd.f32 %v2856, %v2599
      %v2858 = vadd.f32 %v2857, %v2600
      %v2859 = vadd.f32 %v2858, %v2601
      %v2860 = vadd.f32 %v2859, %v2602
      %v2861 = vadd.f32 %v2860, %v2603
      %v2862 = vadd.f32 %v2861, %v2604
      %v2863 = vadd.f32 %v2862, %v2605
      %v2864 = vadd.f32 %v2863, %v2606
      %v2865 = vadd.f32 %v2864, %v2607
      %v2866 = vadd.f32 %v2865, %v2608
      %v2867 = vadd.f32 %v2866, %v2609
      %v2868 = vadd.f32 %v2867, %v2610
      %v2869 = vadd.f32 %v2868, %v2611
      %v2870 = vadd.f32 %v2869, %v2612
      %v2871 = vadd.f32 %v2870, %v2613
      %v2872 = vadd.f32 %v2871, %v2614
      %v2873 = vadd.f32 %v2872, %v2615
      %v2874 = vadd.f32 %v2873, %v2616
      %v2875 = vadd.f32 %v2874, %v2617
      %v2876 = vadd.f32 %v2875, %v2618
      %v2877 = vadd.f32 %v2876, %v2619
      %v2878 = vadd.f32 %v2877, %v2620
      %v2879 = vadd.f32 %v2878, %v2621
      %v2880 = vadd.f32 %v2879, %v2622
      %v2881 = vadd.f32 %v2880, %v2623
      %v2882 = vadd.f32 %v2881, %v2624
      %v2883 = vadd.f32 %v2882, %v2625
      %v2884 = vadd.f32 %v2883, %v2626
      %v2885 = vadd.f32 %v2884, %v2627
      %v2886 = vrot.slane %v2885, 4
      %v2887 = vadd.f32 %v2885, %v2886
      %v2888 = vrot.slane %v2887, 2
      %v2889 = vadd.f32 %v2887, %v2888
      %v2890 = vrot.slane %v2889, 1
      %v2891 = vadd.f32 %v2889, %v2890
      %v2892 = vadd.f32 %v2758, %v2891
      %2893 = vst [vmem:[#allocation2] sm:$0x1] %v2892
      %v2894 = vld [vmem:[#allocation3] sm:$0x1]
      %v2895 = vmul.f32 %v2500, %v2500
      %v2896 = vmul.f32 %v2501, %v2501
      %v2897 = vmul.f32 %v2502, %v2502
      %v2898 = vmul.f32 %v2503, %v2503
      %v2899 = vmul.f32 %v2504, %v2504
      %v2900 = vmul.f32 %v2505, %v2505
      %v2901 = vmul.f32 %v2506, %v2506
      %v2902 = vmul.f32 %v2507, %v2507
      %v2903 = vmul.f32 %v2508, %v2508
      %v2904 = vmul.f32 %v2509, %v2509
      %v2905 = vmul.f32 %v2510, %v2510
      %v2906 = vmul.f32 %v2511, %v2511
      %v2907 = vmul.f32 %v2512, %v2512
      %v2908 = vmul.f32 %v2513, %v2513
      %v2909 = vmul.f32 %v2514, %v2514
      %v2910 = vmul.f32 %v2515, %v2515
      %v2911 = vmul.f32 %v2516, %v2516
      %v2912 = vmul.f32 %v2517, %v2517
      %v2913 = vmul.f32 %v2518, %v2518
      %v2914 = vmul.f32 %v2519, %v2519
      %v2915 = vmul.f32 %v2520, %v2520
      %v2916 = vmul.f32 %v2521, %v2521
      %v2917 = vmul.f32 %v2522, %v2522
      %v2918 = vmul.f32 %v2523, %v2523
      %v2919 = vmul.f32 %v2524, %v2524
      %v2920 = vmul.f32 %v2525, %v2525
      %v2921 = vmul.f32 %v2526, %v2526
      %v2922 = vmul.f32 %v2527, %v2527
      %v2923 = vmul.f32 %v2528, %v2528
      %v2924 = vmul.f32 %v2529, %v2529
      %v2925 = vmul.f32 %v2530, %v2530
      %v2926 = vmul.f32 %v2531, %v2531
      %v2927 = vmul.f32 %v2532, %v2532
      %v2928 = vmul.f32 %v2533, %v2533
      %v2929 = vmul.f32 %v2534, %v2534
      %v2930 = vmul.f32 %v2535, %v2535
      %v2931 = vmul.f32 %v2536, %v2536
      %v2932 = vmul.f32 %v2537, %v2537
      %v2933 = vmul.f32 %v2538, %v2538
      %v2934 = vmul.f32 %v2539, %v2539
      %v2935 = vmul.f32 %v2540, %v2540
      %v2936 = vmul.f32 %v2541, %v2541
      %v2937 = vmul.f32 %v2542, %v2542
      %v2938 = vmul.f32 %v2543, %v2543
      %v2939 = vmul.f32 %v2544, %v2544
      %v2940 = vmul.f32 %v2545, %v2545
      %v2941 = vmul.f32 %v2546, %v2546
      %v2942 = vmul.f32 %v2547, %v2547
      %v2943 = vmul.f32 %v2548, %v2548
      %v2944 = vmul.f32 %v2549, %v2549
      %v2945 = vmul.f32 %v2550, %v2550
      %v2946 = vmul.f32 %v2551, %v2551
      %v2947 = vmul.f32 %v2552, %v2552
      %v2948 = vmul.f32 %v2553, %v2553
      %v2949 = vmul.f32 %v2554, %v2554
      %v2950 = vmul.f32 %v2555, %v2555
      %v2951 = vmul.f32 %v2556, %v2556
      %v2952 = vmul.f32 %v2557, %v2557
      %v2953 = vmul.f32 %v2558, %v2558
      %v2954 = vmul.f32 %v2559, %v2559
      %v2955 = vmul.f32 %v2560, %v2560
      %v2956 = vmul.f32 %v2561, %v2561
      %v2957 = vmul.f32 %v2562, %v2562
      %v2958 = vmul.f32 %v2563, %v2563
      %v2959 = vmul.f32 %v2564, %v2564
      %v2960 = vmul.f32 %v2565, %v2565
      %v2961 = vmul.f32 %v2566, %v2566
      %v2962 = vmul.f32 %v2567, %v2567
      %v2963 = vmul.f32 %v2568, %v2568
      %v2964 = vmul.f32 %v2569, %v2569
      %v2965 = vmul.f32 %v2570, %v2570
      %v2966 = vmul.f32 %v2571, %v2571
      %v2967 = vmul.f32 %v2572, %v2572
      %v2968 = vmul.f32 %v2573, %v2573
      %v2969 = vmul.f32 %v2574, %v2574
      %v2970 = vmul.f32 %v2575, %v2575
      %v2971 = vmul.f32 %v2576, %v2576
      %v2972 = vmul.f32 %v2577, %v2577
      %v2973 = vmul.f32 %v2578, %v2578
      %v2974 = vmul.f32 %v2579, %v2579
      %v2975 = vmul.f32 %v2580, %v2580
      %v2976 = vmul.f32 %v2581, %v2581
      %v2977 = vmul.f32 %v2582, %v2582
      %v2978 = vmul.f32 %v2583, %v2583
      %v2979 = vmul.f32 %v2584, %v2584
      %v2980 = vmul.f32 %v2585, %v2585
      %v2981 = vmul.f32 %v2586, %v2586
      %v2982 = vmul.f32 %v2587, %v2587
      %v2983 = vmul.f32 %v2588, %v2588
      %v2984 = vmul.f32 %v2589, %v2589
      %v2985 = vmul.f32 %v2590, %v2590
      %v2986 = vmul.f32 %v2591, %v2591
      %v2987 = vmul.f32 %v2592, %v2592
      %v2988 = vmul.f32 %v2593, %v2593
      %v2989 = vmul.f32 %v2594, %v2594
      %v2990 = vmul.f32 %v2595, %v2595
      %v2991 = vmul.f32 %v2596, %v2596
      %v2992 = vmul.f32 %v2597, %v2597
      %v2993 = vmul.f32 %v2598, %v2598
      %v2994 = vmul.f32 %v2599, %v2599
      %v2995 = vmul.f32 %v2600, %v2600
      %v2996 = vmul.f32 %v2601, %v2601
      %v2997 = vmul.f32 %v2602, %v2602
      %v2998 = vmul.f32 %v2603, %v2603
      %v2999 = vmul.f32 %v2604, %v2604
      %v3000 = vmul.f32 %v2605, %v2605
      %v3001 = vmul.f32 %v2606, %v2606
      %v3002 = vmul.f32 %v2607, %v2607
      %v3003 = vmul.f32 %v2608, %v2608
      %v3004 = vmul.f32 %v2609, %v2609
      %v3005 = vmul.f32 %v2610, %v2610
      %v3006 = vmul.f32 %v2611, %v2611
      %v3007 = vmul.f32 %v2612, %v2612
      %v3008 = vmul.f32 %v2613, %v2613
      %v3009 = vmul.f32 %v2614, %v2614
      %v3010 = vmul.f32 %v2615, %v2615
      %v3011 = vmul.f32 %v2616, %v2616
      %v3012 = vmul.f32 %v2617, %v2617
      %v3013 = vmul.f32 %v2618, %v2618
      %v3014 = vmul.f32 %v2619, %v2619
      %v3015 = vmul.f32 %v2620, %v2620
      %v3016 = vmul.f32 %v2621, %v2621
      %v3017 = vmul.f32 %v2622, %v2622
      %v3018 = vmul.f32 %v2623, %v2623
      %v3019 = vmul.f32 %v2624, %v2624
      %v3020 = vmul.f32 %v2625, %v2625
      %v3021 = vmul.f32 %v2626, %v2626
      %v3022 = vmul.f32 %v2627, %v2627
      %v3023 = vadd.f32 %v2895, %v2896
      %v3024 = vadd.f32 %v3023, %v2897
      %v3025 = vadd.f32 %v3024, %v2898
      %v3026 = vadd.f32 %v3025, %v2899
      %v3027 = vadd.f32 %v3026, %v2900
      %v3028 = vadd.f32 %v3027, %v2901
      %v3029 = vadd.f32 %v3028, %v2902
      %v3030 = vadd.f32 %v3029, %v2903
      %v3031 = vadd.f32 %v3030, %v2904
      %v3032 = vadd.f32 %v3031, %v2905
      %v3033 = vadd.f32 %v3032, %v2906
      %v3034 = vadd.f32 %v3033, %v2907
      %v3035 = vadd.f32 %v3034, %v2908
      %v3036 = vadd.f32 %v3035, %v2909
      %v3037 = vadd.f32 %v3036, %v2910
      %v3038 = vadd.f32 %v3037, %v2911
      %v3039 = vadd.f32 %v3038, %v2912
      %v3040 = vadd.f32 %v3039, %v2913
      %v3041 = vadd.f32 %v3040, %v2914
      %v3042 = vadd.f32 %v3041, %v2915
      %v3043 = vadd.f32 %v3042, %v2916
      %v3044 = vadd.f32 %v3043, %v2917
      %v3045 = vadd.f32 %v3044, %v2918
      %v3046 = vadd.f32 %v3045, %v2919
      %v3047 = vadd.f32 %v3046, %v2920
      %v3048 = vadd.f32 %v3047, %v2921
      %v3049 = vadd.f32 %v3048, %v2922
      %v3050 = vadd.f32 %v3049, %v2923
      %v3051 = vadd.f32 %v3050, %v2924
      %v3052 = vadd.f32 %v3051, %v2925
      %v3053 = vadd.f32 %v3052, %v2926
      %v3054 = vadd.f32 %v3053, %v2927
      %v3055 = vadd.f32 %v3054, %v2928
      %v3056 = vadd.f32 %v3055, %v2929
      %v3057 = vadd.f32 %v3056, %v2930
      %v3058 = vadd.f32 %v3057, %v2931
      %v3059 = vadd.f32 %v3058, %v2932
      %v3060 = vadd.f32 %v3059, %v2933
      %v3061 = vadd.f32 %v3060, %v2934
      %v3062 = vadd.f32 %v3061, %v2935
      %v3063 = vadd.f32 %v3062, %v2936
      %v3064 = vadd.f32 %v3063, %v2937
      %v3065 = vadd.f32 %v3064, %v2938
      %v3066 = vadd.f32 %v3065, %v2939
      %v3067 = vadd.f32 %v3066, %v2940
      %v3068 = vadd.f32 %v3067, %v2941
      %v3069 = vadd.f32 %v3068, %v2942
      %v3070 = vadd.f32 %v3069, %v2943
      %v3071 = vadd.f32 %v3070, %v2944
      %v3072 = vadd.f32 %v3071, %v2945
      %v3073 = vadd.f32 %v3072, %v2946
      %v3074 = vadd.f32 %v3073, %v2947
      %v3075 = vadd.f32 %v3074, %v2948
      %v3076 = vadd.f32 %v3075, %v2949
      %v3077 = vadd.f32 %v3076, %v2950
      %v3078 = vadd.f32 %v3077, %v2951
      %v3079 = vadd.f32 %v3078, %v2952
      %v3080 = vadd.f32 %v3079, %v2953
      %v3081 = vadd.f32 %v3080, %v2954
      %v3082 = vadd.f32 %v3081, %v2955
      %v3083 = vadd.f32 %v3082, %v2956
      %v3084 = vadd.f32 %v3083, %v2957
      %v3085 = vadd.f32 %v3084, %v2958
      %v3086 = vadd.f32 %v3085, %v2959
      %v3087 = vadd.f32 %v3086, %v2960
      %v3088 = vadd.f32 %v3087, %v2961
      %v3089 = vadd.f32 %v3088, %v2962
      %v3090 = vadd.f32 %v3089, %v2963
      %v3091 = vadd.f32 %v3090, %v2964
      %v3092 = vadd.f32 %v3091, %v2965
      %v3093 = vadd.f32 %v3092, %v2966
      %v3094 = vadd.f32 %v3093, %v2967
      %v3095 = vadd.f32 %v3094, %v2968
      %v3096 = vadd.f32 %v3095, %v2969
      %v3097 = vadd.f32 %v3096, %v2970
      %v3098 = vadd.f32 %v3097, %v2971
      %v3099 = vadd.f32 %v3098, %v2972
      %v3100 = vadd.f32 %v3099, %v2973
      %v3101 = vadd.f32 %v3100, %v2974
      %v3102 = vadd.f32 %v3101, %v2975
      %v3103 = vadd.f32 %v3102, %v2976
      %v3104 = vadd.f32 %v3103, %v2977
      %v3105 = vadd.f32 %v3104, %v2978
      %v3106 = vadd.f32 %v3105, %v2979
      %v3107 = vadd.f32 %v3106, %v2980
      %v3108 = vadd.f32 %v3107, %v2981
      %v3109 = vadd.f32 %v3108, %v2982
      %v3110 = vadd.f32 %v3109, %v2983
      %v3111 = vadd.f32 %v3110, %v2984
      %v3112 = vadd.f32 %v3111, %v2985
      %v3113 = vadd.f32 %v3112, %v2986
      %v3114 = vadd.f32 %v3113, %v2987
      %v3115 = vadd.f32 %v3114, %v2988
      %v3116 = vadd.f32 %v3115, %v2989
      %v3117 = vadd.f32 %v3116, %v2990
      %v3118 = vadd.f32 %v3117, %v2991
      %v3119 = vadd.f32 %v3118, %v2992
      %v3120 = vadd.f32 %v3119, %v2993
      %v3121 = vadd.f32 %v3120, %v2994
      %v3122 = vadd.f32 %v3121, %v2995
      %v3123 = vadd.f32 %v3122, %v2996
      %v3124 = vadd.f32 %v3123, %v2997
      %v3125 = vadd.f32 %v3124, %v2998
      %v3126 = vadd.f32 %v3125, %v2999
      %v3127 = vadd.f32 %v3126, %v3000
      %v3128 = vadd.f32 %v3127, %v3001
      %v3129 = vadd.f32 %v3128, %v3002
      %v3130 = vadd.f32 %v3129, %v3003
      %v3131 = vadd.f32 %v3130, %v3004
      %v3132 = vadd.f32 %v3131, %v3005
      %v3133 = vadd.f32 %v3132, %v3006
      %v3134 = vadd.f32 %v3133, %v3007
      %v3135 = vadd.f32 %v3134, %v3008
      %v3136 = vadd.f32 %v3135, %v3009
      %v3137 = vadd.f32 %v3136, %v3010
      %v3138 = vadd.f32 %v3137, %v3011
      %v3139 = vadd.f32 %v3138, %v3012
      %v3140 = vadd.f32 %v3139, %v3013
      %v3141 = vadd.f32 %v3140, %v3014
      %v3142 = vadd.f32 %v3141, %v3015
      %v3143 = vadd.f32 %v3142, %v3016
      %v3144 = vadd.f32 %v3143, %v3017
      %v3145 = vadd.f32 %v3144, %v3018
      %v3146 = vadd.f32 %v3145, %v3019
      %v3147 = vadd.f32 %v3146, %v3020
      %v3148 = vadd.f32 %v3147, %v3021
      %v3149 = vadd.f32 %v3148, %v3022
      %v3150 = vrot.slane %v3149, 4
      %v3151 = vadd.f32 %v3149, %v3150
      %v3152 = vrot.slane %v3151, 2
      %v3153 = vadd.f32 %v3151, %v3152
      %v3154 = vrot.slane %v3153, 1
      %v3155 = vadd.f32 %v3153, %v3154
      %v3156 = vadd.f32 %v2894, %v3155
      %3157 = vst [vmem:[#allocation3] sm:$0x1] %v3156
      %p3158 = scmp.eq.s32.totalorder %s13, 1
      // Predicated region
      $region33: #{sn_gated_deconv2d_forward.1} parent=27 // pred_check
        %p3159 = pneg %p3158
      $region34: #{sn_gated_deconv2d_forward.1} parent=27 // pred_check_branch
        %3161 = sbr.rel (%p3159) target = $region36
      $region35: #{sn_gated_deconv2d_forward.1} parent=27 // pred_region
        %v3162 = vld [vmem:[#allocation2] sm:$0x1]
        %v3163 = vmul.f32 %v3162, 0.00048828125
        %v3164 = vld [vmem:[#allocation3] sm:$0x1]
        %v3165 = vmul.f32 %v3164, 0.00048828125
        %v3166 = vmul.f32 %v3163, %v3163
        %v3167 = vsub.f32 %v3165, %v3166
        %v3168 = vadd.f32 %v3167, 1e-05
        %v3169 = vrsqrt.pop %v3168
        %v3170 = vlaneseq
        %v3171 = vand.u32 %v3170, 127
        %vm3172 = vcmp.lt.s32.totalorder %v3171, 8
        %v3173 = vsel %vm3172, %v3169, 0.0
        %v3174 = vsub.f32 0.0, %v3163
        %v3175 = vmul.f32 %v3174, %v3169
        %v3176 = vsel %vm3172, %v3175, 0.0
        %v3177 = vld [vmem:[%s2] sm:$0xff]
        %v3178 = vld [vmem:[%s2 + $0x8] sm:$0xff]
        %v3179 = vld [vmem:[%s2 + $0x10] sm:$0xff]
        %v3180 = vld [vmem:[%s2 + $0x18] sm:$0xff]
        %v3181 = vld [vmem:[%s2 + $0x20] sm:$0xff]
        %v3182 = vld [vmem:[%s2 + $0x28] sm:$0xff]
        %v3183 = vld [vmem:[%s2 + $0x30] sm:$0xff]
        %v3184 = vld [vmem:[%s2 + $0x38] sm:$0xff]
        %v3185 = vld [vmem:[%s2 + $0x40] sm:$0xff]
        %v3186 = vld [vmem:[%s2 + $0x48] sm:$0xff]
        %v3187 = vld [vmem:[%s2 + $0x50] sm:$0xff]
        %v3188 = vld [vmem:[%s2 + $0x58] sm:$0xff]
        %v3189 = vld [vmem:[%s2 + $0x60] sm:$0xff]
        %v3190 = vld [vmem:[%s2 + $0x68] sm:$0xff]
        %v3191 = vld [vmem:[%s2 + $0x70] sm:$0xff]
        %v3192 = vld [vmem:[%s2 + $0x78] sm:$0xff]
        %v3193 = vld [vmem:[%s2 + $0x80] sm:$0xff]
        %v3194 = vld [vmem:[%s2 + $0x88] sm:$0xff]
        %v3195 = vld [vmem:[%s2 + $0x90] sm:$0xff]
        %v3196 = vld [vmem:[%s2 + $0x98] sm:$0xff]
        %v3197 = vld [vmem:[%s2 + $0xa0] sm:$0xff]
        %v3198 = vld [vmem:[%s2 + $0xa8] sm:$0xff]
        %v3199 = vld [vmem:[%s2 + $0xb0] sm:$0xff]
        %v3200 = vld [vmem:[%s2 + $0xb8] sm:$0xff]
        %v3201 = vld [vmem:[%s2 + $0xc0] sm:$0xff]
        %v3202 = vld [vmem:[%s2 + $0xc8] sm:$0xff]
        %v3203 = vld [vmem:[%s2 + $0xd0] sm:$0xff]
        %v3204 = vld [vmem:[%s2 + $0xd8] sm:$0xff]
        %v3205 = vld [vmem:[%s2 + $0xe0] sm:$0xff]
        %v3206 = vld [vmem:[%s2 + $0xe8] sm:$0xff]
        %v3207 = vld [vmem:[%s2 + $0xf0] sm:$0xff]
        %v3208 = vld [vmem:[%s2 + $0xf8] sm:$0xff]
        %v3209 = vld [vmem:[%s2 + $0x100] sm:$0xff]
        %v3210 = vld [vmem:[%s2 + $0x108] sm:$0xff]
        %v3211 = vld [vmem:[%s2 + $0x110] sm:$0xff]
        %v3212 = vld [vmem:[%s2 + $0x118] sm:$0xff]
        %v3213 = vld [vmem:[%s2 + $0x120] sm:$0xff]
        %v3214 = vld [vmem:[%s2 + $0x128] sm:$0xff]
        %v3215 = vld [vmem:[%s2 + $0x130] sm:$0xff]
        %v3216 = vld [vmem:[%s2 + $0x138] sm:$0xff]
        %v3217 = vld [vmem:[%s2 + $0x140] sm:$0xff]
        %v3218 = vld [vmem:[%s2 + $0x148] sm:$0xff]
        %v3219 = vld [vmem:[%s2 + $0x150] sm:$0xff]
        %v3220 = vld [vmem:[%s2 + $0x158] sm:$0xff]
        %v3221 = vld [vmem:[%s2 + $0x160] sm:$0xff]
        %v3222 = vld [vmem:[%s2 + $0x168] sm:$0xff]
        %v3223 = vld [vmem:[%s2 + $0x170] sm:$0xff]
        %v3224 = vld [vmem:[%s2 + $0x178] sm:$0xff]
        %v3225 = vld [vmem:[%s2 + $0x180] sm:$0xff]
        %v3226 = vld [vmem:[%s2 + $0x188] sm:$0xff]
        %v3227 = vld [vmem:[%s2 + $0x190] sm:$0xff]
        %v3228 = vld [vmem:[%s2 + $0x198] sm:$0xff]
        %v3229 = vld [vmem:[%s2 + $0x1a0] sm:$0xff]
        %v3230 = vld [vmem:[%s2 + $0x1a8] sm:$0xff]
        %v3231 = vld [vmem:[%s2 + $0x1b0] sm:$0xff]
        %v3232 = vld [vmem:[%s2 + $0x1b8] sm:$0xff]
        %v3233 = vld [vmem:[%s2 + $0x1c0] sm:$0xff]
        %v3234 = vld [vmem:[%s2 + $0x1c8] sm:$0xff]
        %v3235 = vld [vmem:[%s2 + $0x1d0] sm:$0xff]
        %v3236 = vld [vmem:[%s2 + $0x1d8] sm:$0xff]
        %v3237 = vld [vmem:[%s2 + $0x1e0] sm:$0xff]
        %v3238 = vld [vmem:[%s2 + $0x1e8] sm:$0xff]
        %v3239 = vld [vmem:[%s2 + $0x1f0] sm:$0xff]
        %v3240 = vld [vmem:[%s2 + $0x1f8] sm:$0xff]
        %v3241 = vld [vmem:[%s2 + $0x200] sm:$0xff]
        %v3242 = vld [vmem:[%s2 + $0x208] sm:$0xff]
        %v3243 = vld [vmem:[%s2 + $0x210] sm:$0xff]
        %v3244 = vld [vmem:[%s2 + $0x218] sm:$0xff]
        %v3245 = vld [vmem:[%s2 + $0x220] sm:$0xff]
        %v3246 = vld [vmem:[%s2 + $0x228] sm:$0xff]
        %v3247 = vld [vmem:[%s2 + $0x230] sm:$0xff]
        %v3248 = vld [vmem:[%s2 + $0x238] sm:$0xff]
        %v3249 = vld [vmem:[%s2 + $0x240] sm:$0xff]
        %v3250 = vld [vmem:[%s2 + $0x248] sm:$0xff]
        %v3251 = vld [vmem:[%s2 + $0x250] sm:$0xff]
        %v3252 = vld [vmem:[%s2 + $0x258] sm:$0xff]
        %v3253 = vld [vmem:[%s2 + $0x260] sm:$0xff]
        %v3254 = vld [vmem:[%s2 + $0x268] sm:$0xff]
        %v3255 = vld [vmem:[%s2 + $0x270] sm:$0xff]
        %v3256 = vld [vmem:[%s2 + $0x278] sm:$0xff]
        %v3257 = vld [vmem:[%s2 + $0x280] sm:$0xff]
        %v3258 = vld [vmem:[%s2 + $0x288] sm:$0xff]
        %v3259 = vld [vmem:[%s2 + $0x290] sm:$0xff]
        %v3260 = vld [vmem:[%s2 + $0x298] sm:$0xff]
        %v3261 = vld [vmem:[%s2 + $0x2a0] sm:$0xff]
        %v3262 = vld [vmem:[%s2 + $0x2a8] sm:$0xff]
        %v3263 = vld [vmem:[%s2 + $0x2b0] sm:$0xff]
        %v3264 = vld [vmem:[%s2 + $0x2b8] sm:$0xff]
        %v3265 = vld [vmem:[%s2 + $0x2c0] sm:$0xff]
        %v3266 = vld [vmem:[%s2 + $0x2c8] sm:$0xff]
        %v3267 = vld [vmem:[%s2 + $0x2d0] sm:$0xff]
        %v3268 = vld [vmem:[%s2 + $0x2d8] sm:$0xff]
        %v3269 = vld [vmem:[%s2 + $0x2e0] sm:$0xff]
        %v3270 = vld [vmem:[%s2 + $0x2e8] sm:$0xff]
        %v3271 = vld [vmem:[%s2 + $0x2f0] sm:$0xff]
        %v3272 = vld [vmem:[%s2 + $0x2f8] sm:$0xff]
        %v3273 = vld [vmem:[%s2 + $0x300] sm:$0xff]
        %v3274 = vld [vmem:[%s2 + $0x308] sm:$0xff]
        %v3275 = vld [vmem:[%s2 + $0x310] sm:$0xff]
        %v3276 = vld [vmem:[%s2 + $0x318] sm:$0xff]
        %v3277 = vld [vmem:[%s2 + $0x320] sm:$0xff]
        %v3278 = vld [vmem:[%s2 + $0x328] sm:$0xff]
        %v3279 = vld [vmem:[%s2 + $0x330] sm:$0xff]
        %v3280 = vld [vmem:[%s2 + $0x338] sm:$0xff]
        %v3281 = vld [vmem:[%s2 + $0x340] sm:$0xff]
        %v3282 = vld [vmem:[%s2 + $0x348] sm:$0xff]
        %v3283 = vld [vmem:[%s2 + $0x350] sm:$0xff]
        %v3284 = vld [vmem:[%s2 + $0x358] sm:$0xff]
        %v3285 = vld [vmem:[%s2 + $0x360] sm:$0xff]
        %v3286 = vld [vmem:[%s2 + $0x368] sm:$0xff]
        %v3287 = vld [vmem:[%s2 + $0x370] sm:$0xff]
        %v3288 = vld [vmem:[%s2 + $0x378] sm:$0xff]
        %v3289 = vld [vmem:[%s2 + $0x380] sm:$0xff]
        %v3290 = vld [vmem:[%s2 + $0x388] sm:$0xff]
        %v3291 = vld [vmem:[%s2 + $0x390] sm:$0xff]
        %v3292 = vld [vmem:[%s2 + $0x398] sm:$0xff]
        %v3293 = vld [vmem:[%s2 + $0x3a0] sm:$0xff]
        %v3294 = vld [vmem:[%s2 + $0x3a8] sm:$0xff]
        %v3295 = vld [vmem:[%s2 + $0x3b0] sm:$0xff]
        %v3296 = vld [vmem:[%s2 + $0x3b8] sm:$0xff]
        %v3297 = vld [vmem:[%s2 + $0x3c0] sm:$0xff]
        %v3298 = vld [vmem:[%s2 + $0x3c8] sm:$0xff]
        %v3299 = vld [vmem:[%s2 + $0x3d0] sm:$0xff]
        %v3300 = vld [vmem:[%s2 + $0x3d8] sm:$0xff]
        %v3301 = vld [vmem:[%s2 + $0x3e0] sm:$0xff]
        %v3302 = vld [vmem:[%s2 + $0x3e8] sm:$0xff]
        %v3303 = vld [vmem:[%s2 + $0x3f0] sm:$0xff]
        %v3304 = vld [vmem:[%s2 + $0x3f8] sm:$0xff]
        %v3305 = vld [vmem:[%s2 + $0x400] sm:$0xff]
        %v3306 = vld [vmem:[%s2 + $0x408] sm:$0xff]
        %v3307 = vld [vmem:[%s2 + $0x410] sm:$0xff]
        %v3308 = vld [vmem:[%s2 + $0x418] sm:$0xff]
        %v3309 = vld [vmem:[%s2 + $0x420] sm:$0xff]
        %v3310 = vld [vmem:[%s2 + $0x428] sm:$0xff]
        %v3311 = vld [vmem:[%s2 + $0x430] sm:$0xff]
        %v3312 = vld [vmem:[%s2 + $0x438] sm:$0xff]
        %v3313 = vld [vmem:[%s2 + $0x440] sm:$0xff]
        %v3314 = vld [vmem:[%s2 + $0x448] sm:$0xff]
        %v3315 = vld [vmem:[%s2 + $0x450] sm:$0xff]
        %v3316 = vld [vmem:[%s2 + $0x458] sm:$0xff]
        %v3317 = vld [vmem:[%s2 + $0x460] sm:$0xff]
        %v3318 = vld [vmem:[%s2 + $0x468] sm:$0xff]
        %v3319 = vld [vmem:[%s2 + $0x470] sm:$0xff]
        %v3320 = vld [vmem:[%s2 + $0x478] sm:$0xff]
        %v3321 = vld [vmem:[%s2 + $0x480] sm:$0xff]
        %v3322 = vld [vmem:[%s2 + $0x488] sm:$0xff]
        %v3323 = vld [vmem:[%s2 + $0x490] sm:$0xff]
        %v3324 = vld [vmem:[%s2 + $0x498] sm:$0xff]
        %v3325 = vld [vmem:[%s2 + $0x4a0] sm:$0xff]
        %v3326 = vld [vmem:[%s2 + $0x4a8] sm:$0xff]
        %v3327 = vld [vmem:[%s2 + $0x4b0] sm:$0xff]
        %v3328 = vld [vmem:[%s2 + $0x4b8] sm:$0xff]
        %v3329 = vld [vmem:[%s2 + $0x4c0] sm:$0xff]
        %v3330 = vld [vmem:[%s2 + $0x4c8] sm:$0xff]
        %v3331 = vld [vmem:[%s2 + $0x4d0] sm:$0xff]
        %v3332 = vld [vmem:[%s2 + $0x4d8] sm:$0xff]
        %v3333 = vld [vmem:[%s2 + $0x4e0] sm:$0xff]
        %v3334 = vld [vmem:[%s2 + $0x4e8] sm:$0xff]
        %v3335 = vld [vmem:[%s2 + $0x4f0] sm:$0xff]
        %v3336 = vld [vmem:[%s2 + $0x4f8] sm:$0xff]
        %v3337 = vld [vmem:[%s2 + $0x500] sm:$0xff]
        %v3338 = vld [vmem:[%s2 + $0x508] sm:$0xff]
        %v3339 = vld [vmem:[%s2 + $0x510] sm:$0xff]
        %v3340 = vld [vmem:[%s2 + $0x518] sm:$0xff]
        %v3341 = vld [vmem:[%s2 + $0x520] sm:$0xff]
        %v3342 = vld [vmem:[%s2 + $0x528] sm:$0xff]
        %v3343 = vld [vmem:[%s2 + $0x530] sm:$0xff]
        %v3344 = vld [vmem:[%s2 + $0x538] sm:$0xff]
        %v3345 = vld [vmem:[%s2 + $0x540] sm:$0xff]
        %v3346 = vld [vmem:[%s2 + $0x548] sm:$0xff]
        %v3347 = vld [vmem:[%s2 + $0x550] sm:$0xff]
        %v3348 = vld [vmem:[%s2 + $0x558] sm:$0xff]
        %v3349 = vld [vmem:[%s2 + $0x560] sm:$0xff]
        %v3350 = vld [vmem:[%s2 + $0x568] sm:$0xff]
        %v3351 = vld [vmem:[%s2 + $0x570] sm:$0xff]
        %v3352 = vld [vmem:[%s2 + $0x578] sm:$0xff]
        %v3353 = vld [vmem:[%s2 + $0x580] sm:$0xff]
        %v3354 = vld [vmem:[%s2 + $0x588] sm:$0xff]
        %v3355 = vld [vmem:[%s2 + $0x590] sm:$0xff]
        %v3356 = vld [vmem:[%s2 + $0x598] sm:$0xff]
        %v3357 = vld [vmem:[%s2 + $0x5a0] sm:$0xff]
        %v3358 = vld [vmem:[%s2 + $0x5a8] sm:$0xff]
        %v3359 = vld [vmem:[%s2 + $0x5b0] sm:$0xff]
        %v3360 = vld [vmem:[%s2 + $0x5b8] sm:$0xff]
        %v3361 = vld [vmem:[%s2 + $0x5c0] sm:$0xff]
        %v3362 = vld [vmem:[%s2 + $0x5c8] sm:$0xff]
        %v3363 = vld [vmem:[%s2 + $0x5d0] sm:$0xff]
        %v3364 = vld [vmem:[%s2 + $0x5d8] sm:$0xff]
        %v3365 = vld [vmem:[%s2 + $0x5e0] sm:$0xff]
        %v3366 = vld [vmem:[%s2 + $0x5e8] sm:$0xff]
        %v3367 = vld [vmem:[%s2 + $0x5f0] sm:$0xff]
        %v3368 = vld [vmem:[%s2 + $0x5f8] sm:$0xff]
        %v3369 = vld [vmem:[%s2 + $0x600] sm:$0xff]
        %v3370 = vld [vmem:[%s2 + $0x608] sm:$0xff]
        %v3371 = vld [vmem:[%s2 + $0x610] sm:$0xff]
        %v3372 = vld [vmem:[%s2 + $0x618] sm:$0xff]
        %v3373 = vld [vmem:[%s2 + $0x620] sm:$0xff]
        %v3374 = vld [vmem:[%s2 + $0x628] sm:$0xff]
        %v3375 = vld [vmem:[%s2 + $0x630] sm:$0xff]
        %v3376 = vld [vmem:[%s2 + $0x638] sm:$0xff]
        %v3377 = vld [vmem:[%s2 + $0x640] sm:$0xff]
        %v3378 = vld [vmem:[%s2 + $0x648] sm:$0xff]
        %v3379 = vld [vmem:[%s2 + $0x650] sm:$0xff]
        %v3380 = vld [vmem:[%s2 + $0x658] sm:$0xff]
        %v3381 = vld [vmem:[%s2 + $0x660] sm:$0xff]
        %v3382 = vld [vmem:[%s2 + $0x668] sm:$0xff]
        %v3383 = vld [vmem:[%s2 + $0x670] sm:$0xff]
        %v3384 = vld [vmem:[%s2 + $0x678] sm:$0xff]
        %v3385 = vld [vmem:[%s2 + $0x680] sm:$0xff]
        %v3386 = vld [vmem:[%s2 + $0x688] sm:$0xff]
        %v3387 = vld [vmem:[%s2 + $0x690] sm:$0xff]
        %v3388 = vld [vmem:[%s2 + $0x698] sm:$0xff]
        %v3389 = vld [vmem:[%s2 + $0x6a0] sm:$0xff]
        %v3390 = vld [vmem:[%s2 + $0x6a8] sm:$0xff]
        %v3391 = vld [vmem:[%s2 + $0x6b0] sm:$0xff]
        %v3392 = vld [vmem:[%s2 + $0x6b8] sm:$0xff]
        %v3393 = vld [vmem:[%s2 + $0x6c0] sm:$0xff]
        %v3394 = vld [vmem:[%s2 + $0x6c8] sm:$0xff]
        %v3395 = vld [vmem:[%s2 + $0x6d0] sm:$0xff]
        %v3396 = vld [vmem:[%s2 + $0x6d8] sm:$0xff]
        %v3397 = vld [vmem:[%s2 + $0x6e0] sm:$0xff]
        %v3398 = vld [vmem:[%s2 + $0x6e8] sm:$0xff]
        %v3399 = vld [vmem:[%s2 + $0x6f0] sm:$0xff]
        %v3400 = vld [vmem:[%s2 + $0x6f8] sm:$0xff]
        %v3401 = vld [vmem:[%s2 + $0x700] sm:$0xff]
        %v3402 = vld [vmem:[%s2 + $0x708] sm:$0xff]
        %v3403 = vld [vmem:[%s2 + $0x710] sm:$0xff]
        %v3404 = vld [vmem:[%s2 + $0x718] sm:$0xff]
        %v3405 = vld [vmem:[%s2 + $0x720] sm:$0xff]
        %v3406 = vld [vmem:[%s2 + $0x728] sm:$0xff]
        %v3407 = vld [vmem:[%s2 + $0x730] sm:$0xff]
        %v3408 = vld [vmem:[%s2 + $0x738] sm:$0xff]
        %v3409 = vld [vmem:[%s2 + $0x740] sm:$0xff]
        %v3410 = vld [vmem:[%s2 + $0x748] sm:$0xff]
        %v3411 = vld [vmem:[%s2 + $0x750] sm:$0xff]
        %v3412 = vld [vmem:[%s2 + $0x758] sm:$0xff]
        %v3413 = vld [vmem:[%s2 + $0x760] sm:$0xff]
        %v3414 = vld [vmem:[%s2 + $0x768] sm:$0xff]
        %v3415 = vld [vmem:[%s2 + $0x770] sm:$0xff]
        %v3416 = vld [vmem:[%s2 + $0x778] sm:$0xff]
        %v3417 = vld [vmem:[%s2 + $0x780] sm:$0xff]
        %v3418 = vld [vmem:[%s2 + $0x788] sm:$0xff]
        %v3419 = vld [vmem:[%s2 + $0x790] sm:$0xff]
        %v3420 = vld [vmem:[%s2 + $0x798] sm:$0xff]
        %v3421 = vld [vmem:[%s2 + $0x7a0] sm:$0xff]
        %v3422 = vld [vmem:[%s2 + $0x7a8] sm:$0xff]
        %v3423 = vld [vmem:[%s2 + $0x7b0] sm:$0xff]
        %v3424 = vld [vmem:[%s2 + $0x7b8] sm:$0xff]
        %v3425 = vld [vmem:[%s2 + $0x7c0] sm:$0xff]
        %v3426 = vld [vmem:[%s2 + $0x7c8] sm:$0xff]
        %v3427 = vld [vmem:[%s2 + $0x7d0] sm:$0xff]
        %v3428 = vld [vmem:[%s2 + $0x7d8] sm:$0xff]
        %v3429 = vld [vmem:[%s2 + $0x7e0] sm:$0xff]
        %v3430 = vld [vmem:[%s2 + $0x7e8] sm:$0xff]
        %v3431 = vld [vmem:[%s2 + $0x7f0] sm:$0xff]
        %v3432 = vld [vmem:[%s2 + $0x7f8] sm:$0xff]
        %v3433 = vlaneseq
        %v3434 = vshrl.u32 %v3433, 7
        %v3435 = vsub.s32 0, %v3434
        %v3436 = vrot.slane %v3173, %v3435
        %v3437 = vmul.f32 %v3177, %v3436
        %v3438 = vmul.f32 %v3178, %v3436
        %v3439 = vmul.f32 %v3179, %v3436
        %v3440 = vmul.f32 %v3180, %v3436
        %v3441 = vmul.f32 %v3181, %v3436
        %v3442 = vmul.f32 %v3182, %v3436
        %v3443 = vmul.f32 %v3183, %v3436
        %v3444 = vmul.f32 %v3184, %v3436
        %v3445 = vmul.f32 %v3185, %v3436
        %v3446 = vmul.f32 %v3186, %v3436
        %v3447 = vmul.f32 %v3187, %v3436
        %v3448 = vmul.f32 %v3188, %v3436
        %v3449 = vmul.f32 %v3189, %v3436
        %v3450 = vmul.f32 %v3190, %v3436
        %v3451 = vmul.f32 %v3191, %v3436
        %v3452 = vmul.f32 %v3192, %v3436
        %v3453 = vmul.f32 %v3193, %v3436
        %v3454 = vmul.f32 %v3194, %v3436
        %v3455 = vmul.f32 %v3195, %v3436
        %v3456 = vmul.f32 %v3196, %v3436
        %v3457 = vmul.f32 %v3197, %v3436
        %v3458 = vmul.f32 %v3198, %v3436
        %v3459 = vmul.f32 %v3199, %v3436
        %v3460 = vmul.f32 %v3200, %v3436
        %v3461 = vmul.f32 %v3201, %v3436
        %v3462 = vmul.f32 %v3202, %v3436
        %v3463 = vmul.f32 %v3203, %v3436
        %v3464 = vmul.f32 %v3204, %v3436
        %v3465 = vmul.f32 %v3205, %v3436
        %v3466 = vmul.f32 %v3206, %v3436
        %v3467 = vmul.f32 %v3207, %v3436
        %v3468 = vmul.f32 %v3208, %v3436
        %v3469 = vmul.f32 %v3209, %v3436
        %v3470 = vmul.f32 %v3210, %v3436
        %v3471 = vmul.f32 %v3211, %v3436
        %v3472 = vmul.f32 %v3212, %v3436
        %v3473 = vmul.f32 %v3213, %v3436
        %v3474 = vmul.f32 %v3214, %v3436
        %v3475 = vmul.f32 %v3215, %v3436
        %v3476 = vmul.f32 %v3216, %v3436
        %v3477 = vmul.f32 %v3217, %v3436
        %v3478 = vmul.f32 %v3218, %v3436
        %v3479 = vmul.f32 %v3219, %v3436
        %v3480 = vmul.f32 %v3220, %v3436
        %v3481 = vmul.f32 %v3221, %v3436
        %v3482 = vmul.f32 %v3222, %v3436
        %v3483 = vmul.f32 %v3223, %v3436
        %v3484 = vmul.f32 %v3224, %v3436
        %v3485 = vmul.f32 %v3225, %v3436
        %v3486 = vmul.f32 %v3226, %v3436
        %v3487 = vmul.f32 %v3227, %v3436
        %v3488 = vmul.f32 %v3228, %v3436
        %v3489 = vmul.f32 %v3229, %v3436
        %v3490 = vmul.f32 %v3230, %v3436
        %v3491 = vmul.f32 %v3231, %v3436
        %v3492 = vmul.f32 %v3232, %v3436
        %v3493 = vmul.f32 %v3233, %v3436
        %v3494 = vmul.f32 %v3234, %v3436
        %v3495 = vmul.f32 %v3235, %v3436
        %v3496 = vmul.f32 %v3236, %v3436
        %v3497 = vmul.f32 %v3237, %v3436
        %v3498 = vmul.f32 %v3238, %v3436
        %v3499 = vmul.f32 %v3239, %v3436
        %v3500 = vmul.f32 %v3240, %v3436
        %v3501 = vmul.f32 %v3241, %v3436
        %v3502 = vmul.f32 %v3242, %v3436
        %v3503 = vmul.f32 %v3243, %v3436
        %v3504 = vmul.f32 %v3244, %v3436
        %v3505 = vmul.f32 %v3245, %v3436
        %v3506 = vmul.f32 %v3246, %v3436
        %v3507 = vmul.f32 %v3247, %v3436
        %v3508 = vmul.f32 %v3248, %v3436
        %v3509 = vmul.f32 %v3249, %v3436
        %v3510 = vmul.f32 %v3250, %v3436
        %v3511 = vmul.f32 %v3251, %v3436
        %v3512 = vmul.f32 %v3252, %v3436
        %v3513 = vmul.f32 %v3253, %v3436
        %v3514 = vmul.f32 %v3254, %v3436
        %v3515 = vmul.f32 %v3255, %v3436
        %v3516 = vmul.f32 %v3256, %v3436
        %v3517 = vmul.f32 %v3257, %v3436
        %v3518 = vmul.f32 %v3258, %v3436
        %v3519 = vmul.f32 %v3259, %v3436
        %v3520 = vmul.f32 %v3260, %v3436
        %v3521 = vmul.f32 %v3261, %v3436
        %v3522 = vmul.f32 %v3262, %v3436
        %v3523 = vmul.f32 %v3263, %v3436
        %v3524 = vmul.f32 %v3264, %v3436
        %v3525 = vmul.f32 %v3265, %v3436
        %v3526 = vmul.f32 %v3266, %v3436
        %v3527 = vmul.f32 %v3267, %v3436
        %v3528 = vmul.f32 %v3268, %v3436
        %v3529 = vmul.f32 %v3269, %v3436
        %v3530 = vmul.f32 %v3270, %v3436
        %v3531 = vmul.f32 %v3271, %v3436
        %v3532 = vmul.f32 %v3272, %v3436
        %v3533 = vmul.f32 %v3273, %v3436
        %v3534 = vmul.f32 %v3274, %v3436
        %v3535 = vmul.f32 %v3275, %v3436
        %v3536 = vmul.f32 %v3276, %v3436
        %v3537 = vmul.f32 %v3277, %v3436
        %v3538 = vmul.f32 %v3278, %v3436
        %v3539 = vmul.f32 %v3279, %v3436
        %v3540 = vmul.f32 %v3280, %v3436
        %v3541 = vmul.f32 %v3281, %v3436
        %v3542 = vmul.f32 %v3282, %v3436
        %v3543 = vmul.f32 %v3283, %v3436
        %v3544 = vmul.f32 %v3284, %v3436
        %v3545 = vmul.f32 %v3285, %v3436
        %v3546 = vmul.f32 %v3286, %v3436
        %v3547 = vmul.f32 %v3287, %v3436
        %v3548 = vmul.f32 %v3288, %v3436
        %v3549 = vmul.f32 %v3289, %v3436
        %v3550 = vmul.f32 %v3290, %v3436
        %v3551 = vmul.f32 %v3291, %v3436
        %v3552 = vmul.f32 %v3292, %v3436
        %v3553 = vmul.f32 %v3293, %v3436
        %v3554 = vmul.f32 %v3294, %v3436
        %v3555 = vmul.f32 %v3295, %v3436
        %v3556 = vmul.f32 %v3296, %v3436
        %v3557 = vmul.f32 %v3297, %v3436
        %v3558 = vmul.f32 %v3298, %v3436
        %v3559 = vmul.f32 %v3299, %v3436
        %v3560 = vmul.f32 %v3300, %v3436
        %v3561 = vmul.f32 %v3301, %v3436
        %v3562 = vmul.f32 %v3302, %v3436
        %v3563 = vmul.f32 %v3303, %v3436
        %v3564 = vmul.f32 %v3304, %v3436
        %v3565 = vmul.f32 %v3305, %v3436
        %v3566 = vmul.f32 %v3306, %v3436
        %v3567 = vmul.f32 %v3307, %v3436
        %v3568 = vmul.f32 %v3308, %v3436
        %v3569 = vmul.f32 %v3309, %v3436
        %v3570 = vmul.f32 %v3310, %v3436
        %v3571 = vmul.f32 %v3311, %v3436
        %v3572 = vmul.f32 %v3312, %v3436
        %v3573 = vmul.f32 %v3313, %v3436
        %v3574 = vmul.f32 %v3314, %v3436
        %v3575 = vmul.f32 %v3315, %v3436
        %v3576 = vmul.f32 %v3316, %v3436
        %v3577 = vmul.f32 %v3317, %v3436
        %v3578 = vmul.f32 %v3318, %v3436
        %v3579 = vmul.f32 %v3319, %v3436
        %v3580 = vmul.f32 %v3320, %v3436
        %v3581 = vmul.f32 %v3321, %v3436
        %v3582 = vmul.f32 %v3322, %v3436
        %v3583 = vmul.f32 %v3323, %v3436
        %v3584 = vmul.f32 %v3324, %v3436
        %v3585 = vmul.f32 %v3325, %v3436
        %v3586 = vmul.f32 %v3326, %v3436
        %v3587 = vmul.f32 %v3327, %v3436
        %v3588 = vmul.f32 %v3328, %v3436
        %v3589 = vmul.f32 %v3329, %v3436
        %v3590 = vmul.f32 %v3330, %v3436
        %v3591 = vmul.f32 %v3331, %v3436
        %v3592 = vmul.f32 %v3332, %v3436
        %v3593 = vmul.f32 %v3333, %v3436
        %v3594 = vmul.f32 %v3334, %v3436
        %v3595 = vmul.f32 %v3335, %v3436
        %v3596 = vmul.f32 %v3336, %v3436
        %v3597 = vmul.f32 %v3337, %v3436
        %v3598 = vmul.f32 %v3338, %v3436
        %v3599 = vmul.f32 %v3339, %v3436
        %v3600 = vmul.f32 %v3340, %v3436
        %v3601 = vmul.f32 %v3341, %v3436
        %v3602 = vmul.f32 %v3342, %v3436
        %v3603 = vmul.f32 %v3343, %v3436
        %v3604 = vmul.f32 %v3344, %v3436
        %v3605 = vmul.f32 %v3345, %v3436
        %v3606 = vmul.f32 %v3346, %v3436
        %v3607 = vmul.f32 %v3347, %v3436
        %v3608 = vmul.f32 %v3348, %v3436
        %v3609 = vmul.f32 %v3349, %v3436
        %v3610 = vmul.f32 %v3350, %v3436
        %v3611 = vmul.f32 %v3351, %v3436
        %v3612 = vmul.f32 %v3352, %v3436
        %v3613 = vmul.f32 %v3353, %v3436
        %v3614 = vmul.f32 %v3354, %v3436
        %v3615 = vmul.f32 %v3355, %v3436
        %v3616 = vmul.f32 %v3356, %v3436
        %v3617 = vmul.f32 %v3357, %v3436
        %v3618 = vmul.f32 %v3358, %v3436
        %v3619 = vmul.f32 %v3359, %v3436
        %v3620 = vmul.f32 %v3360, %v3436
        %v3621 = vmul.f32 %v3361, %v3436
        %v3622 = vmul.f32 %v3362, %v3436
        %v3623 = vmul.f32 %v3363, %v3436
        %v3624 = vmul.f32 %v3364, %v3436
        %v3625 = vmul.f32 %v3365, %v3436
        %v3626 = vmul.f32 %v3366, %v3436
        %v3627 = vmul.f32 %v3367, %v3436
        %v3628 = vmul.f32 %v3368, %v3436
        %v3629 = vmul.f32 %v3369, %v3436
        %v3630 = vmul.f32 %v3370, %v3436
        %v3631 = vmul.f32 %v3371, %v3436
        %v3632 = vmul.f32 %v3372, %v3436
        %v3633 = vmul.f32 %v3373, %v3436
        %v3634 = vmul.f32 %v3374, %v3436
        %v3635 = vmul.f32 %v3375, %v3436
        %v3636 = vmul.f32 %v3376, %v3436
        %v3637 = vmul.f32 %v3377, %v3436
        %v3638 = vmul.f32 %v3378, %v3436
        %v3639 = vmul.f32 %v3379, %v3436
        %v3640 = vmul.f32 %v3380, %v3436
        %v3641 = vmul.f32 %v3381, %v3436
        %v3642 = vmul.f32 %v3382, %v3436
        %v3643 = vmul.f32 %v3383, %v3436
        %v3644 = vmul.f32 %v3384, %v3436
        %v3645 = vmul.f32 %v3385, %v3436
        %v3646 = vmul.f32 %v3386, %v3436
        %v3647 = vmul.f32 %v3387, %v3436
        %v3648 = vmul.f32 %v3388, %v3436
        %v3649 = vmul.f32 %v3389, %v3436
        %v3650 = vmul.f32 %v3390, %v3436
        %v3651 = vmul.f32 %v3391, %v3436
        %v3652 = vmul.f32 %v3392, %v3436
        %v3653 = vmul.f32 %v3393, %v3436
        %v3654 = vmul.f32 %v3394, %v3436
        %v3655 = vmul.f32 %v3395, %v3436
        %v3656 = vmul.f32 %v3396, %v3436
        %v3657 = vmul.f32 %v3397, %v3436
        %v3658 = vmul.f32 %v3398, %v3436
        %v3659 = vmul.f32 %v3399, %v3436
        %v3660 = vmul.f32 %v3400, %v3436
        %v3661 = vmul.f32 %v3401, %v3436
        %v3662 = vmul.f32 %v3402, %v3436
        %v3663 = vmul.f32 %v3403, %v3436
        %v3664 = vmul.f32 %v3404, %v3436
        %v3665 = vmul.f32 %v3405, %v3436
        %v3666 = vmul.f32 %v3406, %v3436
        %v3667 = vmul.f32 %v3407, %v3436
        %v3668 = vmul.f32 %v3408, %v3436
        %v3669 = vmul.f32 %v3409, %v3436
        %v3670 = vmul.f32 %v3410, %v3436
        %v3671 = vmul.f32 %v3411, %v3436
        %v3672 = vmul.f32 %v3412, %v3436
        %v3673 = vmul.f32 %v3413, %v3436
        %v3674 = vmul.f32 %v3414, %v3436
        %v3675 = vmul.f32 %v3415, %v3436
        %v3676 = vmul.f32 %v3416, %v3436
        %v3677 = vmul.f32 %v3417, %v3436
        %v3678 = vmul.f32 %v3418, %v3436
        %v3679 = vmul.f32 %v3419, %v3436
        %v3680 = vmul.f32 %v3420, %v3436
        %v3681 = vmul.f32 %v3421, %v3436
        %v3682 = vmul.f32 %v3422, %v3436
        %v3683 = vmul.f32 %v3423, %v3436
        %v3684 = vmul.f32 %v3424, %v3436
        %v3685 = vmul.f32 %v3425, %v3436
        %v3686 = vmul.f32 %v3426, %v3436
        %v3687 = vmul.f32 %v3427, %v3436
        %v3688 = vmul.f32 %v3428, %v3436
        %v3689 = vmul.f32 %v3429, %v3436
        %v3690 = vmul.f32 %v3430, %v3436
        %v3691 = vmul.f32 %v3431, %v3436
        %v3692 = vmul.f32 %v3432, %v3436
        %v3693 = vlaneseq
        %v3694 = vshrl.u32 %v3693, 7
        %v3695 = vsub.s32 0, %v3694
        %v3696 = vrot.slane %v3176, %v3695
        %v3697 = vadd.f32 %v3437, %v3696
        %v3698 = vadd.f32 %v3438, %v3696
        %v3699 = vadd.f32 %v3439, %v3696
        %v3700 = vadd.f32 %v3440, %v3696
        %v3701 = vadd.f32 %v3441, %v3696
        %v3702 = vadd.f32 %v3442, %v3696
        %v3703 = vadd.f32 %v3443, %v3696
        %v3704 = vadd.f32 %v3444, %v3696
        %v3705 = vadd.f32 %v3445, %v3696
        %v3706 = vadd.f32 %v3446, %v3696
        %v3707 = vadd.f32 %v3447, %v3696
        %v3708 = vadd.f32 %v3448, %v3696
        %v3709 = vadd.f32 %v3449, %v3696
        %v3710 = vadd.f32 %v3450, %v3696
        %v3711 = vadd.f32 %v3451, %v3696
        %v3712 = vadd.f32 %v3452, %v3696
        %v3713 = vadd.f32 %v3453, %v3696
        %v3714 = vadd.f32 %v3454, %v3696
        %v3715 = vadd.f32 %v3455, %v3696
        %v3716 = vadd.f32 %v3456, %v3696
        %v3717 = vadd.f32 %v3457, %v3696
        %v3718 = vadd.f32 %v3458, %v3696
        %v3719 = vadd.f32 %v3459, %v3696
        %v3720 = vadd.f32 %v3460, %v3696
        %v3721 = vadd.f32 %v3461, %v3696
        %v3722 = vadd.f32 %v3462, %v3696
        %v3723 = vadd.f32 %v3463, %v3696
        %v3724 = vadd.f32 %v3464, %v3696
        %v3725 = vadd.f32 %v3465, %v3696
        %v3726 = vadd.f32 %v3466, %v3696
        %v3727 = vadd.f32 %v3467, %v3696
        %v3728 = vadd.f32 %v3468, %v3696
        %v3729 = vadd.f32 %v3469, %v3696
        %v3730 = vadd.f32 %v3470, %v3696
        %v3731 = vadd.f32 %v3471, %v3696
        %v3732 = vadd.f32 %v3472, %v3696
        %v3733 = vadd.f32 %v3473, %v3696
        %v3734 = vadd.f32 %v3474, %v3696
        %v3735 = vadd.f32 %v3475, %v3696
        %v3736 = vadd.f32 %v3476, %v3696
        %v3737 = vadd.f32 %v3477, %v3696
        %v3738 = vadd.f32 %v3478, %v3696
        %v3739 = vadd.f32 %v3479, %v3696
        %v3740 = vadd.f32 %v3480, %v3696
        %v3741 = vadd.f32 %v3481, %v3696
        %v3742 = vadd.f32 %v3482, %v3696
        %v3743 = vadd.f32 %v3483, %v3696
        %v3744 = vadd.f32 %v3484, %v3696
        %v3745 = vadd.f32 %v3485, %v3696
        %v3746 = vadd.f32 %v3486, %v3696
        %v3747 = vadd.f32 %v3487, %v3696
        %v3748 = vadd.f32 %v3488, %v3696
        %v3749 = vadd.f32 %v3489, %v3696
        %v3750 = vadd.f32 %v3490, %v3696
        %v3751 = vadd.f32 %v3491, %v3696
        %v3752 = vadd.f32 %v3492, %v3696
        %v3753 = vadd.f32 %v3493, %v3696
        %v3754 = vadd.f32 %v3494, %v3696
        %v3755 = vadd.f32 %v3495, %v3696
        %v3756 = vadd.f32 %v3496, %v3696
        %v3757 = vadd.f32 %v3497, %v3696
        %v3758 = vadd.f32 %v3498, %v3696
        %v3759 = vadd.f32 %v3499, %v3696
        %v3760 = vadd.f32 %v3500, %v3696
        %v3761 = vadd.f32 %v3501, %v3696
        %v3762 = vadd.f32 %v3502, %v3696
        %v3763 = vadd.f32 %v3503, %v3696
        %v3764 = vadd.f32 %v3504, %v3696
        %v3765 = vadd.f32 %v3505, %v3696
        %v3766 = vadd.f32 %v3506, %v3696
        %v3767 = vadd.f32 %v3507, %v3696
        %v3768 = vadd.f32 %v3508, %v3696
        %v3769 = vadd.f32 %v3509, %v3696
        %v3770 = vadd.f32 %v3510, %v3696
        %v3771 = vadd.f32 %v3511, %v3696
        %v3772 = vadd.f32 %v3512, %v3696
        %v3773 = vadd.f32 %v3513, %v3696
        %v3774 = vadd.f32 %v3514, %v3696
        %v3775 = vadd.f32 %v3515, %v3696
        %v3776 = vadd.f32 %v3516, %v3696
        %v3777 = vadd.f32 %v3517, %v3696
        %v3778 = vadd.f32 %v3518, %v3696
        %v3779 = vadd.f32 %v3519, %v3696
        %v3780 = vadd.f32 %v3520, %v3696
        %v3781 = vadd.f32 %v3521, %v3696
        %v3782 = vadd.f32 %v3522, %v3696
        %v3783 = vadd.f32 %v3523, %v3696
        %v3784 = vadd.f32 %v3524, %v3696
        %v3785 = vadd.f32 %v3525, %v3696
        %v3786 = vadd.f32 %v3526, %v3696
        %v3787 = vadd.f32 %v3527, %v3696
        %v3788 = vadd.f32 %v3528, %v3696
        %v3789 = vadd.f32 %v3529, %v3696
        %v3790 = vadd.f32 %v3530, %v3696
        %v3791 = vadd.f32 %v3531, %v3696
        %v3792 = vadd.f32 %v3532, %v3696
        %v3793 = vadd.f32 %v3533, %v3696
        %v3794 = vadd.f32 %v3534, %v3696
        %v3795 = vadd.f32 %v3535, %v3696
        %v3796 = vadd.f32 %v3536, %v3696
        %v3797 = vadd.f32 %v3537, %v3696
        %v3798 = vadd.f32 %v3538, %v3696
        %v3799 = vadd.f32 %v3539, %v3696
        %v3800 = vadd.f32 %v3540, %v3696
        %v3801 = vadd.f32 %v3541, %v3696
        %v3802 = vadd.f32 %v3542, %v3696
        %v3803 = vadd.f32 %v3543, %v3696
        %v3804 = vadd.f32 %v3544, %v3696
        %v3805 = vadd.f32 %v3545, %v3696
        %v3806 = vadd.f32 %v3546, %v3696
        %v3807 = vadd.f32 %v3547, %v3696
        %v3808 = vadd.f32 %v3548, %v3696
        %v3809 = vadd.f32 %v3549, %v3696
        %v3810 = vadd.f32 %v3550, %v3696
        %v3811 = vadd.f32 %v3551, %v3696
        %v3812 = vadd.f32 %v3552, %v3696
        %v3813 = vadd.f32 %v3553, %v3696
        %v3814 = vadd.f32 %v3554, %v3696
        %v3815 = vadd.f32 %v3555, %v3696
        %v3816 = vadd.f32 %v3556, %v3696
        %v3817 = vadd.f32 %v3557, %v3696
        %v3818 = vadd.f32 %v3558, %v3696
        %v3819 = vadd.f32 %v3559, %v3696
        %v3820 = vadd.f32 %v3560, %v3696
        %v3821 = vadd.f32 %v3561, %v3696
        %v3822 = vadd.f32 %v3562, %v3696
        %v3823 = vadd.f32 %v3563, %v3696
        %v3824 = vadd.f32 %v3564, %v3696
        %v3825 = vadd.f32 %v3565, %v3696
        %v3826 = vadd.f32 %v3566, %v3696
        %v3827 = vadd.f32 %v3567, %v3696
        %v3828 = vadd.f32 %v3568, %v3696
        %v3829 = vadd.f32 %v3569, %v3696
        %v3830 = vadd.f32 %v3570, %v3696
        %v3831 = vadd.f32 %v3571, %v3696
        %v3832 = vadd.f32 %v3572, %v3696
        %v3833 = vadd.f32 %v3573, %v3696
        %v3834 = vadd.f32 %v3574, %v3696
        %v3835 = vadd.f32 %v3575, %v3696
        %v3836 = vadd.f32 %v3576, %v3696
        %v3837 = vadd.f32 %v3577, %v3696
        %v3838 = vadd.f32 %v3578, %v3696
        %v3839 = vadd.f32 %v3579, %v3696
        %v3840 = vadd.f32 %v3580, %v3696
        %v3841 = vadd.f32 %v3581, %v3696
        %v3842 = vadd.f32 %v3582, %v3696
        %v3843 = vadd.f32 %v3583, %v3696
        %v3844 = vadd.f32 %v3584, %v3696
        %v3845 = vadd.f32 %v3585, %v3696
        %v3846 = vadd.f32 %v3586, %v3696
        %v3847 = vadd.f32 %v3587, %v3696
        %v3848 = vadd.f32 %v3588, %v3696
        %v3849 = vadd.f32 %v3589, %v3696
        %v3850 = vadd.f32 %v3590, %v3696
        %v3851 = vadd.f32 %v3591, %v3696
        %v3852 = vadd.f32 %v3592, %v3696
        %v3853 = vadd.f32 %v3593, %v3696
        %v3854 = vadd.f32 %v3594, %v3696
        %v3855 = vadd.f32 %v3595, %v3696
        %v3856 = vadd.f32 %v3596, %v3696
        %v3857 = vadd.f32 %v3597, %v3696
        %v3858 = vadd.f32 %v3598, %v3696
        %v3859 = vadd.f32 %v3599, %v3696
        %v3860 = vadd.f32 %v3600, %v3696
        %v3861 = vadd.f32 %v3601, %v3696
        %v3862 = vadd.f32 %v3602, %v3696
        %v3863 = vadd.f32 %v3603, %v3696
        %v3864 = vadd.f32 %v3604, %v3696
        %v3865 = vadd.f32 %v3605, %v3696
        %v3866 = vadd.f32 %v3606, %v3696
        %v3867 = vadd.f32 %v3607, %v3696
        %v3868 = vadd.f32 %v3608, %v3696
        %v3869 = vadd.f32 %v3609, %v3696
        %v3870 = vadd.f32 %v3610, %v3696
        %v3871 = vadd.f32 %v3611, %v3696
        %v3872 = vadd.f32 %v3612, %v3696
        %v3873 = vadd.f32 %v3613, %v3696
        %v3874 = vadd.f32 %v3614, %v3696
        %v3875 = vadd.f32 %v3615, %v3696
        %v3876 = vadd.f32 %v3616, %v3696
        %v3877 = vadd.f32 %v3617, %v3696
        %v3878 = vadd.f32 %v3618, %v3696
        %v3879 = vadd.f32 %v3619, %v3696
        %v3880 = vadd.f32 %v3620, %v3696
        %v3881 = vadd.f32 %v3621, %v3696
        %v3882 = vadd.f32 %v3622, %v3696
        %v3883 = vadd.f32 %v3623, %v3696
        %v3884 = vadd.f32 %v3624, %v3696
        %v3885 = vadd.f32 %v3625, %v3696
        %v3886 = vadd.f32 %v3626, %v3696
        %v3887 = vadd.f32 %v3627, %v3696
        %v3888 = vadd.f32 %v3628, %v3696
        %v3889 = vadd.f32 %v3629, %v3696
        %v3890 = vadd.f32 %v3630, %v3696
        %v3891 = vadd.f32 %v3631, %v3696
        %v3892 = vadd.f32 %v3632, %v3696
        %v3893 = vadd.f32 %v3633, %v3696
        %v3894 = vadd.f32 %v3634, %v3696
        %v3895 = vadd.f32 %v3635, %v3696
        %v3896 = vadd.f32 %v3636, %v3696
        %v3897 = vadd.f32 %v3637, %v3696
        %v3898 = vadd.f32 %v3638, %v3696
        %v3899 = vadd.f32 %v3639, %v3696
        %v3900 = vadd.f32 %v3640, %v3696
        %v3901 = vadd.f32 %v3641, %v3696
        %v3902 = vadd.f32 %v3642, %v3696
        %v3903 = vadd.f32 %v3643, %v3696
        %v3904 = vadd.f32 %v3644, %v3696
        %v3905 = vadd.f32 %v3645, %v3696
        %v3906 = vadd.f32 %v3646, %v3696
        %v3907 = vadd.f32 %v3647, %v3696
        %v3908 = vadd.f32 %v3648, %v3696
        %v3909 = vadd.f32 %v3649, %v3696
        %v3910 = vadd.f32 %v3650, %v3696
        %v3911 = vadd.f32 %v3651, %v3696
        %v3912 = vadd.f32 %v3652, %v3696
        %v3913 = vadd.f32 %v3653, %v3696
        %v3914 = vadd.f32 %v3654, %v3696
        %v3915 = vadd.f32 %v3655, %v3696
        %v3916 = vadd.f32 %v3656, %v3696
        %v3917 = vadd.f32 %v3657, %v3696
        %v3918 = vadd.f32 %v3658, %v3696
        %v3919 = vadd.f32 %v3659, %v3696
        %v3920 = vadd.f32 %v3660, %v3696
        %v3921 = vadd.f32 %v3661, %v3696
        %v3922 = vadd.f32 %v3662, %v3696
        %v3923 = vadd.f32 %v3663, %v3696
        %v3924 = vadd.f32 %v3664, %v3696
        %v3925 = vadd.f32 %v3665, %v3696
        %v3926 = vadd.f32 %v3666, %v3696
        %v3927 = vadd.f32 %v3667, %v3696
        %v3928 = vadd.f32 %v3668, %v3696
        %v3929 = vadd.f32 %v3669, %v3696
        %v3930 = vadd.f32 %v3670, %v3696
        %v3931 = vadd.f32 %v3671, %v3696
        %v3932 = vadd.f32 %v3672, %v3696
        %v3933 = vadd.f32 %v3673, %v3696
        %v3934 = vadd.f32 %v3674, %v3696
        %v3935 = vadd.f32 %v3675, %v3696
        %v3936 = vadd.f32 %v3676, %v3696
        %v3937 = vadd.f32 %v3677, %v3696
        %v3938 = vadd.f32 %v3678, %v3696
        %v3939 = vadd.f32 %v3679, %v3696
        %v3940 = vadd.f32 %v3680, %v3696
        %v3941 = vadd.f32 %v3681, %v3696
        %v3942 = vadd.f32 %v3682, %v3696
        %v3943 = vadd.f32 %v3683, %v3696
        %v3944 = vadd.f32 %v3684, %v3696
        %v3945 = vadd.f32 %v3685, %v3696
        %v3946 = vadd.f32 %v3686, %v3696
        %v3947 = vadd.f32 %v3687, %v3696
        %v3948 = vadd.f32 %v3688, %v3696
        %v3949 = vadd.f32 %v3689, %v3696
        %v3950 = vadd.f32 %v3690, %v3696
        %v3951 = vadd.f32 %v3691, %v3696
        %v3952 = vadd.f32 %v3692, %v3696
        %3953 = vst [vmem:[%s2] sm:$0xff] %v3697
        %3954 = vst [vmem:[%s2 + $0x8] sm:$0xff] %v3698
        %3955 = vst [vmem:[%s2 + $0x10] sm:$0xff] %v3699
        %3956 = vst [vmem:[%s2 + $0x18] sm:$0xff] %v3700
        %3957 = vst [vmem:[%s2 + $0x20] sm:$0xff] %v3701
        %3958 = vst [vmem:[%s2 + $0x28] sm:$0xff] %v3702
        %3959 = vst [vmem:[%s2 + $0x30] sm:$0xff] %v3703
        %3960 = vst [vmem:[%s2 + $0x38] sm:$0xff] %v3704
        %3961 = vst [vmem:[%s2 + $0x40] sm:$0xff] %v3705
        %3962 = vst [vmem:[%s2 + $0x48] sm:$0xff] %v3706
        %3963 = vst [vmem:[%s2 + $0x50] sm:$0xff] %v3707
        %3964 = vst [vmem:[%s2 + $0x58] sm:$0xff] %v3708
        %3965 = vst [vmem:[%s2 + $0x60] sm:$0xff] %v3709
        %3966 = vst [vmem:[%s2 + $0x68] sm:$0xff] %v3710
        %3967 = vst [vmem:[%s2 + $0x70] sm:$0xff] %v3711
        %3968 = vst [vmem:[%s2 + $0x78] sm:$0xff] %v3712
        %3969 = vst [vmem:[%s2 + $0x80] sm:$0xff] %v3713
        %3970 = vst [vmem:[%s2 + $0x88] sm:$0xff] %v3714
        %3971 = vst [vmem:[%s2 + $0x90] sm:$0xff] %v3715
        %3972 = vst [vmem:[%s2 + $0x98] sm:$0xff] %v3716
        %3973 = vst [vmem:[%s2 + $0xa0] sm:$0xff] %v3717
        %3974 = vst [vmem:[%s2 + $0xa8] sm:$0xff] %v3718
        %3975 = vst [vmem:[%s2 + $0xb0] sm:$0xff] %v3719
        %3976 = vst [vmem:[%s2 + $0xb8] sm:$0xff] %v3720
        %3977 = vst [vmem:[%s2 + $0xc0] sm:$0xff] %v3721
        %3978 = vst [vmem:[%s2 + $0xc8] sm:$0xff] %v3722
        %3979 = vst [vmem:[%s2 + $0xd0] sm:$0xff] %v3723
        %3980 = vst [vmem:[%s2 + $0xd8] sm:$0xff] %v3724
        %3981 = vst [vmem:[%s2 + $0xe0] sm:$0xff] %v3725
        %3982 = vst [vmem:[%s2 + $0xe8] sm:$0xff] %v3726
        %3983 = vst [vmem:[%s2 + $0xf0] sm:$0xff] %v3727
        %3984 = vst [vmem:[%s2 + $0xf8] sm:$0xff] %v3728
        %3985 = vst [vmem:[%s2 + $0x100] sm:$0xff] %v3729
        %3986 = vst [vmem:[%s2 + $0x108] sm:$0xff] %v3730
        %3987 = vst [vmem:[%s2 + $0x110] sm:$0xff] %v3731
        %3988 = vst [vmem:[%s2 + $0x118] sm:$0xff] %v3732
        %3989 = vst [vmem:[%s2 + $0x120] sm:$0xff] %v3733
        %3990 = vst [vmem:[%s2 + $0x128] sm:$0xff] %v3734
        %3991 = vst [vmem:[%s2 + $0x130] sm:$0xff] %v3735
        %3992 = vst [vmem:[%s2 + $0x138] sm:$0xff] %v3736
        %3993 = vst [vmem:[%s2 + $0x140] sm:$0xff] %v3737
        %3994 = vst [vmem:[%s2 + $0x148] sm:$0xff] %v3738
        %3995 = vst [vmem:[%s2 + $0x150] sm:$0xff] %v3739
        %3996 = vst [vmem:[%s2 + $0x158] sm:$0xff] %v3740
        %3997 = vst [vmem:[%s2 + $0x160] sm:$0xff] %v3741
        %3998 = vst [vmem:[%s2 + $0x168] sm:$0xff] %v3742
        %3999 = vst [vmem:[%s2 + $0x170] sm:$0xff] %v3743
        %4000 = vst [vmem:[%s2 + $0x178] sm:$0xff] %v3744
        %4001 = vst [vmem:[%s2 + $0x180] sm:$0xff] %v3745
        %4002 = vst [vmem:[%s2 + $0x188] sm:$0xff] %v3746
        %4003 = vst [vmem:[%s2 + $0x190] sm:$0xff] %v3747
        %4004 = vst [vmem:[%s2 + $0x198] sm:$0xff] %v3748
        %4005 = vst [vmem:[%s2 + $0x1a0] sm:$0xff] %v3749
        %4006 = vst [vmem:[%s2 + $0x1a8] sm:$0xff] %v3750
        %4007 = vst [vmem:[%s2 + $0x1b0] sm:$0xff] %v3751
        %4008 = vst [vmem:[%s2 + $0x1b8] sm:$0xff] %v3752
        %4009 = vst [vmem:[%s2 + $0x1c0] sm:$0xff] %v3753
        %4010 = vst [vmem:[%s2 + $0x1c8] sm:$0xff] %v3754
        %4011 = vst [vmem:[%s2 + $0x1d0] sm:$0xff] %v3755
        %4012 = vst [vmem:[%s2 + $0x1d8] sm:$0xff] %v3756
        %4013 = vst [vmem:[%s2 + $0x1e0] sm:$0xff] %v3757
        %4014 = vst [vmem:[%s2 + $0x1e8] sm:$0xff] %v3758
        %4015 = vst [vmem:[%s2 + $0x1f0] sm:$0xff] %v3759
        %4016 = vst [vmem:[%s2 + $0x1f8] sm:$0xff] %v3760
        %4017 = vst [vmem:[%s2 + $0x200] sm:$0xff] %v3761
        %4018 = vst [vmem:[%s2 + $0x208] sm:$0xff] %v3762
        %4019 = vst [vmem:[%s2 + $0x210] sm:$0xff] %v3763
        %4020 = vst [vmem:[%s2 + $0x218] sm:$0xff] %v3764
        %4021 = vst [vmem:[%s2 + $0x220] sm:$0xff] %v3765
        %4022 = vst [vmem:[%s2 + $0x228] sm:$0xff] %v3766
        %4023 = vst [vmem:[%s2 + $0x230] sm:$0xff] %v3767
        %4024 = vst [vmem:[%s2 + $0x238] sm:$0xff] %v3768
        %4025 = vst [vmem:[%s2 + $0x240] sm:$0xff] %v3769
        %4026 = vst [vmem:[%s2 + $0x248] sm:$0xff] %v3770
        %4027 = vst [vmem:[%s2 + $0x250] sm:$0xff] %v3771
        %4028 = vst [vmem:[%s2 + $0x258] sm:$0xff] %v3772
        %4029 = vst [vmem:[%s2 + $0x260] sm:$0xff] %v3773
        %4030 = vst [vmem:[%s2 + $0x268] sm:$0xff] %v3774
        %4031 = vst [vmem:[%s2 + $0x270] sm:$0xff] %v3775
        %4032 = vst [vmem:[%s2 + $0x278] sm:$0xff] %v3776
        %4033 = vst [vmem:[%s2 + $0x280] sm:$0xff] %v3777
        %4034 = vst [vmem:[%s2 + $0x288] sm:$0xff] %v3778
        %4035 = vst [vmem:[%s2 + $0x290] sm:$0xff] %v3779
        %4036 = vst [vmem:[%s2 + $0x298] sm:$0xff] %v3780
        %4037 = vst [vmem:[%s2 + $0x2a0] sm:$0xff] %v3781
        %4038 = vst [vmem:[%s2 + $0x2a8] sm:$0xff] %v3782
        %4039 = vst [vmem:[%s2 + $0x2b0] sm:$0xff] %v3783
        %4040 = vst [vmem:[%s2 + $0x2b8] sm:$0xff] %v3784
        %4041 = vst [vmem:[%s2 + $0x2c0] sm:$0xff] %v3785
        %4042 = vst [vmem:[%s2 + $0x2c8] sm:$0xff] %v3786
        %4043 = vst [vmem:[%s2 + $0x2d0] sm:$0xff] %v3787
        %4044 = vst [vmem:[%s2 + $0x2d8] sm:$0xff] %v3788
        %4045 = vst [vmem:[%s2 + $0x2e0] sm:$0xff] %v3789
        %4046 = vst [vmem:[%s2 + $0x2e8] sm:$0xff] %v3790
        %4047 = vst [vmem:[%s2 + $0x2f0] sm:$0xff] %v3791
        %4048 = vst [vmem:[%s2 + $0x2f8] sm:$0xff] %v3792
        %4049 = vst [vmem:[%s2 + $0x300] sm:$0xff] %v3793
        %4050 = vst [vmem:[%s2 + $0x308] sm:$0xff] %v3794
        %4051 = vst [vmem:[%s2 + $0x310] sm:$0xff] %v3795
        %4052 = vst [vmem:[%s2 + $0x318] sm:$0xff] %v3796
        %4053 = vst [vmem:[%s2 + $0x320] sm:$0xff] %v3797
        %4054 = vst [vmem:[%s2 + $0x328] sm:$0xff] %v3798
        %4055 = vst [vmem:[%s2 + $0x330] sm:$0xff] %v3799
        %4056 = vst [vmem:[%s2 + $0x338] sm:$0xff] %v3800
        %4057 = vst [vmem:[%s2 + $0x340] sm:$0xff] %v3801
        %4058 = vst [vmem:[%s2 + $0x348] sm:$0xff] %v3802
        %4059 = vst [vmem:[%s2 + $0x350] sm:$0xff] %v3803
        %4060 = vst [vmem:[%s2 + $0x358] sm:$0xff] %v3804
        %4061 = vst [vmem:[%s2 + $0x360] sm:$0xff] %v3805
        %4062 = vst [vmem:[%s2 + $0x368] sm:$0xff] %v3806
        %4063 = vst [vmem:[%s2 + $0x370] sm:$0xff] %v3807
        %4064 = vst [vmem:[%s2 + $0x378] sm:$0xff] %v3808
        %4065 = vst [vmem:[%s2 + $0x380] sm:$0xff] %v3809
        %4066 = vst [vmem:[%s2 + $0x388] sm:$0xff] %v3810
        %4067 = vst [vmem:[%s2 + $0x390] sm:$0xff] %v3811
        %4068 = vst [vmem:[%s2 + $0x398] sm:$0xff] %v3812
        %4069 = vst [vmem:[%s2 + $0x3a0] sm:$0xff] %v3813
        %4070 = vst [vmem:[%s2 + $0x3a8] sm:$0xff] %v3814
        %4071 = vst [vmem:[%s2 + $0x3b0] sm:$0xff] %v3815
        %4072 = vst [vmem:[%s2 + $0x3b8] sm:$0xff] %v3816
        %4073 = vst [vmem:[%s2 + $0x3c0] sm:$0xff] %v3817
        %4074 = vst [vmem:[%s2 + $0x3c8] sm:$0xff] %v3818
        %4075 = vst [vmem:[%s2 + $0x3d0] sm:$0xff] %v3819
        %4076 = vst [vmem:[%s2 + $0x3d8] sm:$0xff] %v3820
        %4077 = vst [vmem:[%s2 + $0x3e0] sm:$0xff] %v3821
        %4078 = vst [vmem:[%s2 + $0x3e8] sm:$0xff] %v3822
        %4079 = vst [vmem:[%s2 + $0x3f0] sm:$0xff] %v3823
        %4080 = vst [vmem:[%s2 + $0x3f8] sm:$0xff] %v3824
        %4081 = vst [vmem:[%s2 + $0x400] sm:$0xff] %v3825
        %4082 = vst [vmem:[%s2 + $0x408] sm:$0xff] %v3826
        %4083 = vst [vmem:[%s2 + $0x410] sm:$0xff] %v3827
        %4084 = vst [vmem:[%s2 + $0x418] sm:$0xff] %v3828
        %4085 = vst [vmem:[%s2 + $0x420] sm:$0xff] %v3829
        %4086 = vst [vmem:[%s2 + $0x428] sm:$0xff] %v3830
        %4087 = vst [vmem:[%s2 + $0x430] sm:$0xff] %v3831
        %4088 = vst [vmem:[%s2 + $0x438] sm:$0xff] %v3832
        %4089 = vst [vmem:[%s2 + $0x440] sm:$0xff] %v3833
        %4090 = vst [vmem:[%s2 + $0x448] sm:$0xff] %v3834
        %4091 = vst [vmem:[%s2 + $0x450] sm:$0xff] %v3835
        %4092 = vst [vmem:[%s2 + $0x458] sm:$0xff] %v3836
        %4093 = vst [vmem:[%s2 + $0x460] sm:$0xff] %v3837
        %4094 = vst [vmem:[%s2 + $0x468] sm:$0xff] %v3838
        %4095 = vst [vmem:[%s2 + $0x470] sm:$0xff] %v3839
        %4096 = vst [vmem:[%s2 + $0x478] sm:$0xff] %v3840
        %4097 = vst [vmem:[%s2 + $0x480] sm:$0xff] %v3841
        %4098 = vst [vmem:[%s2 + $0x488] sm:$0xff] %v3842
        %4099 = vst [vmem:[%s2 + $0x490] sm:$0xff] %v3843
        %4100 = vst [vmem:[%s2 + $0x498] sm:$0xff] %v3844
        %4101 = vst [vmem:[%s2 + $0x4a0] sm:$0xff] %v3845
        %4102 = vst [vmem:[%s2 + $0x4a8] sm:$0xff] %v3846
        %4103 = vst [vmem:[%s2 + $0x4b0] sm:$0xff] %v3847
        %4104 = vst [vmem:[%s2 + $0x4b8] sm:$0xff] %v3848
        %4105 = vst [vmem:[%s2 + $0x4c0] sm:$0xff] %v3849
        %4106 = vst [vmem:[%s2 + $0x4c8] sm:$0xff] %v3850
        %4107 = vst [vmem:[%s2 + $0x4d0] sm:$0xff] %v3851
        %4108 = vst [vmem:[%s2 + $0x4d8] sm:$0xff] %v3852
        %4109 = vst [vmem:[%s2 + $0x4e0] sm:$0xff] %v3853
        %4110 = vst [vmem:[%s2 + $0x4e8] sm:$0xff] %v3854
        %4111 = vst [vmem:[%s2 + $0x4f0] sm:$0xff] %v3855
        %4112 = vst [vmem:[%s2 + $0x4f8] sm:$0xff] %v3856
        %4113 = vst [vmem:[%s2 + $0x500] sm:$0xff] %v3857
        %4114 = vst [vmem:[%s2 + $0x508] sm:$0xff] %v3858
        %4115 = vst [vmem:[%s2 + $0x510] sm:$0xff] %v3859
        %4116 = vst [vmem:[%s2 + $0x518] sm:$0xff] %v3860
        %4117 = vst [vmem:[%s2 + $0x520] sm:$0xff] %v3861
        %4118 = vst [vmem:[%s2 + $0x528] sm:$0xff] %v3862
        %4119 = vst [vmem:[%s2 + $0x530] sm:$0xff] %v3863
        %4120 = vst [vmem:[%s2 + $0x538] sm:$0xff] %v3864
        %4121 = vst [vmem:[%s2 + $0x540] sm:$0xff] %v3865
        %4122 = vst [vmem:[%s2 + $0x548] sm:$0xff] %v3866
        %4123 = vst [vmem:[%s2 + $0x550] sm:$0xff] %v3867
        %4124 = vst [vmem:[%s2 + $0x558] sm:$0xff] %v3868
        %4125 = vst [vmem:[%s2 + $0x560] sm:$0xff] %v3869
        %4126 = vst [vmem:[%s2 + $0x568] sm:$0xff] %v3870
        %4127 = vst [vmem:[%s2 + $0x570] sm:$0xff] %v3871
        %4128 = vst [vmem:[%s2 + $0x578] sm:$0xff] %v3872
        %4129 = vst [vmem:[%s2 + $0x580] sm:$0xff] %v3873
        %4130 = vst [vmem:[%s2 + $0x588] sm:$0xff] %v3874
        %4131 = vst [vmem:[%s2 + $0x590] sm:$0xff] %v3875
        %4132 = vst [vmem:[%s2 + $0x598] sm:$0xff] %v3876
        %4133 = vst [vmem:[%s2 + $0x5a0] sm:$0xff] %v3877
        %4134 = vst [vmem:[%s2 + $0x5a8] sm:$0xff] %v3878
        %4135 = vst [vmem:[%s2 + $0x5b0] sm:$0xff] %v3879
        %4136 = vst [vmem:[%s2 + $0x5b8] sm:$0xff] %v3880
        %4137 = vst [vmem:[%s2 + $0x5c0] sm:$0xff] %v3881
        %4138 = vst [vmem:[%s2 + $0x5c8] sm:$0xff] %v3882
        %4139 = vst [vmem:[%s2 + $0x5d0] sm:$0xff] %v3883
        %4140 = vst [vmem:[%s2 + $0x5d8] sm:$0xff] %v3884
        %4141 = vst [vmem:[%s2 + $0x5e0] sm:$0xff] %v3885
        %4142 = vst [vmem:[%s2 + $0x5e8] sm:$0xff] %v3886
        %4143 = vst [vmem:[%s2 + $0x5f0] sm:$0xff] %v3887
        %4144 = vst [vmem:[%s2 + $0x5f8] sm:$0xff] %v3888
        %4145 = vst [vmem:[%s2 + $0x600] sm:$0xff] %v3889
        %4146 = vst [vmem:[%s2 + $0x608] sm:$0xff] %v3890
        %4147 = vst [vmem:[%s2 + $0x610] sm:$0xff] %v3891
        %4148 = vst [vmem:[%s2 + $0x618] sm:$0xff] %v3892
        %4149 = vst [vmem:[%s2 + $0x620] sm:$0xff] %v3893
        %4150 = vst [vmem:[%s2 + $0x628] sm:$0xff] %v3894
        %4151 = vst [vmem:[%s2 + $0x630] sm:$0xff] %v3895
        %4152 = vst [vmem:[%s2 + $0x638] sm:$0xff] %v3896
        %4153 = vst [vmem:[%s2 + $0x640] sm:$0xff] %v3897
        %4154 = vst [vmem:[%s2 + $0x648] sm:$0xff] %v3898
        %4155 = vst [vmem:[%s2 + $0x650] sm:$0xff] %v3899
        %4156 = vst [vmem:[%s2 + $0x658] sm:$0xff] %v3900
        %4157 = vst [vmem:[%s2 + $0x660] sm:$0xff] %v3901
        %4158 = vst [vmem:[%s2 + $0x668] sm:$0xff] %v3902
        %4159 = vst [vmem:[%s2 + $0x670] sm:$0xff] %v3903
        %4160 = vst [vmem:[%s2 + $0x678] sm:$0xff] %v3904
        %4161 = vst [vmem:[%s2 + $0x680] sm:$0xff] %v3905
        %4162 = vst [vmem:[%s2 + $0x688] sm:$0xff] %v3906
        %4163 = vst [vmem:[%s2 + $0x690] sm:$0xff] %v3907
        %4164 = vst [vmem:[%s2 + $0x698] sm:$0xff] %v3908
        %4165 = vst [vmem:[%s2 + $0x6a0] sm:$0xff] %v3909
        %4166 = vst [vmem:[%s2 + $0x6a8] sm:$0xff] %v3910
        %4167 = vst [vmem:[%s2 + $0x6b0] sm:$0xff] %v3911
        %4168 = vst [vmem:[%s2 + $0x6b8] sm:$0xff] %v3912
        %4169 = vst [vmem:[%s2 + $0x6c0] sm:$0xff] %v3913
        %4170 = vst [vmem:[%s2 + $0x6c8] sm:$0xff] %v3914
        %4171 = vst [vmem:[%s2 + $0x6d0] sm:$0xff] %v3915
        %4172 = vst [vmem:[%s2 + $0x6d8] sm:$0xff] %v3916
        %4173 = vst [vmem:[%s2 + $0x6e0] sm:$0xff] %v3917
        %4174 = vst [vmem:[%s2 + $0x6e8] sm:$0xff] %v3918
        %4175 = vst [vmem:[%s2 + $0x6f0] sm:$0xff] %v3919
        %4176 = vst [vmem:[%s2 + $0x6f8] sm:$0xff] %v3920
        %4177 = vst [vmem:[%s2 + $0x700] sm:$0xff] %v3921
        %4178 = vst [vmem:[%s2 + $0x708] sm:$0xff] %v3922
        %4179 = vst [vmem:[%s2 + $0x710] sm:$0xff] %v3923
        %4180 = vst [vmem:[%s2 + $0x718] sm:$0xff] %v3924
        %4181 = vst [vmem:[%s2 + $0x720] sm:$0xff] %v3925
        %4182 = vst [vmem:[%s2 + $0x728] sm:$0xff] %v3926
        %4183 = vst [vmem:[%s2 + $0x730] sm:$0xff] %v3927
        %4184 = vst [vmem:[%s2 + $0x738] sm:$0xff] %v3928
        %4185 = vst [vmem:[%s2 + $0x740] sm:$0xff] %v3929
        %4186 = vst [vmem:[%s2 + $0x748] sm:$0xff] %v3930
        %4187 = vst [vmem:[%s2 + $0x750] sm:$0xff] %v3931
        %4188 = vst [vmem:[%s2 + $0x758] sm:$0xff] %v3932
        %4189 = vst [vmem:[%s2 + $0x760] sm:$0xff] %v3933
        %4190 = vst [vmem:[%s2 + $0x768] sm:$0xff] %v3934
        %4191 = vst [vmem:[%s2 + $0x770] sm:$0xff] %v3935
        %4192 = vst [vmem:[%s2 + $0x778] sm:$0xff] %v3936
        %4193 = vst [vmem:[%s2 + $0x780] sm:$0xff] %v3937
        %4194 = vst [vmem:[%s2 + $0x788] sm:$0xff] %v3938
        %4195 = vst [vmem:[%s2 + $0x790] sm:$0xff] %v3939
        %4196 = vst [vmem:[%s2 + $0x798] sm:$0xff] %v3940
        %4197 = vst [vmem:[%s2 + $0x7a0] sm:$0xff] %v3941
        %4198 = vst [vmem:[%s2 + $0x7a8] sm:$0xff] %v3942
        %4199 = vst [vmem:[%s2 + $0x7b0] sm:$0xff] %v3943
        %4200 = vst [vmem:[%s2 + $0x7b8] sm:$0xff] %v3944
        %4201 = vst [vmem:[%s2 + $0x7c0] sm:$0xff] %v3945
        %4202 = vst [vmem:[%s2 + $0x7c8] sm:$0xff] %v3946
        %4203 = vst [vmem:[%s2 + $0x7d0] sm:$0xff] %v3947
        %4204 = vst [vmem:[%s2 + $0x7d8] sm:$0xff] %v3948
        %4205 = vst [vmem:[%s2 + $0x7e0] sm:$0xff] %v3949
        %4206 = vst [vmem:[%s2 + $0x7e8] sm:$0xff] %v3950
        %4207 = vst [vmem:[%s2 + $0x7f0] sm:$0xff] %v3951
        %4208 = vst [vmem:[%s2 + $0x7f8] sm:$0xff] %v3952
      $region36: #{sn_gated_deconv2d_forward.1} parent=27 // pred_fallthru
        _
      // Predicated region
      $region37: #{sn_gated_deconv2d_forward.1} parent=27 // pred_check
        %p4209 = pneg %p73
      $region38: #{sn_gated_deconv2d_forward.1} parent=27 // pred_check_branch
        %4211 = sbr.rel (%p4209) target = $region40
      $region39: #{sn_gated_deconv2d_forward.1} parent=27 // pred_region
        _
      $region40: #{sn_gated_deconv2d_forward.1} parent=27 // pred_fallthru
        _
      // Predicated region
      $region41: #{sn_gated_deconv2d_forward.1} parent=27 // pred_check
        %p4212 = pneg %p73
      $region42: #{sn_gated_deconv2d_forward.1} parent=27 // pred_check_branch
        %4214 = sbr.rel (%p4212) target = $region44
      $region43: #{sn_gated_deconv2d_forward.1} parent=27 // pred_region
        _
      $region44: #{sn_gated_deconv2d_forward.1} parent=27 // pred_fallthru
        _
    $region28: #{sn_gated_deconv2d_forward.1} parent=5 // pred_fallthru
      _
    %p4215 = scmp.le.s32.totalorder 2, %s8
    // Predicated region
    $region45: #{sn_gated_deconv2d_forward.1} parent=5 // pred_check
      %p4216 = pneg %p4215
    $region46: #{sn_gated_deconv2d_forward.1} parent=5 // pred_check_branch
      %4218 = sbr.rel (%p4216) target = $region48
    $region47: #{sn_gated_deconv2d_forward.1} parent=5 // pred_region
      %s4219 = ssub.s32 %s8, 2
    $region48: #{sn_gated_deconv2d_forward.1} parent=5 // pred_fallthru
      _
  $region6: #{sn_gated_deconv2d_forward.1} parent=0 // loop_footer
    %s12 = sadd.s32 1, %s8
  $region7: #{sn_gated_deconv2d_forward.1} parent=0 // loop_footer_branch
    %7 = sbr.rel target = $region3
  $region8: #{sn_gated_deconv2d_forward.1} parent=0 // loop_exit
    _

</llo_original>
